<compile_context>
chip_gen: v7x
topology: tpu7x:2x2x1
jax: 0.10.0
libtpu: 0.0.40
codegen_flags: <defaults>
</compile_context>

<pallas_src>
import jax
import jax.numpy as jnp
from jax.experimental import pallas as pl
from jax.experimental.pallas import tpu as pltpu

BN_EPS = 1e-5
LRELU_SLOPE = 0.2

# Static lane offsets (all multiples of 128) inside the packed parameter vector.
PACK_B11 = 0        # (1024,)  fc1_1 bias
PACK_S11 = 1024     # (1024,)  fc1_1 int8 dequant scale (per output channel)
PACK_G2 = 2048      # (512,)   fc2_bn gamma
PACK_BE2 = 2560     # (512,)   fc2_bn beta
PACK_S2 = 3072      # (512,)   fc2 int8 dequant scale
PACK_G3 = 3584      # (256,)   fc3_bn gamma
PACK_BE3 = 3840     # (256,)   fc3_bn beta
PACK_S3 = 4096      # (256,)   fc3 int8 dequant scale
PACK_W4 = 4352      # (256,)   fc4 weight row (f32, exact)
PACK_B4 = 4608      # (1,)     fc4 bias (rest of the 128-lane pad is zero)
PACK_TOTAL = 4736   # multiple of 128


def _lrelu(v):
    return jnp.where(v > 0, v, LRELU_SLOPE * v)


def _batchnorm(h, gamma, beta):
    # Training-mode BatchNorm1d: biased batch statistics over axis 0, in f32.
    mean = jnp.mean(h, axis=0, keepdims=True)
    var = jnp.mean((h - mean) ** 2, axis=0, keepdims=True)
    return (h - mean) * jax.lax.rsqrt(var + BN_EPS) * gamma + beta


def _dequant_bf16(w_ref):
    # int8 -> bf16 is exact for |q| <= 127; widen via f32 (safe lowering path).
    return w_ref[...].astype(jnp.float32).astype(jnp.bfloat16)


def discriminator_kernel(
    x_ref,      # (B, 784)   bf16 flattened image
    yemb_ref,   # (B, 1024)  f32  label @ W12 + b12 (fc1_2 pre-activation)
    w11_ref,    # (784, 1024) int8
    w2a_ref,    # (1024, 512) int8  (first 1024 rows of W2)
    w2b_ref,    # (1024, 512) int8  (last 1024 rows of W2)
    w3_ref,     # (512, 256)  int8
    pk_ref,     # (1, PACK_TOTAL) f32 packed small vectors + dequant scales
    o_ref,      # (B, 1) f32
):
    f32 = jnp.float32
    bf16 = jnp.bfloat16

    # fc1_1: (x @ W11_q) * s11 + b11, leaky relu.  Scale applied after the matmul
    # (exact: s11 is per output column), accumulation in f32.
    x = jnp.dot(x_ref[...], _dequant_bf16(w11_ref), preferred_element_type=f32)
    x = _lrelu(x * pk_ref[:, PACK_S11:PACK_S11 + 1024]
               + pk_ref[:, PACK_B11:PACK_B11 + 1024])

    # fc1_2: tiny K=10 matmul + bias hoisted to the wrapper (f32, exact); only the
    # leaky relu remains here.
    y = _lrelu(yemb_ref[...])

    # fc2 on cat([x, y], 1) == x @ W2[:1024] + y @ W2[1024:]  (avoids lane concat).
    # Both halves share the per-column scale s2 (W2 quantized as one matrix), so a
    # single post-sum multiply is exact.  b2 dropped: exactly cancelled by the
    # following training-mode BN mean subtraction.
    h = jnp.dot(x.astype(bf16), _dequant_bf16(w2a_ref), preferred_element_type=f32)
    h = h + jnp.dot(y.astype(bf16), _dequant_bf16(w2b_ref), preferred_element_type=f32)
    h = h * pk_ref[:, PACK_S2:PACK_S2 + 512]
    h = _lrelu(_batchnorm(h,
                          pk_ref[:, PACK_G2:PACK_G2 + 512],
                          pk_ref[:, PACK_BE2:PACK_BE2 + 512]))

    # fc3 (+BN + leaky relu); b3 likewise cancelled by BN.
    h = jnp.dot(h.astype(bf16), _dequant_bf16(w3_ref), preferred_element_type=f32)
    h = h * pk_ref[:, PACK_S3:PACK_S3 + 256]
    h = _lrelu(_batchnorm(h,
                          pk_ref[:, PACK_G3:PACK_G3 + 256],
                          pk_ref[:, PACK_BE3:PACK_BE3 + 256]))

    # fc4 (256 -> 1) as VPU multiply + lane reduction (no wasted N=1 MXU pass).
    w4_row = pk_ref[:, PACK_W4:PACK_W4 + 256]
    b4 = pk_ref[:, PACK_B4:PACK_B4 + 128][:, 0:1]
    logit = jnp.sum(h * w4_row, axis=-1, keepdims=True) + b4
    o_ref[...] = jax.nn.sigmoid(logit).astype(o_ref.dtype)


@jax.jit
def discriminator_forward(x, label, kp):
    """x: (B, 784) f32, label: (B, 10) one-hot f32.  Works for any B >= 2 (BN).

    Perf note: the kernel is HBM-bound on ~1.9 MiB of int8 weights; throughput is
    near-linear in B up to B ~ 1-2K, so batch real+fake micro-batches through a
    single call where possible.
    """
    B = x.shape[0]
    # fc1_2 pre-activation done in the wrapper in f32 (exact; 4 KB/row, negligible
    # at small B).  The K=10 matmul is tiny; keeping it out of the kernel avoids a
    # padded MXU pass and keeps the kernel HLO minimal.
    yemb = jnp.dot(label.astype(jnp.float32), kp["w12"]) + kp["b12"]
    x16 = x.astype(jnp.bfloat16)

    # Advisory cost estimate so XLA can schedule surrounding (generator/optimizer)
    # work to overlap with this HBM-bound custom call.
    flops = 2 * B * (784 * 1024 + 2048 * 512 + 512 * 256 + 256)
    weight_bytes = (784 * 1024 + 2048 * 512 + 512 * 256)          # int8 -> 1 B each
    bytes_accessed = (weight_bytes + PACK_TOTAL * 4
                      + B * (784 * 2 + 1024 * 4 + 4))
    cost = pl.CostEstimate(flops=flops, transcendentals=B,
                           bytes_accessed=bytes_accessed)

    vmem = pl.BlockSpec(memory_space=pltpu.MemorySpace.VMEM)
    args = (x16, yemb, kp["w11"], kp["w2a"], kp["w2b"], kp["w3"], kp["packed"])
    return pl.pallas_call(
        discriminator_kernel,
        out_shape=jax.ShapeDtypeStruct((B, 1), jnp.float32),
        in_specs=[vmem] * len(args),
        out_specs=vmem,
        compiler_params=pltpu.CompilerParams(vmem_limit_bytes=32 << 20),
        cost_estimate=cost,
    )(*args)


def init_params(key, std=0.02):
    """f32 reference parameters (PyTorch layout transposed: W is (in, out))."""
    ks = jax.random.split(key, 10)

    def lin(kw, kb, fan_in, fan_out):
        w = std * jax.random.normal(kw, (fan_in, fan_out), jnp.float32)
        b = std * jax.random.normal(kb, (1, fan_out), jnp.float32)
        return w, b

    w11, b11 = lin(ks[0], ks[1], 784, 1024)
    w12, b12 = lin(ks[2], ks[3], 10, 1024)
    w2, b2 = lin(ks[4], ks[5], 2048, 512)
    w3, b3 = lin(ks[6], ks[7], 512, 256)
    w4, b4 = lin(ks[8], ks[9], 256, 1)
    return dict(
        w11=w11, b11=b11, w12=w12, b12=b12,
        w2=w2, b2=b2,
        g2=jnp.ones((1, 512), jnp.float32), be2=jnp.zeros((1, 512), jnp.float32),
        w3=w3, b3=b3,
        g3=jnp.ones((1, 256), jnp.float32), be3=jnp.zeros((1, 256), jnp.float32),
        w4=w4, b4=b4,
    )


def _quantize_per_col(w):
    """Symmetric per-output-channel int8 quantization.  Returns (q_int8, scale_row)."""
    amax = jnp.max(jnp.abs(w), axis=0)
    scale = jnp.maximum(amax, 1e-30) / 127.0
    q = jnp.clip(jnp.round(w / scale), -127, 127).astype(jnp.int8)
    return q, scale.reshape(1, -1).astype(jnp.float32)


def prepare_kernel_params(p):
    """int8 large weights (+ per-channel scales) and one packed f32 vector of all
    small per-feature params.  b2/b3 intentionally dropped (cancelled by train-mode BN)."""
    q11, s11 = _quantize_per_col(p["w11"])
    q2, s2 = _quantize_per_col(p["w2"])          # quantize full (2048,512) -> shared scale
    q3, s3 = _quantize_per_col(p["w3"])

    packed = jnp.zeros((1, PACK_TOTAL), jnp.float32)
    packed = packed.at[:, PACK_B11:PACK_B11 + 1024].set(p["b11"])
    packed = packed.at[:, PACK_S11:PACK_S11 + 1024].set(s11)
    packed = packed.at[:, PACK_G2:PACK_G2 + 512].set(p["g2"])
    packed = packed.at[:, PACK_BE2:PACK_BE2 + 512].set(p["be2"])
    packed = packed.at[:, PACK_S2:PACK_S2 + 512].set(s2)
    packed = packed.at[:, PACK_G3:PACK_G3 + 256].set(p["g3"])
    packed = packed.at[:, PACK_BE3:PACK_BE3 + 256].set(p["be3"])
    packed = packed.at[:, PACK_S3:PACK_S3 + 256].set(s3)
    packed = packed.at[:, PACK_W4:PACK_W4 + 256].set(p["w4"].reshape(1, 256))
    packed = packed.at[:, PACK_B4:PACK_B4 + 1].set(p["b4"].reshape(1, 1))
    return dict(
        w11=q11,
        w12=p["w12"], b12=p["b12"],          # f32, used by the wrapper (exact label path)
        w2a=q2[:1024], w2b=q2[1024:],
        w3=q3,
        packed=packed,
    )


def reference_forward(x, label, p):
    """Pure-JAX f32 mirror of the PyTorch forward (training-mode BN).
    Returns (prob, logit)."""
    def lrelu(v):
        return jnp.where(v > 0, v, LRELU_SLOPE * v)

    def bn(h, g, b):
        m = jnp.mean(h, axis=0, keepdims=True)
        v = jnp.mean((h - m) ** 2, axis=0, keepdims=True)
        return (h - m) / jnp.sqrt(v + BN_EPS) * g + b

    a = lrelu(x @ p["w11"] + p["b11"])
    c = lrelu(label @ p["w12"] + p["b12"])
    h = jnp.concatenate([a, c], axis=1) @ p["w2"] + p["b2"]
    h = lrelu(bn(h, p["g2"], p["be2"]))
    h = lrelu(bn(h @ p["w3"] + p["b3"], p["g3"], p["be3"]))
    logit = h @ p["w4"] + p["b4"]
    return jax.nn.sigmoid(logit), logit


if __name__ == "__main__":
    key = jax.random.PRNGKey(0)
    kp, kx, kl = jax.random.split(key, 3)

    B = 8   # small demo batch; kernel accepts any B (amortize weight DMA with larger B)
    params = init_params(kp)
    kparams = prepare_kernel_params(params)

    x = jax.random.normal(kx, (B, 784), jnp.float32)      # flattened 28x28 image
    label = jax.nn.one_hot(
        jax.random.randint(kl, (B,), 0, 10), 10, dtype=jnp.float32
    )                                                      # (B, 10) one-hot label

    out = jax.block_until_ready(discriminator_forward(x, label, kparams))
    ref_p, ref_logit = reference_forward(x, label, params)

    assert out.shape == (B, 1)
    # Post-sigmoid check (int8 weights + bf16 activations vs f32 reference).
    assert jnp.allclose(out, ref_p, atol=3e-2), "prob mismatch vs reference"
    # Pre-sigmoid (logit) check: sigmoid compresses errors, so also verify the
    # logit recovered from the kernel output against the f32 reference.
    out_logit = jnp.log(out) - jnp.log1p(-out)
    assert jnp.allclose(out_logit, ref_logit, atol=1e-1), "logit mismatch vs reference"
    print("KERNEL_OK")
</pallas_src>

<mosaic_0001>
module attributes {stable_mosaic.version = 11 : i64} {
  func.func @discriminator_kernel(%arg0: memref<8x784xbf16, #tpu.memory_space<vmem>>, %arg1: memref<8x1024xf32, #tpu.memory_space<vmem>>, %arg2: memref<784x1024xi8, #tpu.memory_space<vmem>>, %arg3: memref<1024x512xi8, #tpu.memory_space<vmem>>, %arg4: memref<1024x512xi8, #tpu.memory_space<vmem>>, %arg5: memref<512x256xi8, #tpu.memory_space<vmem>>, %arg6: memref<1x4736xf32, #tpu.memory_space<vmem>>, %arg7: memref<8x1xf32, #tpu.memory_space<vmem>>) attributes {dimension_semantics = [], scalar_prefetch = 0 : i64, scratch_operands = 0 : i64, tpu.core_type = #tpu.core_type<tc>} {
    %c0 = arith.constant 0 : index
    %c0_0 = arith.constant 0 : index
    %0 = vector.load %arg0[%c0, %c0_0] : memref<8x784xbf16, #tpu.memory_space<vmem>>, vector<8x784xbf16>
    %c0_1 = arith.constant 0 : index
    %c0_2 = arith.constant 0 : index
    %1 = vector.load %arg2[%c0_1, %c0_2] : memref<784x1024xi8, #tpu.memory_space<vmem>>, vector<784x1024xi8>
    %2 = arith.sitofp %1 : vector<784x1024xi8> to vector<784x1024xf32>
    %3 = arith.truncf %2 : vector<784x1024xf32> to vector<784x1024xbf16>
    %cst = arith.constant dense<0.000000e+00> : vector<8x1024xf32>
    %4 = tpu.matmul %0, %3, %cst {dimension_numbers = #tpu.dot_dimension_numbers<[1], [0], [0], [1], [0, 0, 1, 1], [], []>} : vector<8x784xbf16>, vector<784x1024xbf16>, vector<8x1024xf32> -> vector<8x1024xf32>
    %c0_3 = arith.constant 0 : index
    %c1024 = arith.constant 1024 : index
    %5 = vector.load %arg6[%c0_3, %c1024] : memref<1x4736xf32, #tpu.memory_space<vmem>>, vector<1x1024xf32>
    %6 = vector.broadcast %5 : vector<1x1024xf32> to vector<8x1024xf32>
    %7 = arith.mulf %4, %6 : vector<8x1024xf32>
    %c0_4 = arith.constant 0 : index
    %c0_5 = arith.constant 0 : index
    %8 = vector.load %arg6[%c0_4, %c0_5] : memref<1x4736xf32, #tpu.memory_space<vmem>>, vector<1x1024xf32>
    %9 = vector.broadcast %8 : vector<1x1024xf32> to vector<8x1024xf32>
    %10 = arith.addf %7, %9 : vector<8x1024xf32>
    %cst_6 = arith.constant 0.000000e+00 : f32
    %11 = vector.broadcast %cst_6 : f32 to vector<8x1024xf32>
    %12 = arith.cmpf ogt, %10, %11 : vector<8x1024xf32>
    %cst_7 = arith.constant 2.000000e-01 : f32
    %13 = vector.broadcast %cst_7 : f32 to vector<8x1024xf32>
    %14 = arith.mulf %13, %10 : vector<8x1024xf32>
    %15 = arith.select %12, %10, %14 : vector<8x1024xi1>, vector<8x1024xf32>
    %c0_8 = arith.constant 0 : index
    %c0_9 = arith.constant 0 : index
    %16 = vector.load %arg1[%c0_8, %c0_9] : memref<8x1024xf32, #tpu.memory_space<vmem>>, vector<8x1024xf32>
    %cst_10 = arith.constant 0.000000e+00 : f32
    %17 = vector.broadcast %cst_10 : f32 to vector<8x1024xf32>
    %18 = arith.cmpf ogt, %16, %17 : vector<8x1024xf32>
    %cst_11 = arith.constant 2.000000e-01 : f32
    %19 = vector.broadcast %cst_11 : f32 to vector<8x1024xf32>
    %20 = arith.mulf %19, %16 : vector<8x1024xf32>
    %21 = arith.select %18, %16, %20 : vector<8x1024xi1>, vector<8x1024xf32>
    %22 = arith.truncf %15 : vector<8x1024xf32> to vector<8x1024xbf16>
    %c0_12 = arith.constant 0 : index
    %c0_13 = arith.constant 0 : index
    %23 = vector.load %arg3[%c0_12, %c0_13] : memref<1024x512xi8, #tpu.memory_space<vmem>>, vector<1024x512xi8>
    %24 = arith.sitofp %23 : vector<1024x512xi8> to vector<1024x512xf32>
    %25 = arith.truncf %24 : vector<1024x512xf32> to vector<1024x512xbf16>
    %cst_14 = arith.constant dense<0.000000e+00> : vector<8x512xf32>
    %26 = tpu.matmul %22, %25, %cst_14 {dimension_numbers = #tpu.dot_dimension_numbers<[1], [0], [0], [1], [0, 0, 1, 1], [], []>} : vector<8x1024xbf16>, vector<1024x512xbf16>, vector<8x512xf32> -> vector<8x512xf32>
    %27 = arith.truncf %21 : vector<8x1024xf32> to vector<8x1024xbf16>
    %c0_15 = arith.constant 0 : index
    %c0_16 = arith.constant 0 : index
    %28 = vector.load %arg4[%c0_15, %c0_16] : memref<1024x512xi8, #tpu.memory_space<vmem>>, vector<1024x512xi8>
    %29 = arith.sitofp %28 : vector<1024x512xi8> to vector<1024x512xf32>
    %30 = arith.truncf %29 : vector<1024x512xf32> to vector<1024x512xbf16>
    %cst_17 = arith.constant dense<0.000000e+00> : vector<8x512xf32>
    %31 = tpu.matmul %27, %30, %cst_17 {dimension_numbers = #tpu.dot_dimension_numbers<[1], [0], [0], [1], [0, 0, 1, 1], [], []>} : vector<8x1024xbf16>, vector<1024x512xbf16>, vector<8x512xf32> -> vector<8x512xf32>
    %32 = arith.addf %26, %31 : vector<8x512xf32>
    %c0_18 = arith.constant 0 : index
    %c3072 = arith.constant 3072 : index
    %33 = vector.load %arg6[%c0_18, %c3072] : memref<1x4736xf32, #tpu.memory_space<vmem>>, vector<1x512xf32>
    %34 = vector.broadcast %33 : vector<1x512xf32> to vector<8x512xf32>
    %35 = arith.mulf %32, %34 : vector<8x512xf32>
    %c0_19 = arith.constant 0 : index
    %c2048 = arith.constant 2048 : index
    %36 = vector.load %arg6[%c0_19, %c2048] : memref<1x4736xf32, #tpu.memory_space<vmem>>, vector<1x512xf32>
    %c0_20 = arith.constant 0 : index
    %c2560 = arith.constant 2560 : index
    %37 = vector.load %arg6[%c0_20, %c2560] : memref<1x4736xf32, #tpu.memory_space<vmem>>, vector<1x512xf32>
    %cst_21 = arith.constant dense<0.000000e+00> : vector<512xf32>
    %38 = vector.multi_reduction <add>, %35, %cst_21 [0] : vector<8x512xf32> to vector<512xf32>
    %39 = vector.shape_cast %38 : vector<512xf32> to vector<1x512xf32>
    %cst_22 = arith.constant 8.000000e+00 : f32
    %40 = vector.broadcast %cst_22 : f32 to vector<1x512xf32>
    %41 = arith.divf %39, %40 : vector<1x512xf32>
    %42 = vector.broadcast %41 : vector<1x512xf32> to vector<8x512xf32>
    %43 = arith.subf %35, %42 : vector<8x512xf32>
    %44 = arith.mulf %43, %43 : vector<8x512xf32>
    %cst_23 = arith.constant dense<0.000000e+00> : vector<512xf32>
    %45 = vector.multi_reduction <add>, %44, %cst_23 [0] : vector<8x512xf32> to vector<512xf32>
    %46 = vector.shape_cast %45 : vector<512xf32> to vector<1x512xf32>
    %cst_24 = arith.constant 8.000000e+00 : f32
    %47 = vector.broadcast %cst_24 : f32 to vector<1x512xf32>
    %48 = arith.divf %46, %47 : vector<1x512xf32>
    %49 = vector.broadcast %41 : vector<1x512xf32> to vector<8x512xf32>
    %50 = arith.subf %35, %49 : vector<8x512xf32>
    %cst_25 = arith.constant 9.99999974E-6 : f32
    %51 = vector.broadcast %cst_25 : f32 to vector<1x512xf32>
    %52 = arith.addf %48, %51 : vector<1x512xf32>
    %53 = math.rsqrt %52 : vector<1x512xf32>
    %54 = vector.broadcast %53 : vector<1x512xf32> to vector<8x512xf32>
    %55 = arith.mulf %50, %54 : vector<8x512xf32>
    %56 = vector.broadcast %36 : vector<1x512xf32> to vector<8x512xf32>
    %57 = arith.mulf %55, %56 : vector<8x512xf32>
    %58 = vector.broadcast %37 : vector<1x512xf32> to vector<8x512xf32>
    %59 = arith.addf %57, %58 : vector<8x512xf32>
    %cst_26 = arith.constant 0.000000e+00 : f32
    %60 = vector.broadcast %cst_26 : f32 to vector<8x512xf32>
    %61 = arith.cmpf ogt, %59, %60 : vector<8x512xf32>
    %cst_27 = arith.constant 2.000000e-01 : f32
    %62 = vector.broadcast %cst_27 : f32 to vector<8x512xf32>
    %63 = arith.mulf %62, %59 : vector<8x512xf32>
    %64 = arith.select %61, %59, %63 : vector<8x512xi1>, vector<8x512xf32>
    %65 = arith.truncf %64 : vector<8x512xf32> to vector<8x512xbf16>
    %c0_28 = arith.constant 0 : index
    %c0_29 = arith.constant 0 : index
    %66 = vector.load %arg5[%c0_28, %c0_29] : memref<512x256xi8, #tpu.memory_space<vmem>>, vector<512x256xi8>
    %67 = arith.sitofp %66 : vector<512x256xi8> to vector<512x256xf32>
    %68 = arith.truncf %67 : vector<512x256xf32> to vector<512x256xbf16>
    %cst_30 = arith.constant dense<0.000000e+00> : vector<8x256xf32>
    %69 = tpu.matmul %65, %68, %cst_30 {dimension_numbers = #tpu.dot_dimension_numbers<[1], [0], [0], [1], [0, 0, 1, 1], [], []>} : vector<8x512xbf16>, vector<512x256xbf16>, vector<8x256xf32> -> vector<8x256xf32>
    %c0_31 = arith.constant 0 : index
    %c4096 = arith.constant 4096 : index
    %70 = vector.load %arg6[%c0_31, %c4096] : memref<1x4736xf32, #tpu.memory_space<vmem>>, vector<1x256xf32>
    %71 = vector.broadcast %70 : vector<1x256xf32> to vector<8x256xf32>
    %72 = arith.mulf %69, %71 : vector<8x256xf32>
    %c0_32 = arith.constant 0 : index
    %c3584 = arith.constant 3584 : index
    %73 = vector.load %arg6[%c0_32, %c3584] : memref<1x4736xf32, #tpu.memory_space<vmem>>, vector<1x256xf32>
    %c0_33 = arith.constant 0 : index
    %c3840 = arith.constant 3840 : index
    %74 = vector.load %arg6[%c0_33, %c3840] : memref<1x4736xf32, #tpu.memory_space<vmem>>, vector<1x256xf32>
    %cst_34 = arith.constant dense<0.000000e+00> : vector<256xf32>
    %75 = vector.multi_reduction <add>, %72, %cst_34 [0] : vector<8x256xf32> to vector<256xf32>
    %76 = vector.shape_cast %75 : vector<256xf32> to vector<1x256xf32>
    %cst_35 = arith.constant 8.000000e+00 : f32
    %77 = vector.broadcast %cst_35 : f32 to vector<1x256xf32>
    %78 = arith.divf %76, %77 : vector<1x256xf32>
    %79 = vector.broadcast %78 : vector<1x256xf32> to vector<8x256xf32>
    %80 = arith.subf %72, %79 : vector<8x256xf32>
    %81 = arith.mulf %80, %80 : vector<8x256xf32>
    %cst_36 = arith.constant dense<0.000000e+00> : vector<256xf32>
    %82 = vector.multi_reduction <add>, %81, %cst_36 [0] : vector<8x256xf32> to vector<256xf32>
    %83 = vector.shape_cast %82 : vector<256xf32> to vector<1x256xf32>
    %cst_37 = arith.constant 8.000000e+00 : f32
    %84 = vector.broadcast %cst_37 : f32 to vector<1x256xf32>
    %85 = arith.divf %83, %84 : vector<1x256xf32>
    %86 = vector.broadcast %78 : vector<1x256xf32> to vector<8x256xf32>
    %87 = arith.subf %72, %86 : vector<8x256xf32>
    %cst_38 = arith.constant 9.99999974E-6 : f32
    %88 = vector.broadcast %cst_38 : f32 to vector<1x256xf32>
    %89 = arith.addf %85, %88 : vector<1x256xf32>
    %90 = math.rsqrt %89 : vector<1x256xf32>
    %91 = vector.broadcast %90 : vector<1x256xf32> to vector<8x256xf32>
    %92 = arith.mulf %87, %91 : vector<8x256xf32>
    %93 = vector.broadcast %73 : vector<1x256xf32> to vector<8x256xf32>
    %94 = arith.mulf %92, %93 : vector<8x256xf32>
    %95 = vector.broadcast %74 : vector<1x256xf32> to vector<8x256xf32>
    %96 = arith.addf %94, %95 : vector<8x256xf32>
    %cst_39 = arith.constant 0.000000e+00 : f32
    %97 = vector.broadcast %cst_39 : f32 to vector<8x256xf32>
    %98 = arith.cmpf ogt, %96, %97 : vector<8x256xf32>
    %cst_40 = arith.constant 2.000000e-01 : f32
    %99 = vector.broadcast %cst_40 : f32 to vector<8x256xf32>
    %100 = arith.mulf %99, %96 : vector<8x256xf32>
    %101 = arith.select %98, %96, %100 : vector<8x256xi1>, vector<8x256xf32>
    %c0_41 = arith.constant 0 : index
    %c4352 = arith.constant 4352 : index
    %102 = vector.load %arg6[%c0_41, %c4352] : memref<1x4736xf32, #tpu.memory_space<vmem>>, vector<1x256xf32>
    %c0_42 = arith.constant 0 : index
    %c4608 = arith.constant 4608 : index
    %103 = vector.load %arg6[%c0_42, %c4608] : memref<1x4736xf32, #tpu.memory_space<vmem>>, vector<1x128xf32>
    %104 = vector.extract_strided_slice %103 {offsets = [0, 0], sizes = [1, 1], strides = [1, 1]} : vector<1x128xf32> to vector<1x1xf32>
    %105 = vector.broadcast %102 : vector<1x256xf32> to vector<8x256xf32>
    %106 = arith.mulf %101, %105 : vector<8x256xf32>
    %cst_43 = arith.constant dense<0.000000e+00> : vector<8xf32>
    %107 = vector.multi_reduction <add>, %106, %cst_43 [1] : vector<8x256xf32> to vector<8xf32>
    %108 = vector.shape_cast %107 : vector<8xf32> to vector<8x1xf32>
    %109 = vector.broadcast %104 : vector<1x1xf32> to vector<8x1xf32>
    %110 = arith.addf %108, %109 : vector<8x1xf32>
    %111 = arith.negf %110 : vector<8x1xf32>
    %112 = math.exp %111 : vector<8x1xf32>
    %cst_44 = arith.constant 1.000000e+00 : f32
    %113 = vector.broadcast %cst_44 : f32 to vector<8x1xf32>
    %114 = arith.addf %113, %112 : vector<8x1xf32>
    %115 = arith.divf %113, %114 : vector<8x1xf32>
    %c0_45 = arith.constant 0 : index
    %c0_46 = arith.constant 0 : index
    %116 = vector.load %arg7[%c0_45, %c0_46] : memref<8x1xf32, #tpu.memory_space<vmem>>, vector<8x1xf32>
    tpu.vector_store %arg7[%c0_45, %c0_46], %115 {strides = array<i32>} : memref<8x1xf32, #tpu.memory_space<vmem>>, vector<8x1xf32>,
    return
  }
}

</mosaic_0001>

<llo_original>
// kernel: discriminator_forward.1
$region0: #{discriminator_forward.1}
  #allocation0 [shape = 'u32[]', space=smem, size = 0x4, offset = 0x4, fixed_abs, tag = 'smem constant byte address 0x4 - core index']
  #allocation1 [shape = 'u32[144,128]{1,0:T(1,128)}', space=vmem, size = 0x12000, scoped, tag = 'internal scratch']
  %s0 = inlined_call_operand.vmem [shape: bf16[8,784], index: 0, kind: input, shape index: {}]
  %s1 = inlined_call_operand.vmem [shape: f32[8,1024], index: 1, kind: input, shape index: {}]
  %s2 = inlined_call_operand.hbm [shape: s8[784,1024], index: 2, kind: input, shape index: {}]
  %s3 = inlined_call_operand.hbm [shape: s8[1024,512], index: 3, kind: input, shape index: {}]
  %s4 = inlined_call_operand.hbm [shape: s8[1024,512], index: 4, kind: input, shape index: {}]
  %s5 = inlined_call_operand.vmem [shape: s8[512,256], index: 5, kind: input, shape index: {}]
  %s6 = inlined_call_operand.vmem [shape: f32[1,4736], index: 6, kind: input, shape index: {}]
  %s7 = inlined_call_operand.vmem [shape: f32[8,1], index: 7, kind: output, shape index: {}]
  %s8 = sld [smem:[#allocation0]]
  $region50: #{discriminator_forward.1} parent=0
    _
  %s10 = ssub.s32 1, %s8
  %s11 = scalar_select 0, %s10, %s8
  $region1: #{discriminator_forward.1} parent=0
    #allocation2 [shape = 'u8[802816]{0}', space=vmem, size = 0xc4000, scoped, tag = 'input window, operand 2, single buffered']
    #allocation3 [shape = 's32[1]{0}', space=sflag, size = 0x4, scoped, tag = 'scoped memory for discriminator_forward.1']
    #allocation4 [shape = 'u8[524288]{0}', space=vmem, size = 0x80000, scoped, tag = 'input window, operand 3, single buffered']
    #allocation5 [shape = 's32[1]{0}', space=sflag, size = 0x4, scoped, tag = 'scoped memory for discriminator_forward.1']
    #allocation6 [shape = 'u8[524288]{0}', space=vmem, size = 0x80000, scoped, tag = 'input window, operand 4, single buffered']
    %12 = vsyncpa [#allocation3], 0
    %13 = vsyncpa [#allocation5], 0
    // Predicated region
    $region2: #{discriminator_forward.1} parent=1 // pred_check
      _
    $region3: #{discriminator_forward.1} parent=1 // pred_check_branch
      %15 = sbr.rel (0) target = $region5
    $region4: #{discriminator_forward.1} parent=1 // pred_region
      _
    $region5: #{discriminator_forward.1} parent=1 // pred_fallthru
      _
    // Predicated region
    $region6: #{discriminator_forward.1} parent=1 // pred_check
      _
    $region7: #{discriminator_forward.1} parent=1 // pred_check_branch
      %17 = sbr.rel (0) target = $region9
    $region8: #{discriminator_forward.1} parent=1 // pred_region
      _
    $region9: #{discriminator_forward.1} parent=1 // pred_fallthru
      _
    // Predicated region
    $region10: #{discriminator_forward.1} parent=1 // pred_check
      _
    $region11: #{discriminator_forward.1} parent=1 // pred_check_branch
      %19 = sbr.rel (0) target = $region13
    $region12: #{discriminator_forward.1} parent=1 // pred_region
      %s21 = ssub.s32 25088, 25088
      %22 = vsyncadd [#allocation3], %s21
      %s23 = sshll.u32 [#allocation2], 4
      %s24 = int_to_ptr.vmem [resolvable:$true] %s23
      %29 = dma.hbm_to_vmem [thread:$0]  %s2, 25088, %s24, [#allocation3], 256, 256, 16
    $region13: #{discriminator_forward.1} parent=1 // pred_fallthru
      _
    // Predicated region
    $region14: #{discriminator_forward.1} parent=1 // pred_check
      _
    $region15: #{discriminator_forward.1} parent=1 // pred_check_branch
      %31 = sbr.rel (0) target = $region17
    $region16: #{discriminator_forward.1} parent=1 // pred_region
      %s33 = ssub.s32 16384, 16384
      %34 = vsyncadd [#allocation5], %s33
      %s35 = sshll.u32 [#allocation4], 4
      %s36 = int_to_ptr.vmem [resolvable:$true] %s35
      %41 = dma.hbm_to_vmem [thread:$0]  %s3, 16384, %s36, [#allocation5], 512, 512, 32
    $region17: #{discriminator_forward.1} parent=1 // pred_fallthru
      _
    // Predicated region
    $region18: #{discriminator_forward.1} parent=1 // pred_check
      _
    $region19: #{discriminator_forward.1} parent=1 // pred_check_branch
      %43 = sbr.rel (0) target = $region21
    $region20: #{discriminator_forward.1} parent=1 // pred_region
      %s45 = ssub.s32 16384, 16384
      %46 = vsyncadd [#allocation5], %s45
      %s47 = sshll.u32 [#allocation6], 4
      %s48 = int_to_ptr.vmem [resolvable:$true] %s47
      %53 = dma.hbm_to_vmem [thread:$0]  %s4, 16384, %s48, [#allocation5], 512, 512, 32
    $region21: #{discriminator_forward.1} parent=1 // pred_fallthru
      _
    // Predicated region
    $region22: #{discriminator_forward.1} parent=1 // pred_check
      _
    $region23: #{discriminator_forward.1} parent=1 // pred_check_branch
      %55 = sbr.rel (0) target = $region25
    $region24: #{discriminator_forward.1} parent=1 // pred_region
      _
    $region25: #{discriminator_forward.1} parent=1 // pred_fallthru
      _
    // Predicated region
    $region26: #{discriminator_forward.1} parent=1 // pred_check
      _
    $region27: #{discriminator_forward.1} parent=1 // pred_check_branch
      %57 = sbr.rel (0) target = $region29
    $region28: #{discriminator_forward.1} parent=1 // pred_region
      _
    $region29: #{discriminator_forward.1} parent=1 // pred_fallthru
      _
    // Predicated region
    $region30: #{discriminator_forward.1} parent=1 // pred_check
      _
    $region31: #{discriminator_forward.1} parent=1 // pred_check_branch
      %59 = sbr.rel (0) target = $region33
    $region32: #{discriminator_forward.1} parent=1 // pred_region
      %60 = dma.done [#allocation3], 25088
    $region33: #{discriminator_forward.1} parent=1 // pred_fallthru
      _
    // Predicated region
    $region34: #{discriminator_forward.1} parent=1 // pred_check
      _
    $region35: #{discriminator_forward.1} parent=1 // pred_check_branch
      %62 = sbr.rel (0) target = $region37
    $region36: #{discriminator_forward.1} parent=1 // pred_region
      %63 = dma.done [#allocation5], 16384
    $region37: #{discriminator_forward.1} parent=1 // pred_fallthru
      _
    // Predicated region
    $region38: #{discriminator_forward.1} parent=1 // pred_check
      _
    $region39: #{discriminator_forward.1} parent=1 // pred_check_branch
      %65 = sbr.rel (0) target = $region41
    $region40: #{discriminator_forward.1} parent=1 // pred_region
      %66 = dma.done [#allocation5], 16384
    $region41: #{discriminator_forward.1} parent=1 // pred_fallthru
      _
    %v68 = vld [vmem:[%s0] sm:$0xff]
    %v69 = vld [vmem:[%s0 + $0x8] sm:$0xff]
    %v70 = vld [vmem:[%s0 + $0x10] sm:$0xff]
    %v71 = vld [vmem:[%s0 + $0x18] sm:$0xf]
    %v72 = vld [vmem:[#allocation2] sm:$0xff]
    %v73 = vld [vmem:[#allocation2 + $0x8] sm:$0xff]
    %v74 = vld [vmem:[#allocation2 + $0x10] sm:$0xff]
    %v75 = vld [vmem:[#allocation2 + $0x18] sm:$0xff]
    %v76 = vld [vmem:[#allocation2 + $0x20] sm:$0xff]
    %v77 = vld [vmem:[#allocation2 + $0x28] sm:$0xff]
    %v78 = vld [vmem:[#allocation2 + $0x30] sm:$0xff]
    %v79 = vld [vmem:[#allocation2 + $0x38] sm:$0xff]
    %v80 = vld [vmem:[#allocation2 + $0x40] sm:$0xff]
    %v81 = vld [vmem:[#allocation2 + $0x48] sm:$0xff]
    %v82 = vld [vmem:[#allocation2 + $0x50] sm:$0xff]
    %v83 = vld [vmem:[#allocation2 + $0x58] sm:$0xff]
    %v84 = vld [vmem:[#allocation2 + $0x60] sm:$0xff]
    %v85 = vld [vmem:[#allocation2 + $0x68] sm:$0xff]
    %v86 = vld [vmem:[#allocation2 + $0x70] sm:$0xff]
    %v87 = vld [vmem:[#allocation2 + $0x78] sm:$0xff]
    %v88 = vld [vmem:[#allocation2 + $0x80] sm:$0xff]
    %v89 = vld [vmem:[#allocation2 + $0x88] sm:$0xff]
    %v90 = vld [vmem:[#allocation2 + $0x90] sm:$0xff]
    %v91 = vld [vmem:[#allocation2 + $0x98] sm:$0xff]
    %v92 = vld [vmem:[#allocation2 + $0xa0] sm:$0xff]
    %v93 = vld [vmem:[#allocation2 + $0xa8] sm:$0xff]
    %v94 = vld [vmem:[#allocation2 + $0xb0] sm:$0xff]
    %v95 = vld [vmem:[#allocation2 + $0xb8] sm:$0xff]
    %v96 = vld [vmem:[#allocation2 + $0xc0] sm:$0xff]
    %v97 = vld [vmem:[#allocation2 + $0xc8] sm:$0xff]
    %v98 = vld [vmem:[#allocation2 + $0xd0] sm:$0xff]
    %v99 = vld [vmem:[#allocation2 + $0xd8] sm:$0xff]
    %v100 = vld [vmem:[#allocation2 + $0xe0] sm:$0xff]
    %v101 = vld [vmem:[#allocation2 + $0xe8] sm:$0xff]
    %v102 = vld [vmem:[#allocation2 + $0xf0] sm:$0xff]
    %v103 = vld [vmem:[#allocation2 + $0xf8] sm:$0xff]
    %v104 = vld [vmem:[#allocation2 + $0x100] sm:$0xff]
    %v105 = vld [vmem:[#allocation2 + $0x108] sm:$0xff]
    %v106 = vld [vmem:[#allocation2 + $0x110] sm:$0xff]
    %v107 = vld [vmem:[#allocation2 + $0x118] sm:$0xff]
    %v108 = vld [vmem:[#allocation2 + $0x120] sm:$0xff]
    %v109 = vld [vmem:[#allocation2 + $0x128] sm:$0xff]
    %v110 = vld [vmem:[#allocation2 + $0x130] sm:$0xff]
    %v111 = vld [vmem:[#allocation2 + $0x138] sm:$0xff]
    %v112 = vld [vmem:[#allocation2 + $0x140] sm:$0xff]
    %v113 = vld [vmem:[#allocation2 + $0x148] sm:$0xff]
    %v114 = vld [vmem:[#allocation2 + $0x150] sm:$0xff]
    %v115 = vld [vmem:[#allocation2 + $0x158] sm:$0xff]
    %v116 = vld [vmem:[#allocation2 + $0x160] sm:$0xff]
    %v117 = vld [vmem:[#allocation2 + $0x168] sm:$0xff]
    %v118 = vld [vmem:[#allocation2 + $0x170] sm:$0xff]
    %v119 = vld [vmem:[#allocation2 + $0x178] sm:$0xff]
    %v120 = vld [vmem:[#allocation2 + $0x180] sm:$0xff]
    %v121 = vld [vmem:[#allocation2 + $0x188] sm:$0xff]
    %v122 = vld [vmem:[#allocation2 + $0x190] sm:$0xff]
    %v123 = vld [vmem:[#allocation2 + $0x198] sm:$0xff]
    %v124 = vld [vmem:[#allocation2 + $0x1a0] sm:$0xff]
    %v125 = vld [vmem:[#allocation2 + $0x1a8] sm:$0xff]
    %v126 = vld [vmem:[#allocation2 + $0x1b0] sm:$0xff]
    %v127 = vld [vmem:[#allocation2 + $0x1b8] sm:$0xff]
    %v128 = vld [vmem:[#allocation2 + $0x1c0] sm:$0xff]
    %v129 = vld [vmem:[#allocation2 + $0x1c8] sm:$0xff]
    %v130 = vld [vmem:[#allocation2 + $0x1d0] sm:$0xff]
    %v131 = vld [vmem:[#allocation2 + $0x1d8] sm:$0xff]
    %v132 = vld [vmem:[#allocation2 + $0x1e0] sm:$0xff]
    %v133 = vld [vmem:[#allocation2 + $0x1e8] sm:$0xff]
    %v134 = vld [vmem:[#allocation2 + $0x1f0] sm:$0xff]
    %v135 = vld [vmem:[#allocation2 + $0x1f8] sm:$0xff]
    %v136 = vld [vmem:[#allocation2 + $0x200] sm:$0xff]
    %v137 = vld [vmem:[#allocation2 + $0x208] sm:$0xff]
    %v138 = vld [vmem:[#allocation2 + $0x210] sm:$0xff]
    %v139 = vld [vmem:[#allocation2 + $0x218] sm:$0xff]
    %v140 = vld [vmem:[#allocation2 + $0x220] sm:$0xff]
    %v141 = vld [vmem:[#allocation2 + $0x228] sm:$0xff]
    %v142 = vld [vmem:[#allocation2 + $0x230] sm:$0xff]
    %v143 = vld [vmem:[#allocation2 + $0x238] sm:$0xff]
    %v144 = vld [vmem:[#allocation2 + $0x240] sm:$0xff]
    %v145 = vld [vmem:[#allocation2 + $0x248] sm:$0xff]
    %v146 = vld [vmem:[#allocation2 + $0x250] sm:$0xff]
    %v147 = vld [vmem:[#allocation2 + $0x258] sm:$0xff]
    %v148 = vld [vmem:[#allocation2 + $0x260] sm:$0xff]
    %v149 = vld [vmem:[#allocation2 + $0x268] sm:$0xff]
    %v150 = vld [vmem:[#allocation2 + $0x270] sm:$0xff]
    %v151 = vld [vmem:[#allocation2 + $0x278] sm:$0xff]
    %v152 = vld [vmem:[#allocation2 + $0x280] sm:$0xff]
    %v153 = vld [vmem:[#allocation2 + $0x288] sm:$0xff]
    %v154 = vld [vmem:[#allocation2 + $0x290] sm:$0xff]
    %v155 = vld [vmem:[#allocation2 + $0x298] sm:$0xff]
    %v156 = vld [vmem:[#allocation2 + $0x2a0] sm:$0xff]
    %v157 = vld [vmem:[#allocation2 + $0x2a8] sm:$0xff]
    %v158 = vld [vmem:[#allocation2 + $0x2b0] sm:$0xff]
    %v159 = vld [vmem:[#allocation2 + $0x2b8] sm:$0xff]
    %v160 = vld [vmem:[#allocation2 + $0x2c0] sm:$0xff]
    %v161 = vld [vmem:[#allocation2 + $0x2c8] sm:$0xff]
    %v162 = vld [vmem:[#allocation2 + $0x2d0] sm:$0xff]
    %v163 = vld [vmem:[#allocation2 + $0x2d8] sm:$0xff]
    %v164 = vld [vmem:[#allocation2 + $0x2e0] sm:$0xff]
    %v165 = vld [vmem:[#allocation2 + $0x2e8] sm:$0xff]
    %v166 = vld [vmem:[#allocation2 + $0x2f0] sm:$0xff]
    %v167 = vld [vmem:[#allocation2 + $0x2f8] sm:$0xff]
    %v168 = vld [vmem:[#allocation2 + $0x300] sm:$0xff]
    %v169 = vld [vmem:[#allocation2 + $0x308] sm:$0xff]
    %v170 = vld [vmem:[#allocation2 + $0x310] sm:$0xff]
    %v171 = vld [vmem:[#allocation2 + $0x318] sm:$0xff]
    %v172 = vld [vmem:[#allocation2 + $0x320] sm:$0xff]
    %v173 = vld [vmem:[#allocation2 + $0x328] sm:$0xff]
    %v174 = vld [vmem:[#allocation2 + $0x330] sm:$0xff]
    %v175 = vld [vmem:[#allocation2 + $0x338] sm:$0xff]
    %v176 = vld [vmem:[#allocation2 + $0x340] sm:$0xff]
    %v177 = vld [vmem:[#allocation2 + $0x348] sm:$0xff]
    %v178 = vld [vmem:[#allocation2 + $0x350] sm:$0xff]
    %v179 = vld [vmem:[#allocation2 + $0x358] sm:$0xff]
    %v180 = vld [vmem:[#allocation2 + $0x360] sm:$0xff]
    %v181 = vld [vmem:[#allocation2 + $0x368] sm:$0xff]
    %v182 = vld [vmem:[#allocation2 + $0x370] sm:$0xff]
    %v183 = vld [vmem:[#allocation2 + $0x378] sm:$0xff]
    %v184 = vld [vmem:[#allocation2 + $0x380] sm:$0xff]
    %v185 = vld [vmem:[#allocation2 + $0x388] sm:$0xff]
    %v186 = vld [vmem:[#allocation2 + $0x390] sm:$0xff]
    %v187 = vld [vmem:[#allocation2 + $0x398] sm:$0xff]
    %v188 = vld [vmem:[#allocation2 + $0x3a0] sm:$0xff]
    %v189 = vld [vmem:[#allocation2 + $0x3a8] sm:$0xff]
    %v190 = vld [vmem:[#allocation2 + $0x3b0] sm:$0xff]
    %v191 = vld [vmem:[#allocation2 + $0x3b8] sm:$0xff]
    %v192 = vld [vmem:[#allocation2 + $0x3c0] sm:$0xff]
    %v193 = vld [vmem:[#allocation2 + $0x3c8] sm:$0xff]
    %v194 = vld [vmem:[#allocation2 + $0x3d0] sm:$0xff]
    %v195 = vld [vmem:[#allocation2 + $0x3d8] sm:$0xff]
    %v196 = vld [vmem:[#allocation2 + $0x3e0] sm:$0xff]
    %v197 = vld [vmem:[#allocation2 + $0x3e8] sm:$0xff]
    %v198 = vld [vmem:[#allocation2 + $0x3f0] sm:$0xff]
    %v199 = vld [vmem:[#allocation2 + $0x3f8] sm:$0xff]
    %v200 = vld [vmem:[#allocation2 + $0x400] sm:$0xff]
    %v201 = vld [vmem:[#allocation2 + $0x408] sm:$0xff]
    %v202 = vld [vmem:[#allocation2 + $0x410] sm:$0xff]
    %v203 = vld [vmem:[#allocation2 + $0x418] sm:$0xff]
    %v204 = vld [vmem:[#allocation2 + $0x420] sm:$0xff]
    %v205 = vld [vmem:[#allocation2 + $0x428] sm:$0xff]
    %v206 = vld [vmem:[#allocation2 + $0x430] sm:$0xff]
    %v207 = vld [vmem:[#allocation2 + $0x438] sm:$0xff]
    %v208 = vld [vmem:[#allocation2 + $0x440] sm:$0xff]
    %v209 = vld [vmem:[#allocation2 + $0x448] sm:$0xff]
    %v210 = vld [vmem:[#allocation2 + $0x450] sm:$0xff]
    %v211 = vld [vmem:[#allocation2 + $0x458] sm:$0xff]
    %v212 = vld [vmem:[#allocation2 + $0x460] sm:$0xff]
    %v213 = vld [vmem:[#allocation2 + $0x468] sm:$0xff]
    %v214 = vld [vmem:[#allocation2 + $0x470] sm:$0xff]
    %v215 = vld [vmem:[#allocation2 + $0x478] sm:$0xff]
    %v216 = vld [vmem:[#allocation2 + $0x480] sm:$0xff]
    %v217 = vld [vmem:[#allocation2 + $0x488] sm:$0xff]
    %v218 = vld [vmem:[#allocation2 + $0x490] sm:$0xff]
    %v219 = vld [vmem:[#allocation2 + $0x498] sm:$0xff]
    %v220 = vld [vmem:[#allocation2 + $0x4a0] sm:$0xff]
    %v221 = vld [vmem:[#allocation2 + $0x4a8] sm:$0xff]
    %v222 = vld [vmem:[#allocation2 + $0x4b0] sm:$0xff]
    %v223 = vld [vmem:[#allocation2 + $0x4b8] sm:$0xff]
    %v224 = vld [vmem:[#allocation2 + $0x4c0] sm:$0xff]
    %v225 = vld [vmem:[#allocation2 + $0x4c8] sm:$0xff]
    %v226 = vld [vmem:[#allocation2 + $0x4d0] sm:$0xff]
    %v227 = vld [vmem:[#allocation2 + $0x4d8] sm:$0xff]
    %v228 = vld [vmem:[#allocation2 + $0x4e0] sm:$0xff]
    %v229 = vld [vmem:[#allocation2 + $0x4e8] sm:$0xff]
    %v230 = vld [vmem:[#allocation2 + $0x4f0] sm:$0xff]
    %v231 = vld [vmem:[#allocation2 + $0x4f8] sm:$0xff]
    %v232 = vld [vmem:[#allocation2 + $0x500] sm:$0xff]
    %v233 = vld [vmem:[#allocation2 + $0x508] sm:$0xff]
    %v234 = vld [vmem:[#allocation2 + $0x510] sm:$0xff]
    %v235 = vld [vmem:[#allocation2 + $0x518] sm:$0xff]
    %v236 = vld [vmem:[#allocation2 + $0x520] sm:$0xff]
    %v237 = vld [vmem:[#allocation2 + $0x528] sm:$0xff]
    %v238 = vld [vmem:[#allocation2 + $0x530] sm:$0xff]
    %v239 = vld [vmem:[#allocation2 + $0x538] sm:$0xff]
    %v240 = vld [vmem:[#allocation2 + $0x540] sm:$0xff]
    %v241 = vld [vmem:[#allocation2 + $0x548] sm:$0xff]
    %v242 = vld [vmem:[#allocation2 + $0x550] sm:$0xff]
    %v243 = vld [vmem:[#allocation2 + $0x558] sm:$0xff]
    %v244 = vld [vmem:[#allocation2 + $0x560] sm:$0xff]
    %v245 = vld [vmem:[#allocation2 + $0x568] sm:$0xff]
    %v246 = vld [vmem:[#allocation2 + $0x570] sm:$0xff]
    %v247 = vld [vmem:[#allocation2 + $0x578] sm:$0xff]
    %v248 = vld [vmem:[#allocation2 + $0x580] sm:$0xff]
    %v249 = vld [vmem:[#allocation2 + $0x588] sm:$0xff]
    %v250 = vld [vmem:[#allocation2 + $0x590] sm:$0xff]
    %v251 = vld [vmem:[#allocation2 + $0x598] sm:$0xff]
    %v252 = vld [vmem:[#allocation2 + $0x5a0] sm:$0xff]
    %v253 = vld [vmem:[#allocation2 + $0x5a8] sm:$0xff]
    %v254 = vld [vmem:[#allocation2 + $0x5b0] sm:$0xff]
    %v255 = vld [vmem:[#allocation2 + $0x5b8] sm:$0xff]
    %v256 = vld [vmem:[#allocation2 + $0x5c0] sm:$0xff]
    %v257 = vld [vmem:[#allocation2 + $0x5c8] sm:$0xff]
    %v258 = vld [vmem:[#allocation2 + $0x5d0] sm:$0xff]
    %v259 = vld [vmem:[#allocation2 + $0x5d8] sm:$0xff]
    %v260 = vld [vmem:[#allocation2 + $0x5e0] sm:$0xff]
    %v261 = vld [vmem:[#allocation2 + $0x5e8] sm:$0xff]
    %v262 = vld [vmem:[#allocation2 + $0x5f0] sm:$0xff]
    %v263 = vld [vmem:[#allocation2 + $0x5f8] sm:$0xff]
    %v264 = vld [vmem:[#allocation2 + $0x600] sm:$0xff]
    %v265 = vld [vmem:[#allocation2 + $0x608] sm:$0xff]
    %v266 = vld [vmem:[#allocation2 + $0x610] sm:$0xff]
    %v267 = vld [vmem:[#allocation2 + $0x618] sm:$0xff]
    %v268 = vunpack.c.l.s8.bf16 %v72
    %v269 = vunpack.c.h.s8.bf16 %v72
    %v270 = vunpack.c.l.s8.bf16 %v73
    %v271 = vunpack.c.h.s8.bf16 %v73
    %v272 = vunpack.c.l.s8.bf16 %v74
    %v273 = vunpack.c.h.s8.bf16 %v74
    %v274 = vunpack.c.l.s8.bf16 %v75
    %v275 = vunpack.c.h.s8.bf16 %v75
    %v276 = vunpack.c.l.s8.bf16 %v76
    %v277 = vunpack.c.h.s8.bf16 %v76
    %v278 = vunpack.c.l.s8.bf16 %v77
    %v279 = vunpack.c.h.s8.bf16 %v77
    %v280 = vunpack.c.l.s8.bf16 %v78
    %v281 = vunpack.c.h.s8.bf16 %v78
    %v282 = vunpack.c.l.s8.bf16 %v79
    %v283 = vunpack.c.h.s8.bf16 %v79
    %v284 = vunpack.c.l.s8.bf16 %v80
    %v285 = vunpack.c.h.s8.bf16 %v80
    %v286 = vunpack.c.l.s8.bf16 %v81
    %v287 = vunpack.c.h.s8.bf16 %v81
    %v288 = vunpack.c.l.s8.bf16 %v82
    %v289 = vunpack.c.h.s8.bf16 %v82
    %v290 = vunpack.c.l.s8.bf16 %v83
    %v291 = vunpack.c.h.s8.bf16 %v83
    %v292 = vunpack.c.l.s8.bf16 %v84
    %v293 = vunpack.c.h.s8.bf16 %v84
    %v294 = vunpack.c.l.s8.bf16 %v85
    %v295 = vunpack.c.h.s8.bf16 %v85
    %v296 = vunpack.c.l.s8.bf16 %v86
    %v297 = vunpack.c.h.s8.bf16 %v86
    %v298 = vunpack.c.l.s8.bf16 %v87
    %v299 = vunpack.c.h.s8.bf16 %v87
    %v300 = vunpack.c.l.s8.bf16 %v88
    %v301 = vunpack.c.h.s8.bf16 %v88
    %v302 = vunpack.c.l.s8.bf16 %v89
    %v303 = vunpack.c.h.s8.bf16 %v89
    %v304 = vunpack.c.l.s8.bf16 %v90
    %v305 = vunpack.c.h.s8.bf16 %v90
    %v306 = vunpack.c.l.s8.bf16 %v91
    %v307 = vunpack.c.h.s8.bf16 %v91
    %v308 = vunpack.c.l.s8.bf16 %v92
    %v309 = vunpack.c.h.s8.bf16 %v92
    %v310 = vunpack.c.l.s8.bf16 %v93
    %v311 = vunpack.c.h.s8.bf16 %v93
    %v312 = vunpack.c.l.s8.bf16 %v94
    %v313 = vunpack.c.h.s8.bf16 %v94
    %v314 = vunpack.c.l.s8.bf16 %v95
    %v315 = vunpack.c.h.s8.bf16 %v95
    %v316 = vunpack.c.l.s8.bf16 %v96
    %v317 = vunpack.c.h.s8.bf16 %v96
    %v318 = vunpack.c.l.s8.bf16 %v97
    %v319 = vunpack.c.h.s8.bf16 %v97
    %v320 = vunpack.c.l.s8.bf16 %v98
    %v321 = vunpack.c.h.s8.bf16 %v98
    %v322 = vunpack.c.l.s8.bf16 %v99
    %v323 = vunpack.c.h.s8.bf16 %v99
    %v324 = vunpack.c.l.s8.bf16 %v100
    %v325 = vunpack.c.h.s8.bf16 %v100
    %v326 = vunpack.c.l.s8.bf16 %v101
    %v327 = vunpack.c.h.s8.bf16 %v101
    %v328 = vunpack.c.l.s8.bf16 %v102
    %v329 = vunpack.c.h.s8.bf16 %v102
    %v330 = vunpack.c.l.s8.bf16 %v103
    %v331 = vunpack.c.h.s8.bf16 %v103
    %v332 = vunpack.c.l.s8.bf16 %v104
    %v333 = vunpack.c.h.s8.bf16 %v104
    %v334 = vunpack.c.l.s8.bf16 %v105
    %v335 = vunpack.c.h.s8.bf16 %v105
    %v336 = vunpack.c.l.s8.bf16 %v106
    %v337 = vunpack.c.h.s8.bf16 %v106
    %v338 = vunpack.c.l.s8.bf16 %v107
    %v339 = vunpack.c.h.s8.bf16 %v107
    %v340 = vunpack.c.l.s8.bf16 %v108
    %v341 = vunpack.c.h.s8.bf16 %v108
    %v342 = vunpack.c.l.s8.bf16 %v109
    %v343 = vunpack.c.h.s8.bf16 %v109
    %v344 = vunpack.c.l.s8.bf16 %v110
    %v345 = vunpack.c.h.s8.bf16 %v110
    %v346 = vunpack.c.l.s8.bf16 %v111
    %v347 = vunpack.c.h.s8.bf16 %v111
    %v348 = vunpack.c.l.s8.bf16 %v112
    %v349 = vunpack.c.h.s8.bf16 %v112
    %v350 = vunpack.c.l.s8.bf16 %v113
    %v351 = vunpack.c.h.s8.bf16 %v113
    %v352 = vunpack.c.l.s8.bf16 %v114
    %v353 = vunpack.c.h.s8.bf16 %v114
    %v354 = vunpack.c.l.s8.bf16 %v115
    %v355 = vunpack.c.h.s8.bf16 %v115
    %v356 = vunpack.c.l.s8.bf16 %v116
    %v357 = vunpack.c.h.s8.bf16 %v116
    %v358 = vunpack.c.l.s8.bf16 %v117
    %v359 = vunpack.c.h.s8.bf16 %v117
    %v360 = vunpack.c.l.s8.bf16 %v118
    %v361 = vunpack.c.h.s8.bf16 %v118
    %v362 = vunpack.c.l.s8.bf16 %v119
    %v363 = vunpack.c.h.s8.bf16 %v119
    %v364 = vunpack.c.l.s8.bf16 %v120
    %v365 = vunpack.c.h.s8.bf16 %v120
    %v366 = vunpack.c.l.s8.bf16 %v121
    %v367 = vunpack.c.h.s8.bf16 %v121
    %v368 = vunpack.c.l.s8.bf16 %v122
    %v369 = vunpack.c.h.s8.bf16 %v122
    %v370 = vunpack.c.l.s8.bf16 %v123
    %v371 = vunpack.c.h.s8.bf16 %v123
    %v372 = vunpack.c.l.s8.bf16 %v124
    %v373 = vunpack.c.h.s8.bf16 %v124
    %v374 = vunpack.c.l.s8.bf16 %v125
    %v375 = vunpack.c.h.s8.bf16 %v125
    %v376 = vunpack.c.l.s8.bf16 %v126
    %v377 = vunpack.c.h.s8.bf16 %v126
    %v378 = vunpack.c.l.s8.bf16 %v127
    %v379 = vunpack.c.h.s8.bf16 %v127
    %v380 = vunpack.c.l.s8.bf16 %v128
    %v381 = vunpack.c.h.s8.bf16 %v128
    %v382 = vunpack.c.l.s8.bf16 %v129
    %v383 = vunpack.c.h.s8.bf16 %v129
    %v384 = vunpack.c.l.s8.bf16 %v130
    %v385 = vunpack.c.h.s8.bf16 %v130
    %v386 = vunpack.c.l.s8.bf16 %v131
    %v387 = vunpack.c.h.s8.bf16 %v131
    %v388 = vunpack.c.l.s8.bf16 %v132
    %v389 = vunpack.c.h.s8.bf16 %v132
    %v390 = vunpack.c.l.s8.bf16 %v133
    %v391 = vunpack.c.h.s8.bf16 %v133
    %v392 = vunpack.c.l.s8.bf16 %v134
    %v393 = vunpack.c.h.s8.bf16 %v134
    %v394 = vunpack.c.l.s8.bf16 %v135
    %v395 = vunpack.c.h.s8.bf16 %v135
    %v396 = vunpack.c.l.s8.bf16 %v136
    %v397 = vunpack.c.h.s8.bf16 %v136
    %v398 = vunpack.c.l.s8.bf16 %v137
    %v399 = vunpack.c.h.s8.bf16 %v137
    %v400 = vunpack.c.l.s8.bf16 %v138
    %v401 = vunpack.c.h.s8.bf16 %v138
    %v402 = vunpack.c.l.s8.bf16 %v139
    %v403 = vunpack.c.h.s8.bf16 %v139
    %v404 = vunpack.c.l.s8.bf16 %v140
    %v405 = vunpack.c.h.s8.bf16 %v140
    %v406 = vunpack.c.l.s8.bf16 %v141
    %v407 = vunpack.c.h.s8.bf16 %v141
    %v408 = vunpack.c.l.s8.bf16 %v142
    %v409 = vunpack.c.h.s8.bf16 %v142
    %v410 = vunpack.c.l.s8.bf16 %v143
    %v411 = vunpack.c.h.s8.bf16 %v143
    %v412 = vunpack.c.l.s8.bf16 %v144
    %v413 = vunpack.c.h.s8.bf16 %v144
    %v414 = vunpack.c.l.s8.bf16 %v145
    %v415 = vunpack.c.h.s8.bf16 %v145
    %v416 = vunpack.c.l.s8.bf16 %v146
    %v417 = vunpack.c.h.s8.bf16 %v146
    %v418 = vunpack.c.l.s8.bf16 %v147
    %v419 = vunpack.c.h.s8.bf16 %v147
    %v420 = vunpack.c.l.s8.bf16 %v148
    %v421 = vunpack.c.h.s8.bf16 %v148
    %v422 = vunpack.c.l.s8.bf16 %v149
    %v423 = vunpack.c.h.s8.bf16 %v149
    %v424 = vunpack.c.l.s8.bf16 %v150
    %v425 = vunpack.c.h.s8.bf16 %v150
    %v426 = vunpack.c.l.s8.bf16 %v151
    %v427 = vunpack.c.h.s8.bf16 %v151
    %v428 = vunpack.c.l.s8.bf16 %v152
    %v429 = vunpack.c.h.s8.bf16 %v152
    %v430 = vunpack.c.l.s8.bf16 %v153
    %v431 = vunpack.c.h.s8.bf16 %v153
    %v432 = vunpack.c.l.s8.bf16 %v154
    %v433 = vunpack.c.h.s8.bf16 %v154
    %v434 = vunpack.c.l.s8.bf16 %v155
    %v435 = vunpack.c.h.s8.bf16 %v155
    %v436 = vunpack.c.l.s8.bf16 %v156
    %v437 = vunpack.c.h.s8.bf16 %v156
    %v438 = vunpack.c.l.s8.bf16 %v157
    %v439 = vunpack.c.h.s8.bf16 %v157
    %v440 = vunpack.c.l.s8.bf16 %v158
    %v441 = vunpack.c.h.s8.bf16 %v158
    %v442 = vunpack.c.l.s8.bf16 %v159
    %v443 = vunpack.c.h.s8.bf16 %v159
    %v444 = vunpack.c.l.s8.bf16 %v160
    %v445 = vunpack.c.h.s8.bf16 %v160
    %v446 = vunpack.c.l.s8.bf16 %v161
    %v447 = vunpack.c.h.s8.bf16 %v161
    %v448 = vunpack.c.l.s8.bf16 %v162
    %v449 = vunpack.c.h.s8.bf16 %v162
    %v450 = vunpack.c.l.s8.bf16 %v163
    %v451 = vunpack.c.h.s8.bf16 %v163
    %v452 = vunpack.c.l.s8.bf16 %v164
    %v453 = vunpack.c.h.s8.bf16 %v164
    %v454 = vunpack.c.l.s8.bf16 %v165
    %v455 = vunpack.c.h.s8.bf16 %v165
    %v456 = vunpack.c.l.s8.bf16 %v166
    %v457 = vunpack.c.h.s8.bf16 %v166
    %v458 = vunpack.c.l.s8.bf16 %v167
    %v459 = vunpack.c.h.s8.bf16 %v167
    %v460 = vunpack.c.l.s8.bf16 %v168
    %v461 = vunpack.c.h.s8.bf16 %v168
    %v462 = vunpack.c.l.s8.bf16 %v169
    %v463 = vunpack.c.h.s8.bf16 %v169
    %v464 = vunpack.c.l.s8.bf16 %v170
    %v465 = vunpack.c.h.s8.bf16 %v170
    %v466 = vunpack.c.l.s8.bf16 %v171
    %v467 = vunpack.c.h.s8.bf16 %v171
    %v468 = vunpack.c.l.s8.bf16 %v172
    %v469 = vunpack.c.h.s8.bf16 %v172
    %v470 = vunpack.c.l.s8.bf16 %v173
    %v471 = vunpack.c.h.s8.bf16 %v173
    %v472 = vunpack.c.l.s8.bf16 %v174
    %v473 = vunpack.c.h.s8.bf16 %v174
    %v474 = vunpack.c.l.s8.bf16 %v175
    %v475 = vunpack.c.h.s8.bf16 %v175
    %v476 = vunpack.c.l.s8.bf16 %v176
    %v477 = vunpack.c.h.s8.bf16 %v176
    %v478 = vunpack.c.l.s8.bf16 %v177
    %v479 = vunpack.c.h.s8.bf16 %v177
    %v480 = vunpack.c.l.s8.bf16 %v178
    %v481 = vunpack.c.h.s8.bf16 %v178
    %v482 = vunpack.c.l.s8.bf16 %v179
    %v483 = vunpack.c.h.s8.bf16 %v179
    %v484 = vunpack.c.l.s8.bf16 %v180
    %v485 = vunpack.c.h.s8.bf16 %v180
    %v486 = vunpack.c.l.s8.bf16 %v181
    %v487 = vunpack.c.h.s8.bf16 %v181
    %v488 = vunpack.c.l.s8.bf16 %v182
    %v489 = vunpack.c.h.s8.bf16 %v182
    %v490 = vunpack.c.l.s8.bf16 %v183
    %v491 = vunpack.c.h.s8.bf16 %v183
    %v492 = vunpack.c.l.s8.bf16 %v184
    %v493 = vunpack.c.h.s8.bf16 %v184
    %v494 = vunpack.c.l.s8.bf16 %v185
    %v495 = vunpack.c.h.s8.bf16 %v185
    %v496 = vunpack.c.l.s8.bf16 %v186
    %v497 = vunpack.c.h.s8.bf16 %v186
    %v498 = vunpack.c.l.s8.bf16 %v187
    %v499 = vunpack.c.h.s8.bf16 %v187
    %v500 = vunpack.c.l.s8.bf16 %v188
    %v501 = vunpack.c.h.s8.bf16 %v188
    %v502 = vunpack.c.l.s8.bf16 %v189
    %v503 = vunpack.c.h.s8.bf16 %v189
    %v504 = vunpack.c.l.s8.bf16 %v190
    %v505 = vunpack.c.h.s8.bf16 %v190
    %v506 = vunpack.c.l.s8.bf16 %v191
    %v507 = vunpack.c.h.s8.bf16 %v191
    %v508 = vunpack.c.l.s8.bf16 %v192
    %v509 = vunpack.c.h.s8.bf16 %v192
    %v510 = vunpack.c.l.s8.bf16 %v193
    %v511 = vunpack.c.h.s8.bf16 %v193
    %v512 = vunpack.c.l.s8.bf16 %v194
    %v513 = vunpack.c.h.s8.bf16 %v194
    %v514 = vunpack.c.l.s8.bf16 %v195
    %v515 = vunpack.c.h.s8.bf16 %v195
    %v516 = vunpack.c.l.s8.bf16 %v196
    %v517 = vunpack.c.h.s8.bf16 %v196
    %v518 = vunpack.c.l.s8.bf16 %v197
    %v519 = vunpack.c.h.s8.bf16 %v197
    %v520 = vunpack.c.l.s8.bf16 %v198
    %v521 = vunpack.c.h.s8.bf16 %v198
    %v522 = vunpack.c.l.s8.bf16 %v199
    %v523 = vunpack.c.h.s8.bf16 %v199
    %v524 = vunpack.c.l.s8.bf16 %v200
    %v525 = vunpack.c.h.s8.bf16 %v200
    %v526 = vunpack.c.l.s8.bf16 %v201
    %v527 = vunpack.c.h.s8.bf16 %v201
    %v528 = vunpack.c.l.s8.bf16 %v202
    %v529 = vunpack.c.h.s8.bf16 %v202
    %v530 = vunpack.c.l.s8.bf16 %v203
    %v531 = vunpack.c.h.s8.bf16 %v203
    %v532 = vunpack.c.l.s8.bf16 %v204
    %v533 = vunpack.c.h.s8.bf16 %v204
    %v534 = vunpack.c.l.s8.bf16 %v205
    %v535 = vunpack.c.h.s8.bf16 %v205
    %v536 = vunpack.c.l.s8.bf16 %v206
    %v537 = vunpack.c.h.s8.bf16 %v206
    %v538 = vunpack.c.l.s8.bf16 %v207
    %v539 = vunpack.c.h.s8.bf16 %v207
    %v540 = vunpack.c.l.s8.bf16 %v208
    %v541 = vunpack.c.h.s8.bf16 %v208
    %v542 = vunpack.c.l.s8.bf16 %v209
    %v543 = vunpack.c.h.s8.bf16 %v209
    %v544 = vunpack.c.l.s8.bf16 %v210
    %v545 = vunpack.c.h.s8.bf16 %v210
    %v546 = vunpack.c.l.s8.bf16 %v211
    %v547 = vunpack.c.h.s8.bf16 %v211
    %v548 = vunpack.c.l.s8.bf16 %v212
    %v549 = vunpack.c.h.s8.bf16 %v212
    %v550 = vunpack.c.l.s8.bf16 %v213
    %v551 = vunpack.c.h.s8.bf16 %v213
    %v552 = vunpack.c.l.s8.bf16 %v214
    %v553 = vunpack.c.h.s8.bf16 %v214
    %v554 = vunpack.c.l.s8.bf16 %v215
    %v555 = vunpack.c.h.s8.bf16 %v215
    %v556 = vunpack.c.l.s8.bf16 %v216
    %v557 = vunpack.c.h.s8.bf16 %v216
    %v558 = vunpack.c.l.s8.bf16 %v217
    %v559 = vunpack.c.h.s8.bf16 %v217
    %v560 = vunpack.c.l.s8.bf16 %v218
    %v561 = vunpack.c.h.s8.bf16 %v218
    %v562 = vunpack.c.l.s8.bf16 %v219
    %v563 = vunpack.c.h.s8.bf16 %v219
    %v564 = vunpack.c.l.s8.bf16 %v220
    %v565 = vunpack.c.h.s8.bf16 %v220
    %v566 = vunpack.c.l.s8.bf16 %v221
    %v567 = vunpack.c.h.s8.bf16 %v221
    %v568 = vunpack.c.l.s8.bf16 %v222
    %v569 = vunpack.c.h.s8.bf16 %v222
    %v570 = vunpack.c.l.s8.bf16 %v223
    %v571 = vunpack.c.h.s8.bf16 %v223
    %v572 = vunpack.c.l.s8.bf16 %v224
    %v573 = vunpack.c.h.s8.bf16 %v224
    %v574 = vunpack.c.l.s8.bf16 %v225
    %v575 = vunpack.c.h.s8.bf16 %v225
    %v576 = vunpack.c.l.s8.bf16 %v226
    %v577 = vunpack.c.h.s8.bf16 %v226
    %v578 = vunpack.c.l.s8.bf16 %v227
    %v579 = vunpack.c.h.s8.bf16 %v227
    %v580 = vunpack.c.l.s8.bf16 %v228
    %v581 = vunpack.c.h.s8.bf16 %v228
    %v582 = vunpack.c.l.s8.bf16 %v229
    %v583 = vunpack.c.h.s8.bf16 %v229
    %v584 = vunpack.c.l.s8.bf16 %v230
    %v585 = vunpack.c.h.s8.bf16 %v230
    %v586 = vunpack.c.l.s8.bf16 %v231
    %v587 = vunpack.c.h.s8.bf16 %v231
    %v588 = vunpack.c.l.s8.bf16 %v232
    %v589 = vunpack.c.h.s8.bf16 %v232
    %v590 = vunpack.c.l.s8.bf16 %v233
    %v591 = vunpack.c.h.s8.bf16 %v233
    %v592 = vunpack.c.l.s8.bf16 %v234
    %v593 = vunpack.c.h.s8.bf16 %v234
    %v594 = vunpack.c.l.s8.bf16 %v235
    %v595 = vunpack.c.h.s8.bf16 %v235
    %v596 = vunpack.c.l.s8.bf16 %v236
    %v597 = vunpack.c.h.s8.bf16 %v236
    %v598 = vunpack.c.l.s8.bf16 %v237
    %v599 = vunpack.c.h.s8.bf16 %v237
    %v600 = vunpack.c.l.s8.bf16 %v238
    %v601 = vunpack.c.h.s8.bf16 %v238
    %v602 = vunpack.c.l.s8.bf16 %v239
    %v603 = vunpack.c.h.s8.bf16 %v239
    %v604 = vunpack.c.l.s8.bf16 %v240
    %v605 = vunpack.c.h.s8.bf16 %v240
    %v606 = vunpack.c.l.s8.bf16 %v241
    %v607 = vunpack.c.h.s8.bf16 %v241
    %v608 = vunpack.c.l.s8.bf16 %v242
    %v609 = vunpack.c.h.s8.bf16 %v242
    %v610 = vunpack.c.l.s8.bf16 %v243
    %v611 = vunpack.c.h.s8.bf16 %v243
    %v612 = vunpack.c.l.s8.bf16 %v244
    %v613 = vunpack.c.h.s8.bf16 %v244
    %v614 = vunpack.c.l.s8.bf16 %v245
    %v615 = vunpack.c.h.s8.bf16 %v245
    %v616 = vunpack.c.l.s8.bf16 %v246
    %v617 = vunpack.c.h.s8.bf16 %v246
    %v618 = vunpack.c.l.s8.bf16 %v247
    %v619 = vunpack.c.h.s8.bf16 %v247
    %v620 = vunpack.c.l.s8.bf16 %v248
    %v621 = vunpack.c.h.s8.bf16 %v248
    %v622 = vunpack.c.l.s8.bf16 %v249
    %v623 = vunpack.c.h.s8.bf16 %v249
    %v624 = vunpack.c.l.s8.bf16 %v250
    %v625 = vunpack.c.h.s8.bf16 %v250
    %v626 = vunpack.c.l.s8.bf16 %v251
    %v627 = vunpack.c.h.s8.bf16 %v251
    %v628 = vunpack.c.l.s8.bf16 %v252
    %v629 = vunpack.c.h.s8.bf16 %v252
    %v630 = vunpack.c.l.s8.bf16 %v253
    %v631 = vunpack.c.h.s8.bf16 %v253
    %v632 = vunpack.c.l.s8.bf16 %v254
    %v633 = vunpack.c.h.s8.bf16 %v254
    %v634 = vunpack.c.l.s8.bf16 %v255
    %v635 = vunpack.c.h.s8.bf16 %v255
    %v636 = vunpack.c.l.s8.bf16 %v256
    %v637 = vunpack.c.h.s8.bf16 %v256
    %v638 = vunpack.c.l.s8.bf16 %v257
    %v639 = vunpack.c.h.s8.bf16 %v257
    %v640 = vunpack.c.l.s8.bf16 %v258
    %v641 = vunpack.c.h.s8.bf16 %v258
    %v642 = vunpack.c.l.s8.bf16 %v259
    %v643 = vunpack.c.h.s8.bf16 %v259
    %v644 = vunpack.c.l.s8.bf16 %v260
    %v645 = vunpack.c.h.s8.bf16 %v260
    %v646 = vunpack.c.l.s8.bf16 %v261
    %v647 = vunpack.c.h.s8.bf16 %v261
    %v648 = vunpack.c.l.s8.bf16 %v262
    %v649 = vunpack.c.h.s8.bf16 %v262
    %v650 = vunpack.c.l.s8.bf16 %v263
    %v651 = vunpack.c.h.s8.bf16 %v263
    %v652 = vunpack.c.l.s8.bf16 %v264
    %v653 = vunpack.c.h.s8.bf16 %v264
    %v654 = vunpack.c.l.s8.bf16 %v265
    %v655 = vunpack.c.h.s8.bf16 %v265
    %v656 = vunpack.c.l.s8.bf16 %v266
    %v657 = vunpack.c.h.s8.bf16 %v266
    %v658 = vunpack.c.l.s8.bf16 %v267
    %v659 = vunpack.c.h.s8.bf16 %v267
    %v664 = vunpack.c.l.b16 %v68
    %v665 = vunpack.c.h.b16 %v68
    %v666 = vunpack.c.l.b16 %v69
    %v667 = vunpack.c.h.b16 %v69
    %v668 = vunpack.c.l.b16 %v70
    %v669 = vunpack.c.h.b16 %v70
    %v670 = vunpack.c.l.b16 %v71
    %v671 = vpack.c.b16 %v664, %v664
    %v672 = vpack.c.b16 %v665, %v665
    %v673 = vpack.c.b16 %v666, %v666
    %v674 = vpack.c.b16 %v667, %v667
    %v675 = vpack.c.b16 %v668, %v668
    %v676 = vpack.c.b16 %v669, %v669
    %v677 = vpack.c.b16 %v670, %v670
    %v1076 = vunpack.c.l.b16 %v268
    %v1077 = vunpack.c.h.b16 %v268
    %v1078 = vunpack.c.l.b16 %v269
    %v1079 = vunpack.c.h.b16 %v269
    %v1080 = vunpack.c.l.b16 %v270
    %v1081 = vunpack.c.h.b16 %v270
    %v1082 = vunpack.c.l.b16 %v271
    %v1083 = vunpack.c.h.b16 %v271
    %v1084 = vunpack.c.l.b16 %v272
    %v1085 = vunpack.c.h.b16 %v272
    %v1086 = vunpack.c.l.b16 %v273
    %v1087 = vunpack.c.h.b16 %v273
    %v1088 = vunpack.c.l.b16 %v274
    %v1089 = vunpack.c.h.b16 %v274
    %v1090 = vunpack.c.l.b16 %v275
    %v1091 = vunpack.c.h.b16 %v275
    %v1092 = vunpack.c.l.b16 %v276
    %v1093 = vunpack.c.h.b16 %v276
    %v1094 = vunpack.c.l.b16 %v277
    %v1095 = vunpack.c.h.b16 %v277
    %v1096 = vunpack.c.l.b16 %v278
    %v1097 = vunpack.c.h.b16 %v278
    %v1098 = vunpack.c.l.b16 %v279
    %v1099 = vunpack.c.h.b16 %v279
    %v1100 = vunpack.c.l.b16 %v280
    %v1101 = vunpack.c.h.b16 %v280
    %v1102 = vunpack.c.l.b16 %v281
    %v1103 = vunpack.c.h.b16 %v281
    %v1104 = vunpack.c.l.b16 %v282
    %v1105 = vunpack.c.h.b16 %v282
    %v1106 = vunpack.c.l.b16 %v283
    %v1107 = vunpack.c.h.b16 %v283
    %v1108 = vunpack.c.l.b16 %v284
    %v1109 = vunpack.c.h.b16 %v284
    %v1110 = vunpack.c.l.b16 %v285
    %v1111 = vunpack.c.h.b16 %v285
    %v1112 = vunpack.c.l.b16 %v286
    %v1113 = vunpack.c.h.b16 %v286
    %v1114 = vunpack.c.l.b16 %v287
    %v1115 = vunpack.c.h.b16 %v287
    %v1116 = vunpack.c.l.b16 %v288
    %v1117 = vunpack.c.h.b16 %v288
    %v1118 = vunpack.c.l.b16 %v289
    %v1119 = vunpack.c.h.b16 %v289
    %v1120 = vunpack.c.l.b16 %v290
    %v1121 = vunpack.c.h.b16 %v290
    %v1122 = vunpack.c.l.b16 %v291
    %v1123 = vunpack.c.h.b16 %v291
    %v1124 = vunpack.c.l.b16 %v292
    %v1125 = vunpack.c.h.b16 %v292
    %v1126 = vunpack.c.l.b16 %v293
    %v1127 = vunpack.c.h.b16 %v293
    %v1128 = vunpack.c.l.b16 %v294
    %v1129 = vunpack.c.h.b16 %v294
    %v1130 = vunpack.c.l.b16 %v295
    %v1131 = vunpack.c.h.b16 %v295
    %v1132 = vunpack.c.l.b16 %v296
    %v1133 = vunpack.c.h.b16 %v296
    %v1134 = vunpack.c.l.b16 %v297
    %v1135 = vunpack.c.h.b16 %v297
    %v1136 = vunpack.c.l.b16 %v298
    %v1137 = vunpack.c.h.b16 %v298
    %v1138 = vunpack.c.l.b16 %v299
    %v1139 = vunpack.c.h.b16 %v299
    %v1140 = vunpack.c.l.b16 %v300
    %v1141 = vunpack.c.h.b16 %v300
    %v1142 = vunpack.c.l.b16 %v301
    %v1143 = vunpack.c.h.b16 %v301
    %v1144 = vunpack.c.l.b16 %v302
    %v1145 = vunpack.c.h.b16 %v302
    %v1146 = vunpack.c.l.b16 %v303
    %v1147 = vunpack.c.h.b16 %v303
    %v1148 = vunpack.c.l.b16 %v304
    %v1149 = vunpack.c.h.b16 %v304
    %v1150 = vunpack.c.l.b16 %v305
    %v1151 = vunpack.c.h.b16 %v305
    %v1152 = vunpack.c.l.b16 %v306
    %v1153 = vunpack.c.h.b16 %v306
    %v1154 = vunpack.c.l.b16 %v307
    %v1155 = vunpack.c.h.b16 %v307
    %v1156 = vunpack.c.l.b16 %v308
    %v1157 = vunpack.c.h.b16 %v308
    %v1158 = vunpack.c.l.b16 %v309
    %v1159 = vunpack.c.h.b16 %v309
    %v1160 = vunpack.c.l.b16 %v310
    %v1161 = vunpack.c.h.b16 %v310
    %v1162 = vunpack.c.l.b16 %v311
    %v1163 = vunpack.c.h.b16 %v311
    %v1164 = vunpack.c.l.b16 %v312
    %v1165 = vunpack.c.h.b16 %v312
    %v1166 = vunpack.c.l.b16 %v313
    %v1167 = vunpack.c.h.b16 %v313
    %v1168 = vunpack.c.l.b16 %v314
    %v1169 = vunpack.c.h.b16 %v314
    %v1170 = vunpack.c.l.b16 %v315
    %v1171 = vunpack.c.h.b16 %v315
    %v1172 = vunpack.c.l.b16 %v316
    %v1173 = vunpack.c.h.b16 %v316
    %v1174 = vunpack.c.l.b16 %v317
    %v1175 = vunpack.c.h.b16 %v317
    %v1176 = vunpack.c.l.b16 %v318
    %v1177 = vunpack.c.h.b16 %v318
    %v1178 = vunpack.c.l.b16 %v319
    %v1179 = vunpack.c.h.b16 %v319
    %v1180 = vunpack.c.l.b16 %v320
    %v1181 = vunpack.c.h.b16 %v320
    %v1182 = vunpack.c.l.b16 %v321
    %v1183 = vunpack.c.h.b16 %v321
    %v1184 = vunpack.c.l.b16 %v322
    %v1185 = vunpack.c.h.b16 %v322
    %v1186 = vunpack.c.l.b16 %v323
    %v1187 = vunpack.c.h.b16 %v323
    %v1188 = vunpack.c.l.b16 %v324
    %v1189 = vunpack.c.h.b16 %v324
    %v1190 = vunpack.c.l.b16 %v325
    %v1191 = vunpack.c.h.b16 %v325
    %v1192 = vunpack.c.l.b16 %v326
    %v1193 = vunpack.c.h.b16 %v326
    %v1194 = vunpack.c.l.b16 %v327
    %v1195 = vunpack.c.h.b16 %v327
    %v1196 = vunpack.c.l.b16 %v328
    %v1197 = vunpack.c.h.b16 %v328
    %v1198 = vunpack.c.l.b16 %v329
    %v1199 = vunpack.c.h.b16 %v329
    %v1200 = vunpack.c.l.b16 %v330
    %v1201 = vunpack.c.h.b16 %v330
    %v1202 = vunpack.c.l.b16 %v331
    %v1203 = vunpack.c.h.b16 %v331
    %v1204 = vunpack.c.l.b16 %v332
    %v1205 = vunpack.c.h.b16 %v332
    %v1206 = vunpack.c.l.b16 %v333
    %v1207 = vunpack.c.h.b16 %v333
    %v1208 = vunpack.c.l.b16 %v334
    %v1209 = vunpack.c.h.b16 %v334
    %v1210 = vunpack.c.l.b16 %v335
    %v1211 = vunpack.c.h.b16 %v335
    %v1212 = vunpack.c.l.b16 %v336
    %v1213 = vunpack.c.h.b16 %v336
    %v1214 = vunpack.c.l.b16 %v337
    %v1215 = vunpack.c.h.b16 %v337
    %v1216 = vunpack.c.l.b16 %v338
    %v1217 = vunpack.c.h.b16 %v338
    %v1218 = vunpack.c.l.b16 %v339
    %v1219 = vunpack.c.h.b16 %v339
    %v1220 = vunpack.c.l.b16 %v340
    %v1221 = vunpack.c.h.b16 %v340
    %v1222 = vunpack.c.l.b16 %v341
    %v1223 = vunpack.c.h.b16 %v341
    %v1224 = vunpack.c.l.b16 %v342
    %v1225 = vunpack.c.h.b16 %v342
    %v1226 = vunpack.c.l.b16 %v343
    %v1227 = vunpack.c.h.b16 %v343
    %v1228 = vunpack.c.l.b16 %v344
    %v1229 = vunpack.c.h.b16 %v344
    %v1230 = vunpack.c.l.b16 %v345
    %v1231 = vunpack.c.h.b16 %v345
    %v1232 = vunpack.c.l.b16 %v346
    %v1233 = vunpack.c.h.b16 %v346
    %v1234 = vunpack.c.l.b16 %v347
    %v1235 = vunpack.c.h.b16 %v347
    %v1236 = vunpack.c.l.b16 %v348
    %v1237 = vunpack.c.h.b16 %v348
    %v1238 = vunpack.c.l.b16 %v349
    %v1239 = vunpack.c.h.b16 %v349
    %v1240 = vunpack.c.l.b16 %v350
    %v1241 = vunpack.c.h.b16 %v350
    %v1242 = vunpack.c.l.b16 %v351
    %v1243 = vunpack.c.h.b16 %v351
    %v1244 = vunpack.c.l.b16 %v352
    %v1245 = vunpack.c.h.b16 %v352
    %v1246 = vunpack.c.l.b16 %v353
    %v1247 = vunpack.c.h.b16 %v353
    %v1248 = vunpack.c.l.b16 %v354
    %v1249 = vunpack.c.h.b16 %v354
    %v1250 = vunpack.c.l.b16 %v355
    %v1251 = vunpack.c.h.b16 %v355
    %v1252 = vunpack.c.l.b16 %v356
    %v1253 = vunpack.c.h.b16 %v356
    %v1254 = vunpack.c.l.b16 %v357
    %v1255 = vunpack.c.h.b16 %v357
    %v1256 = vunpack.c.l.b16 %v358
    %v1257 = vunpack.c.h.b16 %v358
    %v1258 = vunpack.c.l.b16 %v359
    %v1259 = vunpack.c.h.b16 %v359
    %v1260 = vunpack.c.l.b16 %v360
    %v1261 = vunpack.c.h.b16 %v360
    %v1262 = vunpack.c.l.b16 %v361
    %v1263 = vunpack.c.h.b16 %v361
    %v1264 = vunpack.c.l.b16 %v362
    %v1265 = vunpack.c.h.b16 %v362
    %v1266 = vunpack.c.l.b16 %v363
    %v1267 = vunpack.c.h.b16 %v363
    %v1268 = vunpack.c.l.b16 %v364
    %v1269 = vunpack.c.h.b16 %v364
    %v1270 = vunpack.c.l.b16 %v365
    %v1271 = vunpack.c.h.b16 %v365
    %v1272 = vunpack.c.l.b16 %v366
    %v1273 = vunpack.c.h.b16 %v366
    %v1274 = vunpack.c.l.b16 %v367
    %v1275 = vunpack.c.h.b16 %v367
    %v1276 = vunpack.c.l.b16 %v368
    %v1277 = vunpack.c.h.b16 %v368
    %v1278 = vunpack.c.l.b16 %v369
    %v1279 = vunpack.c.h.b16 %v369
    %v1280 = vunpack.c.l.b16 %v370
    %v1281 = vunpack.c.h.b16 %v370
    %v1282 = vunpack.c.l.b16 %v371
    %v1283 = vunpack.c.h.b16 %v371
    %v1284 = vunpack.c.l.b16 %v372
    %v1285 = vunpack.c.h.b16 %v372
    %v1286 = vunpack.c.l.b16 %v373
    %v1287 = vunpack.c.h.b16 %v373
    %v1288 = vunpack.c.l.b16 %v374
    %v1289 = vunpack.c.h.b16 %v374
    %v1290 = vunpack.c.l.b16 %v375
    %v1291 = vunpack.c.h.b16 %v375
    %v1292 = vunpack.c.l.b16 %v376
    %v1293 = vunpack.c.h.b16 %v376
    %v1294 = vunpack.c.l.b16 %v377
    %v1295 = vunpack.c.h.b16 %v377
    %v1296 = vunpack.c.l.b16 %v378
    %v1297 = vunpack.c.h.b16 %v378
    %v1298 = vunpack.c.l.b16 %v379
    %v1299 = vunpack.c.h.b16 %v379
    %v1300 = vunpack.c.l.b16 %v380
    %v1301 = vunpack.c.h.b16 %v380
    %v1302 = vunpack.c.l.b16 %v381
    %v1303 = vunpack.c.h.b16 %v381
    %v1304 = vunpack.c.l.b16 %v382
    %v1305 = vunpack.c.h.b16 %v382
    %v1306 = vunpack.c.l.b16 %v383
    %v1307 = vunpack.c.h.b16 %v383
    %v1308 = vunpack.c.l.b16 %v384
    %v1309 = vunpack.c.h.b16 %v384
    %v1310 = vunpack.c.l.b16 %v385
    %v1311 = vunpack.c.h.b16 %v385
    %v1312 = vunpack.c.l.b16 %v386
    %v1313 = vunpack.c.h.b16 %v386
    %v1314 = vunpack.c.l.b16 %v387
    %v1315 = vunpack.c.h.b16 %v387
    %v1316 = vunpack.c.l.b16 %v388
    %v1317 = vunpack.c.h.b16 %v388
    %v1318 = vunpack.c.l.b16 %v389
    %v1319 = vunpack.c.h.b16 %v389
    %v1320 = vunpack.c.l.b16 %v390
    %v1321 = vunpack.c.h.b16 %v390
    %v1322 = vunpack.c.l.b16 %v391
    %v1323 = vunpack.c.h.b16 %v391
    %v1324 = vunpack.c.l.b16 %v392
    %v1325 = vunpack.c.h.b16 %v392
    %v1326 = vunpack.c.l.b16 %v393
    %v1327 = vunpack.c.h.b16 %v393
    %v1328 = vunpack.c.l.b16 %v394
    %v1329 = vunpack.c.h.b16 %v394
    %v1330 = vunpack.c.l.b16 %v395
    %v1331 = vunpack.c.h.b16 %v395
    %v1332 = vunpack.c.l.b16 %v396
    %v1333 = vunpack.c.h.b16 %v396
    %v1334 = vunpack.c.l.b16 %v397
    %v1335 = vunpack.c.h.b16 %v397
    %v1336 = vunpack.c.l.b16 %v398
    %v1337 = vunpack.c.h.b16 %v398
    %v1338 = vunpack.c.l.b16 %v399
    %v1339 = vunpack.c.h.b16 %v399
    %v1340 = vunpack.c.l.b16 %v400
    %v1341 = vunpack.c.h.b16 %v400
    %v1342 = vunpack.c.l.b16 %v401
    %v1343 = vunpack.c.h.b16 %v401
    %v1344 = vunpack.c.l.b16 %v402
    %v1345 = vunpack.c.h.b16 %v402
    %v1346 = vunpack.c.l.b16 %v403
    %v1347 = vunpack.c.h.b16 %v403
    %v1348 = vunpack.c.l.b16 %v404
    %v1349 = vunpack.c.h.b16 %v404
    %v1350 = vunpack.c.l.b16 %v405
    %v1351 = vunpack.c.h.b16 %v405
    %v1352 = vunpack.c.l.b16 %v406
    %v1353 = vunpack.c.h.b16 %v406
    %v1354 = vunpack.c.l.b16 %v407
    %v1355 = vunpack.c.h.b16 %v407
    %v1356 = vunpack.c.l.b16 %v408
    %v1357 = vunpack.c.h.b16 %v408
    %v1358 = vunpack.c.l.b16 %v409
    %v1359 = vunpack.c.h.b16 %v409
    %v1360 = vunpack.c.l.b16 %v410
    %v1361 = vunpack.c.h.b16 %v410
    %v1362 = vunpack.c.l.b16 %v411
    %v1363 = vunpack.c.h.b16 %v411
    %v1364 = vunpack.c.l.b16 %v412
    %v1365 = vunpack.c.h.b16 %v412
    %v1366 = vunpack.c.l.b16 %v413
    %v1367 = vunpack.c.h.b16 %v413
    %v1368 = vunpack.c.l.b16 %v414
    %v1369 = vunpack.c.h.b16 %v414
    %v1370 = vunpack.c.l.b16 %v415
    %v1371 = vunpack.c.h.b16 %v415
    %v1372 = vunpack.c.l.b16 %v416
    %v1373 = vunpack.c.h.b16 %v416
    %v1374 = vunpack.c.l.b16 %v417
    %v1375 = vunpack.c.h.b16 %v417
    %v1376 = vunpack.c.l.b16 %v418
    %v1377 = vunpack.c.h.b16 %v418
    %v1378 = vunpack.c.l.b16 %v419
    %v1379 = vunpack.c.h.b16 %v419
    %v1380 = vunpack.c.l.b16 %v420
    %v1381 = vunpack.c.h.b16 %v420
    %v1382 = vunpack.c.l.b16 %v421
    %v1383 = vunpack.c.h.b16 %v421
    %v1384 = vunpack.c.l.b16 %v422
    %v1385 = vunpack.c.h.b16 %v422
    %v1386 = vunpack.c.l.b16 %v423
    %v1387 = vunpack.c.h.b16 %v423
    %v1388 = vunpack.c.l.b16 %v424
    %v1389 = vunpack.c.h.b16 %v424
    %v1390 = vunpack.c.l.b16 %v425
    %v1391 = vunpack.c.h.b16 %v425
    %v1392 = vunpack.c.l.b16 %v426
    %v1393 = vunpack.c.h.b16 %v426
    %v1394 = vunpack.c.l.b16 %v427
    %v1395 = vunpack.c.h.b16 %v427
    %v1396 = vunpack.c.l.b16 %v428
    %v1397 = vunpack.c.h.b16 %v428
    %v1398 = vunpack.c.l.b16 %v429
    %v1399 = vunpack.c.h.b16 %v429
    %v1400 = vunpack.c.l.b16 %v430
    %v1401 = vunpack.c.h.b16 %v430
    %v1402 = vunpack.c.l.b16 %v431
    %v1403 = vunpack.c.h.b16 %v431
    %v1404 = vunpack.c.l.b16 %v432
    %v1405 = vunpack.c.h.b16 %v432
    %v1406 = vunpack.c.l.b16 %v433
    %v1407 = vunpack.c.h.b16 %v433
    %v1408 = vunpack.c.l.b16 %v434
    %v1409 = vunpack.c.h.b16 %v434
    %v1410 = vunpack.c.l.b16 %v435
    %v1411 = vunpack.c.h.b16 %v435
    %v1412 = vunpack.c.l.b16 %v436
    %v1413 = vunpack.c.h.b16 %v436
    %v1414 = vunpack.c.l.b16 %v437
    %v1415 = vunpack.c.h.b16 %v437
    %v1416 = vunpack.c.l.b16 %v438
    %v1417 = vunpack.c.h.b16 %v438
    %v1418 = vunpack.c.l.b16 %v439
    %v1419 = vunpack.c.h.b16 %v439
    %v1420 = vunpack.c.l.b16 %v440
    %v1421 = vunpack.c.h.b16 %v440
    %v1422 = vunpack.c.l.b16 %v441
    %v1423 = vunpack.c.h.b16 %v441
    %v1424 = vunpack.c.l.b16 %v442
    %v1425 = vunpack.c.h.b16 %v442
    %v1426 = vunpack.c.l.b16 %v443
    %v1427 = vunpack.c.h.b16 %v443
    %v1428 = vunpack.c.l.b16 %v444
    %v1429 = vunpack.c.h.b16 %v444
    %v1430 = vunpack.c.l.b16 %v445
    %v1431 = vunpack.c.h.b16 %v445
    %v1432 = vunpack.c.l.b16 %v446
    %v1433 = vunpack.c.h.b16 %v446
    %v1434 = vunpack.c.l.b16 %v447
    %v1435 = vunpack.c.h.b16 %v447
    %v1436 = vunpack.c.l.b16 %v448
    %v1437 = vunpack.c.h.b16 %v448
    %v1438 = vunpack.c.l.b16 %v449
    %v1439 = vunpack.c.h.b16 %v449
    %v1440 = vunpack.c.l.b16 %v450
    %v1441 = vunpack.c.h.b16 %v450
    %v1442 = vunpack.c.l.b16 %v451
    %v1443 = vunpack.c.h.b16 %v451
    %v1444 = vunpack.c.l.b16 %v452
    %v1445 = vunpack.c.h.b16 %v452
    %v1446 = vunpack.c.l.b16 %v453
    %v1447 = vunpack.c.h.b16 %v453
    %v1448 = vunpack.c.l.b16 %v454
    %v1449 = vunpack.c.h.b16 %v454
    %v1450 = vunpack.c.l.b16 %v455
    %v1451 = vunpack.c.h.b16 %v455
    %v1452 = vunpack.c.l.b16 %v456
    %v1453 = vunpack.c.h.b16 %v456
    %v1454 = vunpack.c.l.b16 %v457
    %v1455 = vunpack.c.h.b16 %v457
    %v1456 = vunpack.c.l.b16 %v458
    %v1457 = vunpack.c.h.b16 %v458
    %v1458 = vunpack.c.l.b16 %v459
    %v1459 = vunpack.c.h.b16 %v459
    %v1460 = vunpack.c.l.b16 %v460
    %v1461 = vunpack.c.h.b16 %v460
    %v1462 = vunpack.c.l.b16 %v461
    %v1463 = vunpack.c.h.b16 %v461
    %v1464 = vunpack.c.l.b16 %v462
    %v1465 = vunpack.c.h.b16 %v462
    %v1466 = vunpack.c.l.b16 %v463
    %v1467 = vunpack.c.h.b16 %v463
    %v1468 = vunpack.c.l.b16 %v464
    %v1469 = vunpack.c.h.b16 %v464
    %v1470 = vunpack.c.l.b16 %v465
    %v1471 = vunpack.c.h.b16 %v465
    %v1472 = vunpack.c.l.b16 %v466
    %v1473 = vunpack.c.h.b16 %v466
    %v1474 = vunpack.c.l.b16 %v467
    %v1475 = vunpack.c.h.b16 %v467
    %v1476 = vunpack.c.l.b16 %v468
    %v1477 = vunpack.c.h.b16 %v468
    %v1478 = vunpack.c.l.b16 %v469
    %v1479 = vunpack.c.h.b16 %v469
    %v1480 = vunpack.c.l.b16 %v470
    %v1481 = vunpack.c.h.b16 %v470
    %v1482 = vunpack.c.l.b16 %v471
    %v1483 = vunpack.c.h.b16 %v471
    %v1484 = vunpack.c.l.b16 %v472
    %v1485 = vunpack.c.h.b16 %v472
    %v1486 = vunpack.c.l.b16 %v473
    %v1487 = vunpack.c.h.b16 %v473
    %v1488 = vunpack.c.l.b16 %v474
    %v1489 = vunpack.c.h.b16 %v474
    %v1490 = vunpack.c.l.b16 %v475
    %v1491 = vunpack.c.h.b16 %v475
    %v1492 = vunpack.c.l.b16 %v476
    %v1493 = vunpack.c.h.b16 %v476
    %v1494 = vunpack.c.l.b16 %v477
    %v1495 = vunpack.c.h.b16 %v477
    %v1496 = vunpack.c.l.b16 %v478
    %v1497 = vunpack.c.h.b16 %v478
    %v1498 = vunpack.c.l.b16 %v479
    %v1499 = vunpack.c.h.b16 %v479
    %v1500 = vunpack.c.l.b16 %v480
    %v1501 = vunpack.c.h.b16 %v480
    %v1502 = vunpack.c.l.b16 %v481
    %v1503 = vunpack.c.h.b16 %v481
    %v1504 = vunpack.c.l.b16 %v482
    %v1505 = vunpack.c.h.b16 %v482
    %v1506 = vunpack.c.l.b16 %v483
    %v1507 = vunpack.c.h.b16 %v483
    %v1508 = vunpack.c.l.b16 %v484
    %v1509 = vunpack.c.h.b16 %v484
    %v1510 = vunpack.c.l.b16 %v485
    %v1511 = vunpack.c.h.b16 %v485
    %v1512 = vunpack.c.l.b16 %v486
    %v1513 = vunpack.c.h.b16 %v486
    %v1514 = vunpack.c.l.b16 %v487
    %v1515 = vunpack.c.h.b16 %v487
    %v1516 = vunpack.c.l.b16 %v488
    %v1517 = vunpack.c.h.b16 %v488
    %v1518 = vunpack.c.l.b16 %v489
    %v1519 = vunpack.c.h.b16 %v489
    %v1520 = vunpack.c.l.b16 %v490
    %v1521 = vunpack.c.h.b16 %v490
    %v1522 = vunpack.c.l.b16 %v491
    %v1523 = vunpack.c.h.b16 %v491
    %v1524 = vunpack.c.l.b16 %v492
    %v1525 = vunpack.c.h.b16 %v492
    %v1526 = vunpack.c.l.b16 %v493
    %v1527 = vunpack.c.h.b16 %v493
    %v1528 = vunpack.c.l.b16 %v494
    %v1529 = vunpack.c.h.b16 %v494
    %v1530 = vunpack.c.l.b16 %v495
    %v1531 = vunpack.c.h.b16 %v495
    %v1532 = vunpack.c.l.b16 %v496
    %v1533 = vunpack.c.h.b16 %v496
    %v1534 = vunpack.c.l.b16 %v497
    %v1535 = vunpack.c.h.b16 %v497
    %v1536 = vunpack.c.l.b16 %v498
    %v1537 = vunpack.c.h.b16 %v498
    %v1538 = vunpack.c.l.b16 %v499
    %v1539 = vunpack.c.h.b16 %v499
    %v1540 = vunpack.c.l.b16 %v500
    %v1541 = vunpack.c.h.b16 %v500
    %v1542 = vunpack.c.l.b16 %v501
    %v1543 = vunpack.c.h.b16 %v501
    %v1544 = vunpack.c.l.b16 %v502
    %v1545 = vunpack.c.h.b16 %v502
    %v1546 = vunpack.c.l.b16 %v503
    %v1547 = vunpack.c.h.b16 %v503
    %v1548 = vunpack.c.l.b16 %v504
    %v1549 = vunpack.c.h.b16 %v504
    %v1550 = vunpack.c.l.b16 %v505
    %v1551 = vunpack.c.h.b16 %v505
    %v1552 = vunpack.c.l.b16 %v506
    %v1553 = vunpack.c.h.b16 %v506
    %v1554 = vunpack.c.l.b16 %v507
    %v1555 = vunpack.c.h.b16 %v507
    %v1556 = vunpack.c.l.b16 %v508
    %v1557 = vunpack.c.h.b16 %v508
    %v1558 = vunpack.c.l.b16 %v509
    %v1559 = vunpack.c.h.b16 %v509
    %v1560 = vunpack.c.l.b16 %v510
    %v1561 = vunpack.c.h.b16 %v510
    %v1562 = vunpack.c.l.b16 %v511
    %v1563 = vunpack.c.h.b16 %v511
    %v1564 = vunpack.c.l.b16 %v512
    %v1565 = vunpack.c.h.b16 %v512
    %v1566 = vunpack.c.l.b16 %v513
    %v1567 = vunpack.c.h.b16 %v513
    %v1568 = vunpack.c.l.b16 %v514
    %v1569 = vunpack.c.h.b16 %v514
    %v1570 = vunpack.c.l.b16 %v515
    %v1571 = vunpack.c.h.b16 %v515
    %v1572 = vunpack.c.l.b16 %v516
    %v1573 = vunpack.c.h.b16 %v516
    %v1574 = vunpack.c.l.b16 %v517
    %v1575 = vunpack.c.h.b16 %v517
    %v1576 = vunpack.c.l.b16 %v518
    %v1577 = vunpack.c.h.b16 %v518
    %v1578 = vunpack.c.l.b16 %v519
    %v1579 = vunpack.c.h.b16 %v519
    %v1580 = vunpack.c.l.b16 %v520
    %v1581 = vunpack.c.h.b16 %v520
    %v1582 = vunpack.c.l.b16 %v521
    %v1583 = vunpack.c.h.b16 %v521
    %v1584 = vunpack.c.l.b16 %v522
    %v1585 = vunpack.c.h.b16 %v522
    %v1586 = vunpack.c.l.b16 %v523
    %v1587 = vunpack.c.h.b16 %v523
    %v1588 = vunpack.c.l.b16 %v524
    %v1589 = vunpack.c.h.b16 %v524
    %v1590 = vunpack.c.l.b16 %v525
    %v1591 = vunpack.c.h.b16 %v525
    %v1592 = vunpack.c.l.b16 %v526
    %v1593 = vunpack.c.h.b16 %v526
    %v1594 = vunpack.c.l.b16 %v527
    %v1595 = vunpack.c.h.b16 %v527
    %v1596 = vunpack.c.l.b16 %v528
    %v1597 = vunpack.c.h.b16 %v528
    %v1598 = vunpack.c.l.b16 %v529
    %v1599 = vunpack.c.h.b16 %v529
    %v1600 = vunpack.c.l.b16 %v530
    %v1601 = vunpack.c.h.b16 %v530
    %v1602 = vunpack.c.l.b16 %v531
    %v1603 = vunpack.c.h.b16 %v531
    %v1604 = vunpack.c.l.b16 %v532
    %v1605 = vunpack.c.h.b16 %v532
    %v1606 = vunpack.c.l.b16 %v533
    %v1607 = vunpack.c.h.b16 %v533
    %v1608 = vunpack.c.l.b16 %v534
    %v1609 = vunpack.c.h.b16 %v534
    %v1610 = vunpack.c.l.b16 %v535
    %v1611 = vunpack.c.h.b16 %v535
    %v1612 = vunpack.c.l.b16 %v536
    %v1613 = vunpack.c.h.b16 %v536
    %v1614 = vunpack.c.l.b16 %v537
    %v1615 = vunpack.c.h.b16 %v537
    %v1616 = vunpack.c.l.b16 %v538
    %v1617 = vunpack.c.h.b16 %v538
    %v1618 = vunpack.c.l.b16 %v539
    %v1619 = vunpack.c.h.b16 %v539
    %v1620 = vunpack.c.l.b16 %v540
    %v1621 = vunpack.c.h.b16 %v540
    %v1622 = vunpack.c.l.b16 %v541
    %v1623 = vunpack.c.h.b16 %v541
    %v1624 = vunpack.c.l.b16 %v542
    %v1625 = vunpack.c.h.b16 %v542
    %v1626 = vunpack.c.l.b16 %v543
    %v1627 = vunpack.c.h.b16 %v543
    %v1628 = vunpack.c.l.b16 %v544
    %v1629 = vunpack.c.h.b16 %v544
    %v1630 = vunpack.c.l.b16 %v545
    %v1631 = vunpack.c.h.b16 %v545
    %v1632 = vunpack.c.l.b16 %v546
    %v1633 = vunpack.c.h.b16 %v546
    %v1634 = vunpack.c.l.b16 %v547
    %v1635 = vunpack.c.h.b16 %v547
    %v1636 = vunpack.c.l.b16 %v548
    %v1637 = vunpack.c.h.b16 %v548
    %v1638 = vunpack.c.l.b16 %v549
    %v1639 = vunpack.c.h.b16 %v549
    %v1640 = vunpack.c.l.b16 %v550
    %v1641 = vunpack.c.h.b16 %v550
    %v1642 = vunpack.c.l.b16 %v551
    %v1643 = vunpack.c.h.b16 %v551
    %v1644 = vunpack.c.l.b16 %v552
    %v1645 = vunpack.c.h.b16 %v552
    %v1646 = vunpack.c.l.b16 %v553
    %v1647 = vunpack.c.h.b16 %v553
    %v1648 = vunpack.c.l.b16 %v554
    %v1649 = vunpack.c.h.b16 %v554
    %v1650 = vunpack.c.l.b16 %v555
    %v1651 = vunpack.c.h.b16 %v555
    %v1652 = vunpack.c.l.b16 %v556
    %v1653 = vunpack.c.h.b16 %v556
    %v1654 = vunpack.c.l.b16 %v557
    %v1655 = vunpack.c.h.b16 %v557
    %v1656 = vunpack.c.l.b16 %v558
    %v1657 = vunpack.c.h.b16 %v558
    %v1658 = vunpack.c.l.b16 %v559
    %v1659 = vunpack.c.h.b16 %v559
    %v1660 = vunpack.c.l.b16 %v560
    %v1661 = vunpack.c.h.b16 %v560
    %v1662 = vunpack.c.l.b16 %v561
    %v1663 = vunpack.c.h.b16 %v561
    %v1664 = vunpack.c.l.b16 %v562
    %v1665 = vunpack.c.h.b16 %v562
    %v1666 = vunpack.c.l.b16 %v563
    %v1667 = vunpack.c.h.b16 %v563
    %v1668 = vunpack.c.l.b16 %v564
    %v1669 = vunpack.c.h.b16 %v564
    %v1670 = vunpack.c.l.b16 %v565
    %v1671 = vunpack.c.h.b16 %v565
    %v1672 = vunpack.c.l.b16 %v566
    %v1673 = vunpack.c.h.b16 %v566
    %v1674 = vunpack.c.l.b16 %v567
    %v1675 = vunpack.c.h.b16 %v567
    %v1676 = vunpack.c.l.b16 %v568
    %v1677 = vunpack.c.h.b16 %v568
    %v1678 = vunpack.c.l.b16 %v569
    %v1679 = vunpack.c.h.b16 %v569
    %v1680 = vunpack.c.l.b16 %v570
    %v1681 = vunpack.c.h.b16 %v570
    %v1682 = vunpack.c.l.b16 %v571
    %v1683 = vunpack.c.h.b16 %v571
    %v1684 = vunpack.c.l.b16 %v572
    %v1685 = vunpack.c.h.b16 %v572
    %v1686 = vunpack.c.l.b16 %v573
    %v1687 = vunpack.c.h.b16 %v573
    %v1688 = vunpack.c.l.b16 %v574
    %v1689 = vunpack.c.h.b16 %v574
    %v1690 = vunpack.c.l.b16 %v575
    %v1691 = vunpack.c.h.b16 %v575
    %v1692 = vunpack.c.l.b16 %v576
    %v1693 = vunpack.c.h.b16 %v576
    %v1694 = vunpack.c.l.b16 %v577
    %v1695 = vunpack.c.h.b16 %v577
    %v1696 = vunpack.c.l.b16 %v578
    %v1697 = vunpack.c.h.b16 %v578
    %v1698 = vunpack.c.l.b16 %v579
    %v1699 = vunpack.c.h.b16 %v579
    %v1700 = vunpack.c.l.b16 %v580
    %v1701 = vunpack.c.h.b16 %v580
    %v1702 = vunpack.c.l.b16 %v581
    %v1703 = vunpack.c.h.b16 %v581
    %v1704 = vunpack.c.l.b16 %v582
    %v1705 = vunpack.c.h.b16 %v582
    %v1706 = vunpack.c.l.b16 %v583
    %v1707 = vunpack.c.h.b16 %v583
    %v1708 = vunpack.c.l.b16 %v584
    %v1709 = vunpack.c.h.b16 %v584
    %v1710 = vunpack.c.l.b16 %v585
    %v1711 = vunpack.c.h.b16 %v585
    %v1712 = vunpack.c.l.b16 %v586
    %v1713 = vunpack.c.h.b16 %v586
    %v1714 = vunpack.c.l.b16 %v587
    %v1715 = vunpack.c.h.b16 %v587
    %v1716 = vunpack.c.l.b16 %v588
    %v1717 = vunpack.c.h.b16 %v588
    %v1718 = vunpack.c.l.b16 %v589
    %v1719 = vunpack.c.h.b16 %v589
    %v1720 = vunpack.c.l.b16 %v590
    %v1721 = vunpack.c.h.b16 %v590
    %v1722 = vunpack.c.l.b16 %v591
    %v1723 = vunpack.c.h.b16 %v591
    %v1724 = vunpack.c.l.b16 %v592
    %v1725 = vunpack.c.h.b16 %v592
    %v1726 = vunpack.c.l.b16 %v593
    %v1727 = vunpack.c.h.b16 %v593
    %v1728 = vunpack.c.l.b16 %v594
    %v1729 = vunpack.c.h.b16 %v594
    %v1730 = vunpack.c.l.b16 %v595
    %v1731 = vunpack.c.h.b16 %v595
    %v1732 = vunpack.c.l.b16 %v596
    %v1733 = vunpack.c.h.b16 %v596
    %v1734 = vunpack.c.l.b16 %v597
    %v1735 = vunpack.c.h.b16 %v597
    %v1736 = vunpack.c.l.b16 %v598
    %v1737 = vunpack.c.h.b16 %v598
    %v1738 = vunpack.c.l.b16 %v599
    %v1739 = vunpack.c.h.b16 %v599
    %v1740 = vunpack.c.l.b16 %v600
    %v1741 = vunpack.c.h.b16 %v600
    %v1742 = vunpack.c.l.b16 %v601
    %v1743 = vunpack.c.h.b16 %v601
    %v1744 = vunpack.c.l.b16 %v602
    %v1745 = vunpack.c.h.b16 %v602
    %v1746 = vunpack.c.l.b16 %v603
    %v1747 = vunpack.c.h.b16 %v603
    %v1748 = vunpack.c.l.b16 %v604
    %v1749 = vunpack.c.h.b16 %v604
    %v1750 = vunpack.c.l.b16 %v605
    %v1751 = vunpack.c.h.b16 %v605
    %v1752 = vunpack.c.l.b16 %v606
    %v1753 = vunpack.c.h.b16 %v606
    %v1754 = vunpack.c.l.b16 %v607
    %v1755 = vunpack.c.h.b16 %v607
    %v1756 = vunpack.c.l.b16 %v608
    %v1757 = vunpack.c.h.b16 %v608
    %v1758 = vunpack.c.l.b16 %v609
    %v1759 = vunpack.c.h.b16 %v609
    %v1760 = vunpack.c.l.b16 %v610
    %v1761 = vunpack.c.h.b16 %v610
    %v1762 = vunpack.c.l.b16 %v611
    %v1763 = vunpack.c.h.b16 %v611
    %v1764 = vunpack.c.l.b16 %v612
    %v1765 = vunpack.c.h.b16 %v612
    %v1766 = vunpack.c.l.b16 %v613
    %v1767 = vunpack.c.h.b16 %v613
    %v1768 = vunpack.c.l.b16 %v614
    %v1769 = vunpack.c.h.b16 %v614
    %v1770 = vunpack.c.l.b16 %v615
    %v1771 = vunpack.c.h.b16 %v615
    %v1772 = vunpack.c.l.b16 %v616
    %v1773 = vunpack.c.h.b16 %v616
    %v1774 = vunpack.c.l.b16 %v617
    %v1775 = vunpack.c.h.b16 %v617
    %v1776 = vunpack.c.l.b16 %v618
    %v1777 = vunpack.c.h.b16 %v618
    %v1778 = vunpack.c.l.b16 %v619
    %v1779 = vunpack.c.h.b16 %v619
    %v1780 = vunpack.c.l.b16 %v620
    %v1781 = vunpack.c.h.b16 %v620
    %v1782 = vunpack.c.l.b16 %v621
    %v1783 = vunpack.c.h.b16 %v621
    %v1784 = vunpack.c.l.b16 %v622
    %v1785 = vunpack.c.h.b16 %v622
    %v1786 = vunpack.c.l.b16 %v623
    %v1787 = vunpack.c.h.b16 %v623
    %v1788 = vunpack.c.l.b16 %v624
    %v1789 = vunpack.c.h.b16 %v624
    %v1790 = vunpack.c.l.b16 %v625
    %v1791 = vunpack.c.h.b16 %v625
    %v1792 = vunpack.c.l.b16 %v626
    %v1793 = vunpack.c.h.b16 %v626
    %v1794 = vunpack.c.l.b16 %v627
    %v1795 = vunpack.c.h.b16 %v627
    %v1796 = vunpack.c.l.b16 %v628
    %v1797 = vunpack.c.h.b16 %v628
    %v1798 = vunpack.c.l.b16 %v629
    %v1799 = vunpack.c.h.b16 %v629
    %v1800 = vunpack.c.l.b16 %v630
    %v1801 = vunpack.c.h.b16 %v630
    %v1802 = vunpack.c.l.b16 %v631
    %v1803 = vunpack.c.h.b16 %v631
    %v1804 = vunpack.c.l.b16 %v632
    %v1805 = vunpack.c.h.b16 %v632
    %v1806 = vunpack.c.l.b16 %v633
    %v1807 = vunpack.c.h.b16 %v633
    %v1808 = vunpack.c.l.b16 %v634
    %v1809 = vunpack.c.h.b16 %v634
    %v1810 = vunpack.c.l.b16 %v635
    %v1811 = vunpack.c.h.b16 %v635
    %v1812 = vunpack.c.l.b16 %v636
    %v1813 = vunpack.c.h.b16 %v636
    %v1814 = vunpack.c.l.b16 %v637
    %v1815 = vunpack.c.h.b16 %v637
    %v1816 = vunpack.c.l.b16 %v638
    %v1817 = vunpack.c.h.b16 %v638
    %v1818 = vunpack.c.l.b16 %v639
    %v1819 = vunpack.c.h.b16 %v639
    %v1820 = vunpack.c.l.b16 %v640
    %v1821 = vunpack.c.h.b16 %v640
    %v1822 = vunpack.c.l.b16 %v641
    %v1823 = vunpack.c.h.b16 %v641
    %v1824 = vunpack.c.l.b16 %v642
    %v1825 = vunpack.c.h.b16 %v642
    %v1826 = vunpack.c.l.b16 %v643
    %v1827 = vunpack.c.h.b16 %v643
    %v1828 = vunpack.c.l.b16 %v644
    %v1829 = vunpack.c.h.b16 %v644
    %v1830 = vunpack.c.l.b16 %v645
    %v1831 = vunpack.c.h.b16 %v645
    %v1832 = vunpack.c.l.b16 %v646
    %v1833 = vunpack.c.h.b16 %v646
    %v1834 = vunpack.c.l.b16 %v647
    %v1835 = vunpack.c.h.b16 %v647
    %v1836 = vunpack.c.l.b16 %v648
    %v1837 = vunpack.c.h.b16 %v648
    %v1838 = vunpack.c.l.b16 %v649
    %v1839 = vunpack.c.h.b16 %v649
    %v1840 = vunpack.c.l.b16 %v650
    %v1841 = vunpack.c.h.b16 %v650
    %v1842 = vunpack.c.l.b16 %v651
    %v1843 = vunpack.c.h.b16 %v651
    %v1844 = vunpack.c.l.b16 %v652
    %v1845 = vunpack.c.h.b16 %v652
    %v1846 = vunpack.c.l.b16 %v653
    %v1847 = vunpack.c.h.b16 %v653
    %v1848 = vunpack.c.l.b16 %v654
    %v1849 = vunpack.c.h.b16 %v654
    %v1850 = vunpack.c.l.b16 %v655
    %v1851 = vunpack.c.h.b16 %v655
    %v1852 = vunpack.c.l.b16 %v656
    %v1853 = vunpack.c.h.b16 %v656
    %v1854 = vunpack.c.l.b16 %v657
    %v1855 = vunpack.c.h.b16 %v657
    %v1856 = vunpack.c.l.b16 %v658
    %v1857 = vunpack.c.h.b16 %v658
    %v1858 = vunpack.c.l.b16 %v659
    %v1859 = vunpack.c.h.b16 %v659
    %v1860 = vpack.c.b16 %v1084, %v1076
    %v1861 = vpack.c.b16 %v1085, %v1077
    %v1862 = vpack.c.b16 %v1086, %v1078
    %v1863 = vpack.c.b16 %v1087, %v1079
    %v1864 = vpack.c.b16 %v1088, %v1080
    %v1865 = vpack.c.b16 %v1089, %v1081
    %v1866 = vpack.c.b16 %v1090, %v1082
    %v1867 = vpack.c.b16 %v1091, %v1083
    %v1868 = vpack.c.b16 %v1100, %v1092
    %v1869 = vpack.c.b16 %v1101, %v1093
    %v1870 = vpack.c.b16 %v1102, %v1094
    %v1871 = vpack.c.b16 %v1103, %v1095
    %v1872 = vpack.c.b16 %v1104, %v1096
    %v1873 = vpack.c.b16 %v1105, %v1097
    %v1874 = vpack.c.b16 %v1106, %v1098
    %v1875 = vpack.c.b16 %v1107, %v1099
    %v1876 = vpack.c.b16 %v1116, %v1108
    %v1877 = vpack.c.b16 %v1117, %v1109
    %v1878 = vpack.c.b16 %v1118, %v1110
    %v1879 = vpack.c.b16 %v1119, %v1111
    %v1880 = vpack.c.b16 %v1120, %v1112
    %v1881 = vpack.c.b16 %v1121, %v1113
    %v1882 = vpack.c.b16 %v1122, %v1114
    %v1883 = vpack.c.b16 %v1123, %v1115
    %v1884 = vpack.c.b16 %v1132, %v1124
    %v1885 = vpack.c.b16 %v1133, %v1125
    %v1886 = vpack.c.b16 %v1134, %v1126
    %v1887 = vpack.c.b16 %v1135, %v1127
    %v1888 = vpack.c.b16 %v1136, %v1128
    %v1889 = vpack.c.b16 %v1137, %v1129
    %v1890 = vpack.c.b16 %v1138, %v1130
    %v1891 = vpack.c.b16 %v1139, %v1131
    %v1892 = vpack.c.b16 %v1148, %v1140
    %v1893 = vpack.c.b16 %v1149, %v1141
    %v1894 = vpack.c.b16 %v1150, %v1142
    %v1895 = vpack.c.b16 %v1151, %v1143
    %v1896 = vpack.c.b16 %v1152, %v1144
    %v1897 = vpack.c.b16 %v1153, %v1145
    %v1898 = vpack.c.b16 %v1154, %v1146
    %v1899 = vpack.c.b16 %v1155, %v1147
    %v1900 = vpack.c.b16 %v1164, %v1156
    %v1901 = vpack.c.b16 %v1165, %v1157
    %v1902 = vpack.c.b16 %v1166, %v1158
    %v1903 = vpack.c.b16 %v1167, %v1159
    %v1904 = vpack.c.b16 %v1168, %v1160
    %v1905 = vpack.c.b16 %v1169, %v1161
    %v1906 = vpack.c.b16 %v1170, %v1162
    %v1907 = vpack.c.b16 %v1171, %v1163
    %v1908 = vpack.c.b16 %v1180, %v1172
    %v1909 = vpack.c.b16 %v1181, %v1173
    %v1910 = vpack.c.b16 %v1182, %v1174
    %v1911 = vpack.c.b16 %v1183, %v1175
    %v1912 = vpack.c.b16 %v1184, %v1176
    %v1913 = vpack.c.b16 %v1185, %v1177
    %v1914 = vpack.c.b16 %v1186, %v1178
    %v1915 = vpack.c.b16 %v1187, %v1179
    %v1916 = vpack.c.b16 %v1196, %v1188
    %v1917 = vpack.c.b16 %v1197, %v1189
    %v1918 = vpack.c.b16 %v1198, %v1190
    %v1919 = vpack.c.b16 %v1199, %v1191
    %v1920 = vpack.c.b16 %v1200, %v1192
    %v1921 = vpack.c.b16 %v1201, %v1193
    %v1922 = vpack.c.b16 %v1202, %v1194
    %v1923 = vpack.c.b16 %v1203, %v1195
    %v1924 = vpack.c.b16 %v1212, %v1204
    %v1925 = vpack.c.b16 %v1213, %v1205
    %v1926 = vpack.c.b16 %v1214, %v1206
    %v1927 = vpack.c.b16 %v1215, %v1207
    %v1928 = vpack.c.b16 %v1216, %v1208
    %v1929 = vpack.c.b16 %v1217, %v1209
    %v1930 = vpack.c.b16 %v1218, %v1210
    %v1931 = vpack.c.b16 %v1219, %v1211
    %v1932 = vpack.c.b16 %v1228, %v1220
    %v1933 = vpack.c.b16 %v1229, %v1221
    %v1934 = vpack.c.b16 %v1230, %v1222
    %v1935 = vpack.c.b16 %v1231, %v1223
    %v1936 = vpack.c.b16 %v1232, %v1224
    %v1937 = vpack.c.b16 %v1233, %v1225
    %v1938 = vpack.c.b16 %v1234, %v1226
    %v1939 = vpack.c.b16 %v1235, %v1227
    %v1940 = vpack.c.b16 %v1244, %v1236
    %v1941 = vpack.c.b16 %v1245, %v1237
    %v1942 = vpack.c.b16 %v1246, %v1238
    %v1943 = vpack.c.b16 %v1247, %v1239
    %v1944 = vpack.c.b16 %v1248, %v1240
    %v1945 = vpack.c.b16 %v1249, %v1241
    %v1946 = vpack.c.b16 %v1250, %v1242
    %v1947 = vpack.c.b16 %v1251, %v1243
    %v1948 = vpack.c.b16 %v1260, %v1252
    %v1949 = vpack.c.b16 %v1261, %v1253
    %v1950 = vpack.c.b16 %v1262, %v1254
    %v1951 = vpack.c.b16 %v1263, %v1255
    %v1952 = vpack.c.b16 %v1264, %v1256
    %v1953 = vpack.c.b16 %v1265, %v1257
    %v1954 = vpack.c.b16 %v1266, %v1258
    %v1955 = vpack.c.b16 %v1267, %v1259
    %v1956 = vpack.c.b16 %v1276, %v1268
    %v1957 = vpack.c.b16 %v1277, %v1269
    %v1958 = vpack.c.b16 %v1278, %v1270
    %v1959 = vpack.c.b16 %v1279, %v1271
    %v1960 = vpack.c.b16 %v1280, %v1272
    %v1961 = vpack.c.b16 %v1281, %v1273
    %v1962 = vpack.c.b16 %v1282, %v1274
    %v1963 = vpack.c.b16 %v1283, %v1275
    %v1964 = vpack.c.b16 %v1292, %v1284
    %v1965 = vpack.c.b16 %v1293, %v1285
    %v1966 = vpack.c.b16 %v1294, %v1286
    %v1967 = vpack.c.b16 %v1295, %v1287
    %v1968 = vpack.c.b16 %v1296, %v1288
    %v1969 = vpack.c.b16 %v1297, %v1289
    %v1970 = vpack.c.b16 %v1298, %v1290
    %v1971 = vpack.c.b16 %v1299, %v1291
    %v1972 = vpack.c.b16 %v1308, %v1300
    %v1973 = vpack.c.b16 %v1309, %v1301
    %v1974 = vpack.c.b16 %v1310, %v1302
    %v1975 = vpack.c.b16 %v1311, %v1303
    %v1976 = vpack.c.b16 %v1312, %v1304
    %v1977 = vpack.c.b16 %v1313, %v1305
    %v1978 = vpack.c.b16 %v1314, %v1306
    %v1979 = vpack.c.b16 %v1315, %v1307
    %v1980 = vpack.c.b16 %v1324, %v1316
    %v1981 = vpack.c.b16 %v1325, %v1317
    %v1982 = vpack.c.b16 %v1326, %v1318
    %v1983 = vpack.c.b16 %v1327, %v1319
    %v1984 = vpack.c.b16 %v1328, %v1320
    %v1985 = vpack.c.b16 %v1329, %v1321
    %v1986 = vpack.c.b16 %v1330, %v1322
    %v1987 = vpack.c.b16 %v1331, %v1323
    %v1988 = vpack.c.b16 %v1340, %v1332
    %v1989 = vpack.c.b16 %v1341, %v1333
    %v1990 = vpack.c.b16 %v1342, %v1334
    %v1991 = vpack.c.b16 %v1343, %v1335
    %v1992 = vpack.c.b16 %v1344, %v1336
    %v1993 = vpack.c.b16 %v1345, %v1337
    %v1994 = vpack.c.b16 %v1346, %v1338
    %v1995 = vpack.c.b16 %v1347, %v1339
    %v1996 = vpack.c.b16 %v1356, %v1348
    %v1997 = vpack.c.b16 %v1357, %v1349
    %v1998 = vpack.c.b16 %v1358, %v1350
    %v1999 = vpack.c.b16 %v1359, %v1351
    %v2000 = vpack.c.b16 %v1360, %v1352
    %v2001 = vpack.c.b16 %v1361, %v1353
    %v2002 = vpack.c.b16 %v1362, %v1354
    %v2003 = vpack.c.b16 %v1363, %v1355
    %v2004 = vpack.c.b16 %v1372, %v1364
    %v2005 = vpack.c.b16 %v1373, %v1365
    %v2006 = vpack.c.b16 %v1374, %v1366
    %v2007 = vpack.c.b16 %v1375, %v1367
    %v2008 = vpack.c.b16 %v1376, %v1368
    %v2009 = vpack.c.b16 %v1377, %v1369
    %v2010 = vpack.c.b16 %v1378, %v1370
    %v2011 = vpack.c.b16 %v1379, %v1371
    %v2012 = vpack.c.b16 %v1388, %v1380
    %v2013 = vpack.c.b16 %v1389, %v1381
    %v2014 = vpack.c.b16 %v1390, %v1382
    %v2015 = vpack.c.b16 %v1391, %v1383
    %v2016 = vpack.c.b16 %v1392, %v1384
    %v2017 = vpack.c.b16 %v1393, %v1385
    %v2018 = vpack.c.b16 %v1394, %v1386
    %v2019 = vpack.c.b16 %v1395, %v1387
    %v2020 = vpack.c.b16 %v1404, %v1396
    %v2021 = vpack.c.b16 %v1405, %v1397
    %v2022 = vpack.c.b16 %v1406, %v1398
    %v2023 = vpack.c.b16 %v1407, %v1399
    %v2024 = vpack.c.b16 %v1408, %v1400
    %v2025 = vpack.c.b16 %v1409, %v1401
    %v2026 = vpack.c.b16 %v1410, %v1402
    %v2027 = vpack.c.b16 %v1411, %v1403
    %v2028 = vpack.c.b16 %v1420, %v1412
    %v2029 = vpack.c.b16 %v1421, %v1413
    %v2030 = vpack.c.b16 %v1422, %v1414
    %v2031 = vpack.c.b16 %v1423, %v1415
    %v2032 = vpack.c.b16 %v1424, %v1416
    %v2033 = vpack.c.b16 %v1425, %v1417
    %v2034 = vpack.c.b16 %v1426, %v1418
    %v2035 = vpack.c.b16 %v1427, %v1419
    %v2036 = vpack.c.b16 %v1436, %v1428
    %v2037 = vpack.c.b16 %v1437, %v1429
    %v2038 = vpack.c.b16 %v1438, %v1430
    %v2039 = vpack.c.b16 %v1439, %v1431
    %v2040 = vpack.c.b16 %v1440, %v1432
    %v2041 = vpack.c.b16 %v1441, %v1433
    %v2042 = vpack.c.b16 %v1442, %v1434
    %v2043 = vpack.c.b16 %v1443, %v1435
    %v2044 = vpack.c.b16 %v1452, %v1444
    %v2045 = vpack.c.b16 %v1453, %v1445
    %v2046 = vpack.c.b16 %v1454, %v1446
    %v2047 = vpack.c.b16 %v1455, %v1447
    %v2048 = vpack.c.b16 %v1456, %v1448
    %v2049 = vpack.c.b16 %v1457, %v1449
    %v2050 = vpack.c.b16 %v1458, %v1450
    %v2051 = vpack.c.b16 %v1459, %v1451
    %v2052 = vpack.c.b16 %v1468, %v1460
    %v2053 = vpack.c.b16 %v1469, %v1461
    %v2054 = vpack.c.b16 %v1470, %v1462
    %v2055 = vpack.c.b16 %v1471, %v1463
    %v2056 = vpack.c.b16 %v1472, %v1464
    %v2057 = vpack.c.b16 %v1473, %v1465
    %v2058 = vpack.c.b16 %v1474, %v1466
    %v2059 = vpack.c.b16 %v1475, %v1467
    %v2060 = vpack.c.b16 %v1484, %v1476
    %v2061 = vpack.c.b16 %v1485, %v1477
    %v2062 = vpack.c.b16 %v1486, %v1478
    %v2063 = vpack.c.b16 %v1487, %v1479
    %v2064 = vpack.c.b16 %v1488, %v1480
    %v2065 = vpack.c.b16 %v1489, %v1481
    %v2066 = vpack.c.b16 %v1490, %v1482
    %v2067 = vpack.c.b16 %v1491, %v1483
    %v2068 = vpack.c.b16 %v1500, %v1492
    %v2069 = vpack.c.b16 %v1501, %v1493
    %v2070 = vpack.c.b16 %v1502, %v1494
    %v2071 = vpack.c.b16 %v1503, %v1495
    %v2072 = vpack.c.b16 %v1504, %v1496
    %v2073 = vpack.c.b16 %v1505, %v1497
    %v2074 = vpack.c.b16 %v1506, %v1498
    %v2075 = vpack.c.b16 %v1507, %v1499
    %v2076 = vpack.c.b16 %v1516, %v1508
    %v2077 = vpack.c.b16 %v1517, %v1509
    %v2078 = vpack.c.b16 %v1518, %v1510
    %v2079 = vpack.c.b16 %v1519, %v1511
    %v2080 = vpack.c.b16 %v1520, %v1512
    %v2081 = vpack.c.b16 %v1521, %v1513
    %v2082 = vpack.c.b16 %v1522, %v1514
    %v2083 = vpack.c.b16 %v1523, %v1515
    %v2084 = vpack.c.b16 %v1532, %v1524
    %v2085 = vpack.c.b16 %v1533, %v1525
    %v2086 = vpack.c.b16 %v1534, %v1526
    %v2087 = vpack.c.b16 %v1535, %v1527
    %v2088 = vpack.c.b16 %v1536, %v1528
    %v2089 = vpack.c.b16 %v1537, %v1529
    %v2090 = vpack.c.b16 %v1538, %v1530
    %v2091 = vpack.c.b16 %v1539, %v1531
    %v2092 = vpack.c.b16 %v1548, %v1540
    %v2093 = vpack.c.b16 %v1549, %v1541
    %v2094 = vpack.c.b16 %v1550, %v1542
    %v2095 = vpack.c.b16 %v1551, %v1543
    %v2096 = vpack.c.b16 %v1552, %v1544
    %v2097 = vpack.c.b16 %v1553, %v1545
    %v2098 = vpack.c.b16 %v1554, %v1546
    %v2099 = vpack.c.b16 %v1555, %v1547
    %v2100 = vpack.c.b16 %v1564, %v1556
    %v2101 = vpack.c.b16 %v1565, %v1557
    %v2102 = vpack.c.b16 %v1566, %v1558
    %v2103 = vpack.c.b16 %v1567, %v1559
    %v2104 = vpack.c.b16 %v1568, %v1560
    %v2105 = vpack.c.b16 %v1569, %v1561
    %v2106 = vpack.c.b16 %v1570, %v1562
    %v2107 = vpack.c.b16 %v1571, %v1563
    %v2108 = vpack.c.b16 %v1580, %v1572
    %v2109 = vpack.c.b16 %v1581, %v1573
    %v2110 = vpack.c.b16 %v1582, %v1574
    %v2111 = vpack.c.b16 %v1583, %v1575
    %v2112 = vpack.c.b16 %v1584, %v1576
    %v2113 = vpack.c.b16 %v1585, %v1577
    %v2114 = vpack.c.b16 %v1586, %v1578
    %v2115 = vpack.c.b16 %v1587, %v1579
    %v2116 = vpack.c.b16 %v1596, %v1588
    %v2117 = vpack.c.b16 %v1597, %v1589
    %v2118 = vpack.c.b16 %v1598, %v1590
    %v2119 = vpack.c.b16 %v1599, %v1591
    %v2120 = vpack.c.b16 %v1600, %v1592
    %v2121 = vpack.c.b16 %v1601, %v1593
    %v2122 = vpack.c.b16 %v1602, %v1594
    %v2123 = vpack.c.b16 %v1603, %v1595
    %v2124 = vpack.c.b16 %v1612, %v1604
    %v2125 = vpack.c.b16 %v1613, %v1605
    %v2126 = vpack.c.b16 %v1614, %v1606
    %v2127 = vpack.c.b16 %v1615, %v1607
    %v2128 = vpack.c.b16 %v1616, %v1608
    %v2129 = vpack.c.b16 %v1617, %v1609
    %v2130 = vpack.c.b16 %v1618, %v1610
    %v2131 = vpack.c.b16 %v1619, %v1611
    %v2132 = vpack.c.b16 %v1628, %v1620
    %v2133 = vpack.c.b16 %v1629, %v1621
    %v2134 = vpack.c.b16 %v1630, %v1622
    %v2135 = vpack.c.b16 %v1631, %v1623
    %v2136 = vpack.c.b16 %v1632, %v1624
    %v2137 = vpack.c.b16 %v1633, %v1625
    %v2138 = vpack.c.b16 %v1634, %v1626
    %v2139 = vpack.c.b16 %v1635, %v1627
    %v2140 = vpack.c.b16 %v1644, %v1636
    %v2141 = vpack.c.b16 %v1645, %v1637
    %v2142 = vpack.c.b16 %v1646, %v1638
    %v2143 = vpack.c.b16 %v1647, %v1639
    %v2144 = vpack.c.b16 %v1648, %v1640
    %v2145 = vpack.c.b16 %v1649, %v1641
    %v2146 = vpack.c.b16 %v1650, %v1642
    %v2147 = vpack.c.b16 %v1651, %v1643
    %v2148 = vpack.c.b16 %v1660, %v1652
    %v2149 = vpack.c.b16 %v1661, %v1653
    %v2150 = vpack.c.b16 %v1662, %v1654
    %v2151 = vpack.c.b16 %v1663, %v1655
    %v2152 = vpack.c.b16 %v1664, %v1656
    %v2153 = vpack.c.b16 %v1665, %v1657
    %v2154 = vpack.c.b16 %v1666, %v1658
    %v2155 = vpack.c.b16 %v1667, %v1659
    %v2156 = vpack.c.b16 %v1676, %v1668
    %v2157 = vpack.c.b16 %v1677, %v1669
    %v2158 = vpack.c.b16 %v1678, %v1670
    %v2159 = vpack.c.b16 %v1679, %v1671
    %v2160 = vpack.c.b16 %v1680, %v1672
    %v2161 = vpack.c.b16 %v1681, %v1673
    %v2162 = vpack.c.b16 %v1682, %v1674
    %v2163 = vpack.c.b16 %v1683, %v1675
    %v2164 = vpack.c.b16 %v1692, %v1684
    %v2165 = vpack.c.b16 %v1693, %v1685
    %v2166 = vpack.c.b16 %v1694, %v1686
    %v2167 = vpack.c.b16 %v1695, %v1687
    %v2168 = vpack.c.b16 %v1696, %v1688
    %v2169 = vpack.c.b16 %v1697, %v1689
    %v2170 = vpack.c.b16 %v1698, %v1690
    %v2171 = vpack.c.b16 %v1699, %v1691
    %v2172 = vpack.c.b16 %v1708, %v1700
    %v2173 = vpack.c.b16 %v1709, %v1701
    %v2174 = vpack.c.b16 %v1710, %v1702
    %v2175 = vpack.c.b16 %v1711, %v1703
    %v2176 = vpack.c.b16 %v1712, %v1704
    %v2177 = vpack.c.b16 %v1713, %v1705
    %v2178 = vpack.c.b16 %v1714, %v1706
    %v2179 = vpack.c.b16 %v1715, %v1707
    %v2180 = vpack.c.b16 %v1724, %v1716
    %v2181 = vpack.c.b16 %v1725, %v1717
    %v2182 = vpack.c.b16 %v1726, %v1718
    %v2183 = vpack.c.b16 %v1727, %v1719
    %v2184 = vpack.c.b16 %v1728, %v1720
    %v2185 = vpack.c.b16 %v1729, %v1721
    %v2186 = vpack.c.b16 %v1730, %v1722
    %v2187 = vpack.c.b16 %v1731, %v1723
    %v2188 = vpack.c.b16 %v1740, %v1732
    %v2189 = vpack.c.b16 %v1741, %v1733
    %v2190 = vpack.c.b16 %v1742, %v1734
    %v2191 = vpack.c.b16 %v1743, %v1735
    %v2192 = vpack.c.b16 %v1744, %v1736
    %v2193 = vpack.c.b16 %v1745, %v1737
    %v2194 = vpack.c.b16 %v1746, %v1738
    %v2195 = vpack.c.b16 %v1747, %v1739
    %v2196 = vpack.c.b16 %v1756, %v1748
    %v2197 = vpack.c.b16 %v1757, %v1749
    %v2198 = vpack.c.b16 %v1758, %v1750
    %v2199 = vpack.c.b16 %v1759, %v1751
    %v2200 = vpack.c.b16 %v1760, %v1752
    %v2201 = vpack.c.b16 %v1761, %v1753
    %v2202 = vpack.c.b16 %v1762, %v1754
    %v2203 = vpack.c.b16 %v1763, %v1755
    %v2204 = vpack.c.b16 %v1772, %v1764
    %v2205 = vpack.c.b16 %v1773, %v1765
    %v2206 = vpack.c.b16 %v1774, %v1766
    %v2207 = vpack.c.b16 %v1775, %v1767
    %v2208 = vpack.c.b16 %v1776, %v1768
    %v2209 = vpack.c.b16 %v1777, %v1769
    %v2210 = vpack.c.b16 %v1778, %v1770
    %v2211 = vpack.c.b16 %v1779, %v1771
    %v2212 = vpack.c.b16 %v1788, %v1780
    %v2213 = vpack.c.b16 %v1789, %v1781
    %v2214 = vpack.c.b16 %v1790, %v1782
    %v2215 = vpack.c.b16 %v1791, %v1783
    %v2216 = vpack.c.b16 %v1792, %v1784
    %v2217 = vpack.c.b16 %v1793, %v1785
    %v2218 = vpack.c.b16 %v1794, %v1786
    %v2219 = vpack.c.b16 %v1795, %v1787
    %v2220 = vpack.c.b16 %v1804, %v1796
    %v2221 = vpack.c.b16 %v1805, %v1797
    %v2222 = vpack.c.b16 %v1806, %v1798
    %v2223 = vpack.c.b16 %v1807, %v1799
    %v2224 = vpack.c.b16 %v1808, %v1800
    %v2225 = vpack.c.b16 %v1809, %v1801
    %v2226 = vpack.c.b16 %v1810, %v1802
    %v2227 = vpack.c.b16 %v1811, %v1803
    %v2228 = vpack.c.b16 %v1820, %v1812
    %v2229 = vpack.c.b16 %v1821, %v1813
    %v2230 = vpack.c.b16 %v1822, %v1814
    %v2231 = vpack.c.b16 %v1823, %v1815
    %v2232 = vpack.c.b16 %v1824, %v1816
    %v2233 = vpack.c.b16 %v1825, %v1817
    %v2234 = vpack.c.b16 %v1826, %v1818
    %v2235 = vpack.c.b16 %v1827, %v1819
    %v2236 = vpack.c.b16 %v1836, %v1828
    %v2237 = vpack.c.b16 %v1837, %v1829
    %v2238 = vpack.c.b16 %v1838, %v1830
    %v2239 = vpack.c.b16 %v1839, %v1831
    %v2240 = vpack.c.b16 %v1840, %v1832
    %v2241 = vpack.c.b16 %v1841, %v1833
    %v2242 = vpack.c.b16 %v1842, %v1834
    %v2243 = vpack.c.b16 %v1843, %v1835
    %v2244 = vpack.c.b16 %v1852, %v1844
    %v2245 = vpack.c.b16 %v1853, %v1845
    %v2246 = vpack.c.b16 %v1854, %v1846
    %v2247 = vpack.c.b16 %v1855, %v1847
    %v2248 = vpack.c.b16 %v1856, %v1848
    %v2249 = vpack.c.b16 %v1857, %v1849
    %v2250 = vpack.c.b16 %v1858, %v1850
    %v2251 = vpack.c.b16 %v1859, %v1851
    %vm2644 = vcmask 130048
    %v2646 = vsel %vm2644, %v677, 0
    %2648 = vmatprep.subr.bf16.mxu0 %v1861
    %2649 = vmatpush1.bf16.msra.mxu0 %v1860
    %2650 = vmatprep.subr.bf16.mxu0 %v1869
    %2651 = vmatpush1.bf16.msra.mxu0 %v1868
    %2652 = vmatprep.subr.bf16.mxu0 %v1877
    %2653 = vmatpush1.bf16.msra.mxu0 %v1876
    %2654 = vmatprep.subr.bf16.mxu0 %v1885
    %2655 = vmatpush1.bf16.msra.mxu0 %v1884
    %2656 = vmatprep.subr.bf16.mxu0 %v1893
    %2657 = vmatpush1.bf16.msra.mxu0 %v1892
    %2658 = vmatprep.subr.bf16.mxu0 %v1901
    %2659 = vmatpush1.bf16.msra.mxu0 %v1900
    %2660 = vmatprep.subr.bf16.mxu0 %v1909
    %2661 = vmatpush1.bf16.msra.mxu0 %v1908
    %2662 = vmatprep.subr.bf16.mxu0 %v1917
    %2663 = vmatpush1.bf16.msra.mxu0 %v1916
    %2664 = vmatprep.subr.bf16.mxu0 %v1925
    %2665 = vmatpush1.bf16.msra.mxu0 %v1924
    %2666 = vmatprep.subr.bf16.mxu0 %v1933
    %2667 = vmatpush1.bf16.msra.mxu0 %v1932
    %2668 = vmatprep.subr.bf16.mxu0 %v1941
    %2669 = vmatpush1.bf16.msra.mxu0 %v1940
    %2670 = vmatprep.subr.bf16.mxu0 %v1949
    %2671 = vmatpush1.bf16.msra.mxu0 %v1948
    %2672 = vmatprep.subr.bf16.mxu0 %v1957
    %2673 = vmatpush1.bf16.msra.mxu0 %v1956
    %2674 = vmatprep.subr.bf16.mxu0 %v1965
    %2675 = vmatpush1.bf16.msra.mxu0 %v1964
    %2676 = vmatprep.subr.bf16.mxu0 %v1973
    %2677 = vmatpush1.bf16.msra.mxu0 %v1972
    %2678 = vmatprep.subr.bf16.mxu0 %v1981
    %2679 = vmatpush1.bf16.msra.mxu0 %v1980
    %2680 = vmatprep.mubr.bf16.mxu0 %v672
    %2681 = vmatmul.mubr.bf16.gmra.mrb[0].mxu0 %v671
    %v2682 = vpop.f32.mrb[0].mxu0
    %v2683 = vadd.f32 0.0, %v2682
    %v2684 = vpop.f32.mrb[0].mxu0
    %v2685 = vadd.f32 0.0, %v2684
    %v2686 = vpop.f32.mrb[0].mxu0
    %v2687 = vpop.f32.mrb[0].mxu0
    %2688 = vdwg.mxu0
    %2689 = vmatprep.subr.bf16.mxu0 %v1989
    %2690 = vmatpush1.bf16.msra.mxu0 %v1988
    %2691 = vmatprep.subr.bf16.mxu0 %v1997
    %2692 = vmatpush1.bf16.msra.mxu0 %v1996
    %2693 = vmatprep.subr.bf16.mxu0 %v2005
    %2694 = vmatpush1.bf16.msra.mxu0 %v2004
    %2695 = vmatprep.subr.bf16.mxu0 %v2013
    %2696 = vmatpush1.bf16.msra.mxu0 %v2012
    %2697 = vmatprep.subr.bf16.mxu0 %v2021
    %2698 = vmatpush1.bf16.msra.mxu0 %v2020
    %2699 = vmatprep.subr.bf16.mxu0 %v2029
    %2700 = vmatpush1.bf16.msra.mxu0 %v2028
    %2701 = vmatprep.subr.bf16.mxu0 %v2037
    %2702 = vmatpush1.bf16.msra.mxu0 %v2036
    %2703 = vmatprep.subr.bf16.mxu0 %v2045
    %2704 = vmatpush1.bf16.msra.mxu0 %v2044
    %2705 = vmatprep.subr.bf16.mxu0 %v2053
    %2706 = vmatpush1.bf16.msra.mxu0 %v2052
    %2707 = vmatprep.subr.bf16.mxu0 %v2061
    %2708 = vmatpush1.bf16.msra.mxu0 %v2060
    %2709 = vmatprep.subr.bf16.mxu0 %v2069
    %2710 = vmatpush1.bf16.msra.mxu0 %v2068
    %2711 = vmatprep.subr.bf16.mxu0 %v2077
    %2712 = vmatpush1.bf16.msra.mxu0 %v2076
    %2713 = vmatprep.subr.bf16.mxu0 %v2085
    %2714 = vmatpush1.bf16.msra.mxu0 %v2084
    %2715 = vmatprep.subr.bf16.mxu0 %v2093
    %2716 = vmatpush1.bf16.msra.mxu0 %v2092
    %2717 = vmatprep.subr.bf16.mxu0 %v2101
    %2718 = vmatpush1.bf16.msra.mxu0 %v2100
    %2719 = vmatprep.subr.bf16.mxu0 %v2109
    %2720 = vmatpush1.bf16.msra.mxu0 %v2108
    %2721 = vmatprep.mubr.bf16.mxu0 %v674
    %2722 = vmatmul.mubr.bf16.gmra.mrb[0].mxu0 %v673
    %v2723 = vpop.f32.mrb[0].mxu0
    %v2724 = vadd.f32 %v2683, %v2723
    %v2725 = vpop.f32.mrb[0].mxu0
    %v2726 = vadd.f32 %v2685, %v2725
    %v2727 = vpop.f32.mrb[0].mxu0
    %v2728 = vpop.f32.mrb[0].mxu0
    %2729 = vdwg.mxu0
    %2730 = vmatprep.subr.bf16.mxu0 %v2117
    %2731 = vmatpush1.bf16.msra.mxu0 %v2116
    %2732 = vmatprep.subr.bf16.mxu0 %v2125
    %2733 = vmatpush1.bf16.msra.mxu0 %v2124
    %2734 = vmatprep.subr.bf16.mxu0 %v2133
    %2735 = vmatpush1.bf16.msra.mxu0 %v2132
    %2736 = vmatprep.subr.bf16.mxu0 %v2141
    %2737 = vmatpush1.bf16.msra.mxu0 %v2140
    %2738 = vmatprep.subr.bf16.mxu0 %v2149
    %2739 = vmatpush1.bf16.msra.mxu0 %v2148
    %2740 = vmatprep.subr.bf16.mxu0 %v2157
    %2741 = vmatpush1.bf16.msra.mxu0 %v2156
    %2742 = vmatprep.subr.bf16.mxu0 %v2165
    %2743 = vmatpush1.bf16.msra.mxu0 %v2164
    %2744 = vmatprep.subr.bf16.mxu0 %v2173
    %2745 = vmatpush1.bf16.msra.mxu0 %v2172
    %2746 = vmatprep.subr.bf16.mxu0 %v2181
    %2747 = vmatpush1.bf16.msra.mxu0 %v2180
    %2748 = vmatprep.subr.bf16.mxu0 %v2189
    %2749 = vmatpush1.bf16.msra.mxu0 %v2188
    %2750 = vmatprep.subr.bf16.mxu0 %v2197
    %2751 = vmatpush1.bf16.msra.mxu0 %v2196
    %2752 = vmatprep.subr.bf16.mxu0 %v2205
    %2753 = vmatpush1.bf16.msra.mxu0 %v2204
    %2754 = vmatprep.subr.bf16.mxu0 %v2213
    %2755 = vmatpush1.bf16.msra.mxu0 %v2212
    %2756 = vmatprep.subr.bf16.mxu0 %v2221
    %2757 = vmatpush1.bf16.msra.mxu0 %v2220
    %2758 = vmatprep.subr.bf16.mxu0 %v2229
    %2759 = vmatpush1.bf16.msra.mxu0 %v2228
    %2760 = vmatprep.subr.bf16.mxu0 %v2237
    %2761 = vmatpush1.bf16.msra.mxu0 %v2236
    %2762 = vmatprep.mubr.bf16.mxu0 %v676
    %2763 = vmatmul.mubr.bf16.gmra.mrb[0].mxu0 %v675
    %v2764 = vpop.f32.mrb[0].mxu0
    %v2765 = vadd.f32 %v2724, %v2764
    %v2766 = vpop.f32.mrb[0].mxu0
    %v2767 = vadd.f32 %v2726, %v2766
    %v2768 = vpop.f32.mrb[0].mxu0
    %v2769 = vpop.f32.mrb[0].mxu0
    %2770 = vdwg.mxu0
    %2771 = vmatprep.subr.bf16.mxu0 %v2245
    %2772 = vmatpush1.bf16.msra.mxu0 %v2244
    %2773 = vmatprep.subr.bf16.mxu0 0
    %2774 = vmatpush1.bf16.msra.mxu0 0
    %2775 = vmatprep.subr.bf16.mxu0 0
    %2776 = vmatpush1.bf16.msra.mxu0 0
    %2777 = vmatprep.subr.bf16.mxu0 0
    %2778 = vmatpush1.bf16.msra.mxu0 0
    %2779 = vmatprep.subr.bf16.mxu0 0
    %2780 = vmatpush1.bf16.msra.mxu0 0
    %2781 = vmatprep.subr.bf16.mxu0 0
    %2782 = vmatpush1.bf16.msra.mxu0 0
    %2783 = vmatprep.subr.bf16.mxu0 0
    %2784 = vmatpush1.bf16.msra.mxu0 0
    %2785 = vmatprep.subr.bf16.mxu0 0
    %2786 = vmatpush1.bf16.msra.mxu0 0
    %2787 = vmatprep.subr.bf16.mxu0 0
    %2788 = vmatpush1.bf16.msra.mxu0 0
    %2789 = vmatprep.subr.bf16.mxu0 0
    %2790 = vmatpush1.bf16.msra.mxu0 0
    %2791 = vmatprep.subr.bf16.mxu0 0
    %2792 = vmatpush1.bf16.msra.mxu0 0
    %2793 = vmatprep.subr.bf16.mxu0 0
    %2794 = vmatpush1.bf16.msra.mxu0 0
    %2795 = vmatprep.subr.bf16.mxu0 0
    %2796 = vmatpush1.bf16.msra.mxu0 0
    %2797 = vmatprep.subr.bf16.mxu0 0
    %2798 = vmatpush1.bf16.msra.mxu0 0
    %2799 = vmatprep.subr.bf16.mxu0 0
    %2800 = vmatpush1.bf16.msra.mxu0 0
    %2801 = vmatprep.subr.bf16.mxu0 0
    %2802 = vmatpush1.bf16.msra.mxu0 0
    %2803 = vmatprep.mubr.bf16.mxu0 0
    %2804 = vmatmul.mubr.bf16.gmra.mrb[0].mxu0 %v2646
    %v2805 = vpop.f32.mrb[0].mxu0
    %v2806 = vadd.f32 %v2765, %v2805
    %v2807 = vpop.f32.mrb[0].mxu0
    %v2808 = vadd.f32 %v2767, %v2807
    %v2809 = vpop.f32.mrb[0].mxu0
    %v2810 = vpop.f32.mrb[0].mxu0
    %2811 = vdwg.mxu0
    %2812 = vmatprep.subr.bf16.mxu0 %v1863
    %2813 = vmatpush1.bf16.msra.mxu0 %v1862
    %2814 = vmatprep.subr.bf16.mxu0 %v1871
    %2815 = vmatpush1.bf16.msra.mxu0 %v1870
    %2816 = vmatprep.subr.bf16.mxu0 %v1879
    %2817 = vmatpush1.bf16.msra.mxu0 %v1878
    %2818 = vmatprep.subr.bf16.mxu0 %v1887
    %2819 = vmatpush1.bf16.msra.mxu0 %v1886
    %2820 = vmatprep.subr.bf16.mxu0 %v1895
    %2821 = vmatpush1.bf16.msra.mxu0 %v1894
    %2822 = vmatprep.subr.bf16.mxu0 %v1903
    %2823 = vmatpush1.bf16.msra.mxu0 %v1902
    %2824 = vmatprep.subr.bf16.mxu0 %v1911
    %2825 = vmatpush1.bf16.msra.mxu0 %v1910
    %2826 = vmatprep.subr.bf16.mxu0 %v1919
    %2827 = vmatpush1.bf16.msra.mxu0 %v1918
    %2828 = vmatprep.subr.bf16.mxu0 %v1927
    %2829 = vmatpush1.bf16.msra.mxu0 %v1926
    %2830 = vmatprep.subr.bf16.mxu0 %v1935
    %2831 = vmatpush1.bf16.msra.mxu0 %v1934
    %2832 = vmatprep.subr.bf16.mxu0 %v1943
    %2833 = vmatpush1.bf16.msra.mxu0 %v1942
    %2834 = vmatprep.subr.bf16.mxu0 %v1951
    %2835 = vmatpush1.bf16.msra.mxu0 %v1950
    %2836 = vmatprep.subr.bf16.mxu0 %v1959
    %2837 = vmatpush1.bf16.msra.mxu0 %v1958
    %2838 = vmatprep.subr.bf16.mxu0 %v1967
    %2839 = vmatpush1.bf16.msra.mxu0 %v1966
    %2840 = vmatprep.subr.bf16.mxu0 %v1975
    %2841 = vmatpush1.bf16.msra.mxu0 %v1974
    %2842 = vmatprep.subr.bf16.mxu0 %v1983
    %2843 = vmatpush1.bf16.msra.mxu0 %v1982
    %2844 = vmatprep.mubr.bf16.mxu0 %v672
    %2845 = vmatmul.mubr.bf16.gmra.mrb[0].mxu0 %v671
    %v2846 = vpop.f32.mrb[0].mxu0
    %v2847 = vadd.f32 0.0, %v2846
    %v2848 = vpop.f32.mrb[0].mxu0
    %v2849 = vadd.f32 0.0, %v2848
    %v2850 = vpop.f32.mrb[0].mxu0
    %v2851 = vpop.f32.mrb[0].mxu0
    %2852 = vdwg.mxu0
    %2853 = vmatprep.subr.bf16.mxu0 %v1991
    %2854 = vmatpush1.bf16.msra.mxu0 %v1990
    %2855 = vmatprep.subr.bf16.mxu0 %v1999
    %2856 = vmatpush1.bf16.msra.mxu0 %v1998
    %2857 = vmatprep.subr.bf16.mxu0 %v2007
    %2858 = vmatpush1.bf16.msra.mxu0 %v2006
    %2859 = vmatprep.subr.bf16.mxu0 %v2015
    %2860 = vmatpush1.bf16.msra.mxu0 %v2014
    %2861 = vmatprep.subr.bf16.mxu0 %v2023
    %2862 = vmatpush1.bf16.msra.mxu0 %v2022
    %2863 = vmatprep.subr.bf16.mxu0 %v2031
    %2864 = vmatpush1.bf16.msra.mxu0 %v2030
    %2865 = vmatprep.subr.bf16.mxu0 %v2039
    %2866 = vmatpush1.bf16.msra.mxu0 %v2038
    %2867 = vmatprep.subr.bf16.mxu0 %v2047
    %2868 = vmatpush1.bf16.msra.mxu0 %v2046
    %2869 = vmatprep.subr.bf16.mxu0 %v2055
    %2870 = vmatpush1.bf16.msra.mxu0 %v2054
    %2871 = vmatprep.subr.bf16.mxu0 %v2063
    %2872 = vmatpush1.bf16.msra.mxu0 %v2062
    %2873 = vmatprep.subr.bf16.mxu0 %v2071
    %2874 = vmatpush1.bf16.msra.mxu0 %v2070
    %2875 = vmatprep.subr.bf16.mxu0 %v2079
    %2876 = vmatpush1.bf16.msra.mxu0 %v2078
    %2877 = vmatprep.subr.bf16.mxu0 %v2087
    %2878 = vmatpush1.bf16.msra.mxu0 %v2086
    %2879 = vmatprep.subr.bf16.mxu0 %v2095
    %2880 = vmatpush1.bf16.msra.mxu0 %v2094
    %2881 = vmatprep.subr.bf16.mxu0 %v2103
    %2882 = vmatpush1.bf16.msra.mxu0 %v2102
    %2883 = vmatprep.subr.bf16.mxu0 %v2111
    %2884 = vmatpush1.bf16.msra.mxu0 %v2110
    %2885 = vmatprep.mubr.bf16.mxu0 %v674
    %2886 = vmatmul.mubr.bf16.gmra.mrb[0].mxu0 %v673
    %v2887 = vpop.f32.mrb[0].mxu0
    %v2888 = vadd.f32 %v2847, %v2887
    %v2889 = vpop.f32.mrb[0].mxu0
    %v2890 = vadd.f32 %v2849, %v2889
    %v2891 = vpop.f32.mrb[0].mxu0
    %v2892 = vpop.f32.mrb[0].mxu0
    %2893 = vdwg.mxu0
    %2894 = vmatprep.subr.bf16.mxu0 %v2119
    %2895 = vmatpush1.bf16.msra.mxu0 %v2118
    %2896 = vmatprep.subr.bf16.mxu0 %v2127
    %2897 = vmatpush1.bf16.msra.mxu0 %v2126
    %2898 = vmatprep.subr.bf16.mxu0 %v2135
    %2899 = vmatpush1.bf16.msra.mxu0 %v2134
    %2900 = vmatprep.subr.bf16.mxu0 %v2143
    %2901 = vmatpush1.bf16.msra.mxu0 %v2142
    %2902 = vmatprep.subr.bf16.mxu0 %v2151
    %2903 = vmatpush1.bf16.msra.mxu0 %v2150
    %2904 = vmatprep.subr.bf16.mxu0 %v2159
    %2905 = vmatpush1.bf16.msra.mxu0 %v2158
    %2906 = vmatprep.subr.bf16.mxu0 %v2167
    %2907 = vmatpush1.bf16.msra.mxu0 %v2166
    %2908 = vmatprep.subr.bf16.mxu0 %v2175
    %2909 = vmatpush1.bf16.msra.mxu0 %v2174
    %2910 = vmatprep.subr.bf16.mxu0 %v2183
    %2911 = vmatpush1.bf16.msra.mxu0 %v2182
    %2912 = vmatprep.subr.bf16.mxu0 %v2191
    %2913 = vmatpush1.bf16.msra.mxu0 %v2190
    %2914 = vmatprep.subr.bf16.mxu0 %v2199
    %2915 = vmatpush1.bf16.msra.mxu0 %v2198
    %2916 = vmatprep.subr.bf16.mxu0 %v2207
    %2917 = vmatpush1.bf16.msra.mxu0 %v2206
    %2918 = vmatprep.subr.bf16.mxu0 %v2215
    %2919 = vmatpush1.bf16.msra.mxu0 %v2214
    %2920 = vmatprep.subr.bf16.mxu0 %v2223
    %2921 = vmatpush1.bf16.msra.mxu0 %v2222
    %2922 = vmatprep.subr.bf16.mxu0 %v2231
    %2923 = vmatpush1.bf16.msra.mxu0 %v2230
    %2924 = vmatprep.subr.bf16.mxu0 %v2239
    %2925 = vmatpush1.bf16.msra.mxu0 %v2238
    %2926 = vmatprep.mubr.bf16.mxu0 %v676
    %2927 = vmatmul.mubr.bf16.gmra.mrb[0].mxu0 %v675
    %v2928 = vpop.f32.mrb[0].mxu0
    %v2929 = vadd.f32 %v2888, %v2928
    %v2930 = vpop.f32.mrb[0].mxu0
    %v2931 = vadd.f32 %v2890, %v2930
    %v2932 = vpop.f32.mrb[0].mxu0
    %v2933 = vpop.f32.mrb[0].mxu0
    %2934 = vdwg.mxu0
    %2935 = vmatprep.subr.bf16.mxu0 %v2247
    %2936 = vmatpush1.bf16.msra.mxu0 %v2246
    %2937 = vmatprep.subr.bf16.mxu0 0
    %2938 = vmatpush1.bf16.msra.mxu0 0
    %2939 = vmatprep.subr.bf16.mxu0 0
    %2940 = vmatpush1.bf16.msra.mxu0 0
    %2941 = vmatprep.subr.bf16.mxu0 0
    %2942 = vmatpush1.bf16.msra.mxu0 0
    %2943 = vmatprep.subr.bf16.mxu0 0
    %2944 = vmatpush1.bf16.msra.mxu0 0
    %2945 = vmatprep.subr.bf16.mxu0 0
    %2946 = vmatpush1.bf16.msra.mxu0 0
    %2947 = vmatprep.subr.bf16.mxu0 0
    %2948 = vmatpush1.bf16.msra.mxu0 0
    %2949 = vmatprep.subr.bf16.mxu0 0
    %2950 = vmatpush1.bf16.msra.mxu0 0
    %2951 = vmatprep.subr.bf16.mxu0 0
    %2952 = vmatpush1.bf16.msra.mxu0 0
    %2953 = vmatprep.subr.bf16.mxu0 0
    %2954 = vmatpush1.bf16.msra.mxu0 0
    %2955 = vmatprep.subr.bf16.mxu0 0
    %2956 = vmatpush1.bf16.msra.mxu0 0
    %2957 = vmatprep.subr.bf16.mxu0 0
    %2958 = vmatpush1.bf16.msra.mxu0 0
    %2959 = vmatprep.subr.bf16.mxu0 0
    %2960 = vmatpush1.bf16.msra.mxu0 0
    %2961 = vmatprep.subr.bf16.mxu0 0
    %2962 = vmatpush1.bf16.msra.mxu0 0
    %2963 = vmatprep.subr.bf16.mxu0 0
    %2964 = vmatpush1.bf16.msra.mxu0 0
    %2965 = vmatprep.subr.bf16.mxu0 0
    %2966 = vmatpush1.bf16.msra.mxu0 0
    %2967 = vmatprep.mubr.bf16.mxu0 0
    %2968 = vmatmul.mubr.bf16.gmra.mrb[0].mxu0 %v2646
    %v2969 = vpop.f32.mrb[0].mxu0
    %v2970 = vadd.f32 %v2929, %v2969
    %v2971 = vpop.f32.mrb[0].mxu0
    %v2972 = vadd.f32 %v2931, %v2971
    %v2973 = vpop.f32.mrb[0].mxu0
    %v2974 = vpop.f32.mrb[0].mxu0
    %2975 = vdwg.mxu0
    %2976 = vmatprep.subr.bf16.mxu0 %v1865
    %2977 = vmatpush1.bf16.msra.mxu0 %v1864
    %2978 = vmatprep.subr.bf16.mxu0 %v1873
    %2979 = vmatpush1.bf16.msra.mxu0 %v1872
    %2980 = vmatprep.subr.bf16.mxu0 %v1881
    %2981 = vmatpush1.bf16.msra.mxu0 %v1880
    %2982 = vmatprep.subr.bf16.mxu0 %v1889
    %2983 = vmatpush1.bf16.msra.mxu0 %v1888
    %2984 = vmatprep.subr.bf16.mxu0 %v1897
    %2985 = vmatpush1.bf16.msra.mxu0 %v1896
    %2986 = vmatprep.subr.bf16.mxu0 %v1905
    %2987 = vmatpush1.bf16.msra.mxu0 %v1904
    %2988 = vmatprep.subr.bf16.mxu0 %v1913
    %2989 = vmatpush1.bf16.msra.mxu0 %v1912
    %2990 = vmatprep.subr.bf16.mxu0 %v1921
    %2991 = vmatpush1.bf16.msra.mxu0 %v1920
    %2992 = vmatprep.subr.bf16.mxu0 %v1929
    %2993 = vmatpush1.bf16.msra.mxu0 %v1928
    %2994 = vmatprep.subr.bf16.mxu0 %v1937
    %2995 = vmatpush1.bf16.msra.mxu0 %v1936
    %2996 = vmatprep.subr.bf16.mxu0 %v1945
    %2997 = vmatpush1.bf16.msra.mxu0 %v1944
    %2998 = vmatprep.subr.bf16.mxu0 %v1953
    %2999 = vmatpush1.bf16.msra.mxu0 %v1952
    %3000 = vmatprep.subr.bf16.mxu0 %v1961
    %3001 = vmatpush1.bf16.msra.mxu0 %v1960
    %3002 = vmatprep.subr.bf16.mxu0 %v1969
    %3003 = vmatpush1.bf16.msra.mxu0 %v1968
    %3004 = vmatprep.subr.bf16.mxu0 %v1977
    %3005 = vmatpush1.bf16.msra.mxu0 %v1976
    %3006 = vmatprep.subr.bf16.mxu0 %v1985
    %3007 = vmatpush1.bf16.msra.mxu0 %v1984
    %3008 = vmatprep.mubr.bf16.mxu0 %v672
    %3009 = vmatmul.mubr.bf16.gmra.mrb[0].mxu0 %v671
    %v3010 = vpop.f32.mrb[0].mxu0
    %v3011 = vadd.f32 0.0, %v3010
    %v3012 = vpop.f32.mrb[0].mxu0
    %v3013 = vadd.f32 0.0, %v3012
    %v3014 = vpop.f32.mrb[0].mxu0
    %v3015 = vpop.f32.mrb[0].mxu0
    %3016 = vdwg.mxu0
    %3017 = vmatprep.subr.bf16.mxu0 %v1993
    %3018 = vmatpush1.bf16.msra.mxu0 %v1992
    %3019 = vmatprep.subr.bf16.mxu0 %v2001
    %3020 = vmatpush1.bf16.msra.mxu0 %v2000
    %3021 = vmatprep.subr.bf16.mxu0 %v2009
    %3022 = vmatpush1.bf16.msra.mxu0 %v2008
    %3023 = vmatprep.subr.bf16.mxu0 %v2017
    %3024 = vmatpush1.bf16.msra.mxu0 %v2016
    %3025 = vmatprep.subr.bf16.mxu0 %v2025
    %3026 = vmatpush1.bf16.msra.mxu0 %v2024
    %3027 = vmatprep.subr.bf16.mxu0 %v2033
    %3028 = vmatpush1.bf16.msra.mxu0 %v2032
    %3029 = vmatprep.subr.bf16.mxu0 %v2041
    %3030 = vmatpush1.bf16.msra.mxu0 %v2040
    %3031 = vmatprep.subr.bf16.mxu0 %v2049
    %3032 = vmatpush1.bf16.msra.mxu0 %v2048
    %3033 = vmatprep.subr.bf16.mxu0 %v2057
    %3034 = vmatpush1.bf16.msra.mxu0 %v2056
    %3035 = vmatprep.subr.bf16.mxu0 %v2065
    %3036 = vmatpush1.bf16.msra.mxu0 %v2064
    %3037 = vmatprep.subr.bf16.mxu0 %v2073
    %3038 = vmatpush1.bf16.msra.mxu0 %v2072
    %3039 = vmatprep.subr.bf16.mxu0 %v2081
    %3040 = vmatpush1.bf16.msra.mxu0 %v2080
    %3041 = vmatprep.subr.bf16.mxu0 %v2089
    %3042 = vmatpush1.bf16.msra.mxu0 %v2088
    %3043 = vmatprep.subr.bf16.mxu0 %v2097
    %3044 = vmatpush1.bf16.msra.mxu0 %v2096
    %3045 = vmatprep.subr.bf16.mxu0 %v2105
    %3046 = vmatpush1.bf16.msra.mxu0 %v2104
    %3047 = vmatprep.subr.bf16.mxu0 %v2113
    %3048 = vmatpush1.bf16.msra.mxu0 %v2112
    %3049 = vmatprep.mubr.bf16.mxu0 %v674
    %3050 = vmatmul.mubr.bf16.gmra.mrb[0].mxu0 %v673
    %v3051 = vpop.f32.mrb[0].mxu0
    %v3052 = vadd.f32 %v3011, %v3051
    %v3053 = vpop.f32.mrb[0].mxu0
    %v3054 = vadd.f32 %v3013, %v3053
    %v3055 = vpop.f32.mrb[0].mxu0
    %v3056 = vpop.f32.mrb[0].mxu0
    %3057 = vdwg.mxu0
    %3058 = vmatprep.subr.bf16.mxu0 %v2121
    %3059 = vmatpush1.bf16.msra.mxu0 %v2120
    %3060 = vmatprep.subr.bf16.mxu0 %v2129
    %3061 = vmatpush1.bf16.msra.mxu0 %v2128
    %3062 = vmatprep.subr.bf16.mxu0 %v2137
    %3063 = vmatpush1.bf16.msra.mxu0 %v2136
    %3064 = vmatprep.subr.bf16.mxu0 %v2145
    %3065 = vmatpush1.bf16.msra.mxu0 %v2144
    %3066 = vmatprep.subr.bf16.mxu0 %v2153
    %3067 = vmatpush1.bf16.msra.mxu0 %v2152
    %3068 = vmatprep.subr.bf16.mxu0 %v2161
    %3069 = vmatpush1.bf16.msra.mxu0 %v2160
    %3070 = vmatprep.subr.bf16.mxu0 %v2169
    %3071 = vmatpush1.bf16.msra.mxu0 %v2168
    %3072 = vmatprep.subr.bf16.mxu0 %v2177
    %3073 = vmatpush1.bf16.msra.mxu0 %v2176
    %3074 = vmatprep.subr.bf16.mxu0 %v2185
    %3075 = vmatpush1.bf16.msra.mxu0 %v2184
    %3076 = vmatprep.subr.bf16.mxu0 %v2193
    %3077 = vmatpush1.bf16.msra.mxu0 %v2192
    %3078 = vmatprep.subr.bf16.mxu0 %v2201
    %3079 = vmatpush1.bf16.msra.mxu0 %v2200
    %3080 = vmatprep.subr.bf16.mxu0 %v2209
    %3081 = vmatpush1.bf16.msra.mxu0 %v2208
    %3082 = vmatprep.subr.bf16.mxu0 %v2217
    %3083 = vmatpush1.bf16.msra.mxu0 %v2216
    %3084 = vmatprep.subr.bf16.mxu0 %v2225
    %3085 = vmatpush1.bf16.msra.mxu0 %v2224
    %3086 = vmatprep.subr.bf16.mxu0 %v2233
    %3087 = vmatpush1.bf16.msra.mxu0 %v2232
    %3088 = vmatprep.subr.bf16.mxu0 %v2241
    %3089 = vmatpush1.bf16.msra.mxu0 %v2240
    %3090 = vmatprep.mubr.bf16.mxu0 %v676
    %3091 = vmatmul.mubr.bf16.gmra.mrb[0].mxu0 %v675
    %v3092 = vpop.f32.mrb[0].mxu0
    %v3093 = vadd.f32 %v3052, %v3092
    %v3094 = vpop.f32.mrb[0].mxu0
    %v3095 = vadd.f32 %v3054, %v3094
    %v3096 = vpop.f32.mrb[0].mxu0
    %v3097 = vpop.f32.mrb[0].mxu0
    %3098 = vdwg.mxu0
    %3099 = vmatprep.subr.bf16.mxu0 %v2249
    %3100 = vmatpush1.bf16.msra.mxu0 %v2248
    %3101 = vmatprep.subr.bf16.mxu0 0
    %3102 = vmatpush1.bf16.msra.mxu0 0
    %3103 = vmatprep.subr.bf16.mxu0 0
    %3104 = vmatpush1.bf16.msra.mxu0 0
    %3105 = vmatprep.subr.bf16.mxu0 0
    %3106 = vmatpush1.bf16.msra.mxu0 0
    %3107 = vmatprep.subr.bf16.mxu0 0
    %3108 = vmatpush1.bf16.msra.mxu0 0
    %3109 = vmatprep.subr.bf16.mxu0 0
    %3110 = vmatpush1.bf16.msra.mxu0 0
    %3111 = vmatprep.subr.bf16.mxu0 0
    %3112 = vmatpush1.bf16.msra.mxu0 0
    %3113 = vmatprep.subr.bf16.mxu0 0
    %3114 = vmatpush1.bf16.msra.mxu0 0
    %3115 = vmatprep.subr.bf16.mxu0 0
    %3116 = vmatpush1.bf16.msra.mxu0 0
    %3117 = vmatprep.subr.bf16.mxu0 0
    %3118 = vmatpush1.bf16.msra.mxu0 0
    %3119 = vmatprep.subr.bf16.mxu0 0
    %3120 = vmatpush1.bf16.msra.mxu0 0
    %3121 = vmatprep.subr.bf16.mxu0 0
    %3122 = vmatpush1.bf16.msra.mxu0 0
    %3123 = vmatprep.subr.bf16.mxu0 0
    %3124 = vmatpush1.bf16.msra.mxu0 0
    %3125 = vmatprep.subr.bf16.mxu0 0
    %3126 = vmatpush1.bf16.msra.mxu0 0
    %3127 = vmatprep.subr.bf16.mxu0 0
    %3128 = vmatpush1.bf16.msra.mxu0 0
    %3129 = vmatprep.subr.bf16.mxu0 0
    %3130 = vmatpush1.bf16.msra.mxu0 0
    %3131 = vmatprep.mubr.bf16.mxu0 0
    %3132 = vmatmul.mubr.bf16.gmra.mrb[0].mxu0 %v2646
    %v3133 = vpop.f32.mrb[0].mxu0
    %v3134 = vadd.f32 %v3093, %v3133
    %v3135 = vpop.f32.mrb[0].mxu0
    %v3136 = vadd.f32 %v3095, %v3135
    %v3137 = vpop.f32.mrb[0].mxu0
    %v3138 = vpop.f32.mrb[0].mxu0
    %3139 = vdwg.mxu0
    %3140 = vmatprep.subr.bf16.mxu0 %v1867
    %3141 = vmatpush1.bf16.msra.mxu0 %v1866
    %3142 = vmatprep.subr.bf16.mxu0 %v1875
    %3143 = vmatpush1.bf16.msra.mxu0 %v1874
    %3144 = vmatprep.subr.bf16.mxu0 %v1883
    %3145 = vmatpush1.bf16.msra.mxu0 %v1882
    %3146 = vmatprep.subr.bf16.mxu0 %v1891
    %3147 = vmatpush1.bf16.msra.mxu0 %v1890
    %3148 = vmatprep.subr.bf16.mxu0 %v1899
    %3149 = vmatpush1.bf16.msra.mxu0 %v1898
    %3150 = vmatprep.subr.bf16.mxu0 %v1907
    %3151 = vmatpush1.bf16.msra.mxu0 %v1906
    %3152 = vmatprep.subr.bf16.mxu0 %v1915
    %3153 = vmatpush1.bf16.msra.mxu0 %v1914
    %3154 = vmatprep.subr.bf16.mxu0 %v1923
    %3155 = vmatpush1.bf16.msra.mxu0 %v1922
    %3156 = vmatprep.subr.bf16.mxu0 %v1931
    %3157 = vmatpush1.bf16.msra.mxu0 %v1930
    %3158 = vmatprep.subr.bf16.mxu0 %v1939
    %3159 = vmatpush1.bf16.msra.mxu0 %v1938
    %3160 = vmatprep.subr.bf16.mxu0 %v1947
    %3161 = vmatpush1.bf16.msra.mxu0 %v1946
    %3162 = vmatprep.subr.bf16.mxu0 %v1955
    %3163 = vmatpush1.bf16.msra.mxu0 %v1954
    %3164 = vmatprep.subr.bf16.mxu0 %v1963
    %3165 = vmatpush1.bf16.msra.mxu0 %v1962
    %3166 = vmatprep.subr.bf16.mxu0 %v1971
    %3167 = vmatpush1.bf16.msra.mxu0 %v1970
    %3168 = vmatprep.subr.bf16.mxu0 %v1979
    %3169 = vmatpush1.bf16.msra.mxu0 %v1978
    %3170 = vmatprep.subr.bf16.mxu0 %v1987
    %3171 = vmatpush1.bf16.msra.mxu0 %v1986
    %3172 = vmatprep.mubr.bf16.mxu0 %v672
    %3173 = vmatmul.mubr.bf16.gmra.mrb[0].mxu0 %v671
    %v3174 = vpop.f32.mrb[0].mxu0
    %v3175 = vadd.f32 0.0, %v3174
    %v3176 = vpop.f32.mrb[0].mxu0
    %v3177 = vadd.f32 0.0, %v3176
    %v3178 = vpop.f32.mrb[0].mxu0
    %v3179 = vpop.f32.mrb[0].mxu0
    %3180 = vdwg.mxu0
    %3181 = vmatprep.subr.bf16.mxu0 %v1995
    %3182 = vmatpush1.bf16.msra.mxu0 %v1994
    %3183 = vmatprep.subr.bf16.mxu0 %v2003
    %3184 = vmatpush1.bf16.msra.mxu0 %v2002
    %3185 = vmatprep.subr.bf16.mxu0 %v2011
    %3186 = vmatpush1.bf16.msra.mxu0 %v2010
    %3187 = vmatprep.subr.bf16.mxu0 %v2019
    %3188 = vmatpush1.bf16.msra.mxu0 %v2018
    %3189 = vmatprep.subr.bf16.mxu0 %v2027
    %3190 = vmatpush1.bf16.msra.mxu0 %v2026
    %3191 = vmatprep.subr.bf16.mxu0 %v2035
    %3192 = vmatpush1.bf16.msra.mxu0 %v2034
    %3193 = vmatprep.subr.bf16.mxu0 %v2043
    %3194 = vmatpush1.bf16.msra.mxu0 %v2042
    %3195 = vmatprep.subr.bf16.mxu0 %v2051
    %3196 = vmatpush1.bf16.msra.mxu0 %v2050
    %3197 = vmatprep.subr.bf16.mxu0 %v2059
    %3198 = vmatpush1.bf16.msra.mxu0 %v2058
    %3199 = vmatprep.subr.bf16.mxu0 %v2067
    %3200 = vmatpush1.bf16.msra.mxu0 %v2066
    %3201 = vmatprep.subr.bf16.mxu0 %v2075
    %3202 = vmatpush1.bf16.msra.mxu0 %v2074
    %3203 = vmatprep.subr.bf16.mxu0 %v2083
    %3204 = vmatpush1.bf16.msra.mxu0 %v2082
    %3205 = vmatprep.subr.bf16.mxu0 %v2091
    %3206 = vmatpush1.bf16.msra.mxu0 %v2090
    %3207 = vmatprep.subr.bf16.mxu0 %v2099
    %3208 = vmatpush1.bf16.msra.mxu0 %v2098
    %3209 = vmatprep.subr.bf16.mxu0 %v2107
    %3210 = vmatpush1.bf16.msra.mxu0 %v2106
    %3211 = vmatprep.subr.bf16.mxu0 %v2115
    %3212 = vmatpush1.bf16.msra.mxu0 %v2114
    %3213 = vmatprep.mubr.bf16.mxu0 %v674
    %3214 = vmatmul.mubr.bf16.gmra.mrb[0].mxu0 %v673
    %v3215 = vpop.f32.mrb[0].mxu0
    %v3216 = vadd.f32 %v3175, %v3215
    %v3217 = vpop.f32.mrb[0].mxu0
    %v3218 = vadd.f32 %v3177, %v3217
    %v3219 = vpop.f32.mrb[0].mxu0
    %v3220 = vpop.f32.mrb[0].mxu0
    %3221 = vdwg.mxu0
    %3222 = vmatprep.subr.bf16.mxu0 %v2123
    %3223 = vmatpush1.bf16.msra.mxu0 %v2122
    %3224 = vmatprep.subr.bf16.mxu0 %v2131
    %3225 = vmatpush1.bf16.msra.mxu0 %v2130
    %3226 = vmatprep.subr.bf16.mxu0 %v2139
    %3227 = vmatpush1.bf16.msra.mxu0 %v2138
    %3228 = vmatprep.subr.bf16.mxu0 %v2147
    %3229 = vmatpush1.bf16.msra.mxu0 %v2146
    %3230 = vmatprep.subr.bf16.mxu0 %v2155
    %3231 = vmatpush1.bf16.msra.mxu0 %v2154
    %3232 = vmatprep.subr.bf16.mxu0 %v2163
    %3233 = vmatpush1.bf16.msra.mxu0 %v2162
    %3234 = vmatprep.subr.bf16.mxu0 %v2171
    %3235 = vmatpush1.bf16.msra.mxu0 %v2170
    %3236 = vmatprep.subr.bf16.mxu0 %v2179
    %3237 = vmatpush1.bf16.msra.mxu0 %v2178
    %3238 = vmatprep.subr.bf16.mxu0 %v2187
    %3239 = vmatpush1.bf16.msra.mxu0 %v2186
    %3240 = vmatprep.subr.bf16.mxu0 %v2195
    %3241 = vmatpush1.bf16.msra.mxu0 %v2194
    %3242 = vmatprep.subr.bf16.mxu0 %v2203
    %3243 = vmatpush1.bf16.msra.mxu0 %v2202
    %3244 = vmatprep.subr.bf16.mxu0 %v2211
    %3245 = vmatpush1.bf16.msra.mxu0 %v2210
    %3246 = vmatprep.subr.bf16.mxu0 %v2219
    %3247 = vmatpush1.bf16.msra.mxu0 %v2218
    %3248 = vmatprep.subr.bf16.mxu0 %v2227
    %3249 = vmatpush1.bf16.msra.mxu0 %v2226
    %3250 = vmatprep.subr.bf16.mxu0 %v2235
    %3251 = vmatpush1.bf16.msra.mxu0 %v2234
    %3252 = vmatprep.subr.bf16.mxu0 %v2243
    %3253 = vmatpush1.bf16.msra.mxu0 %v2242
    %3254 = vmatprep.mubr.bf16.mxu0 %v676
    %3255 = vmatmul.mubr.bf16.gmra.mrb[0].mxu0 %v675
    %v3256 = vpop.f32.mrb[0].mxu0
    %v3257 = vadd.f32 %v3216, %v3256
    %v3258 = vpop.f32.mrb[0].mxu0
    %v3259 = vadd.f32 %v3218, %v3258
    %v3260 = vpop.f32.mrb[0].mxu0
    %v3261 = vpop.f32.mrb[0].mxu0
    %3262 = vdwg.mxu0
    %3263 = vmatprep.subr.bf16.mxu0 %v2251
    %3264 = vmatpush1.bf16.msra.mxu0 %v2250
    %3265 = vmatprep.subr.bf16.mxu0 0
    %3266 = vmatpush1.bf16.msra.mxu0 0
    %3267 = vmatprep.subr.bf16.mxu0 0
    %3268 = vmatpush1.bf16.msra.mxu0 0
    %3269 = vmatprep.subr.bf16.mxu0 0
    %3270 = vmatpush1.bf16.msra.mxu0 0
    %3271 = vmatprep.subr.bf16.mxu0 0
    %3272 = vmatpush1.bf16.msra.mxu0 0
    %3273 = vmatprep.subr.bf16.mxu0 0
    %3274 = vmatpush1.bf16.msra.mxu0 0
    %3275 = vmatprep.subr.bf16.mxu0 0
    %3276 = vmatpush1.bf16.msra.mxu0 0
    %3277 = vmatprep.subr.bf16.mxu0 0
    %3278 = vmatpush1.bf16.msra.mxu0 0
    %3279 = vmatprep.subr.bf16.mxu0 0
    %3280 = vmatpush1.bf16.msra.mxu0 0
    %3281 = vmatprep.subr.bf16.mxu0 0
    %3282 = vmatpush1.bf16.msra.mxu0 0
    %3283 = vmatprep.subr.bf16.mxu0 0
    %3284 = vmatpush1.bf16.msra.mxu0 0
    %3285 = vmatprep.subr.bf16.mxu0 0
    %3286 = vmatpush1.bf16.msra.mxu0 0
    %3287 = vmatprep.subr.bf16.mxu0 0
    %3288 = vmatpush1.bf16.msra.mxu0 0
    %3289 = vmatprep.subr.bf16.mxu0 0
    %3290 = vmatpush1.bf16.msra.mxu0 0
    %3291 = vmatprep.subr.bf16.mxu0 0
    %3292 = vmatpush1.bf16.msra.mxu0 0
    %3293 = vmatprep.subr.bf16.mxu0 0
    %3294 = vmatpush1.bf16.msra.mxu0 0
    %3295 = vmatprep.mubr.bf16.mxu0 0
    %3296 = vmatmul.mubr.bf16.gmra.mrb[0].mxu0 %v2646
    %v3297 = vpop.f32.mrb[0].mxu0
    %v3298 = vadd.f32 %v3257, %v3297
    %v3299 = vpop.f32.mrb[0].mxu0
    %v3300 = vadd.f32 %v3259, %v3299
    %v3301 = vpop.f32.mrb[0].mxu0
    %v3302 = vpop.f32.mrb[0].mxu0
    %3303 = vdwg.mxu0
    %v3304 = vld [vmem:[%s6 + $0x8] sm:$0xff]
    %v3306 = vlaneseq
    %v3307 = vshrl.u32 %v3306, 7
    %v3308 = vsub.s32 0, %v3307
    %v3309 = vrot.slane %v3304, %v3308
    %v3310 = vlaneseq
    %v3311 = vshrl.u32 %v3310, 7
    %v3312 = vsub.s32 1, %v3311
    %v3313 = vrot.slane %v3304, %v3312
    %v3314 = vlaneseq
    %v3315 = vshrl.u32 %v3314, 7
    %v3316 = vsub.s32 2, %v3315
    %v3317 = vrot.slane %v3304, %v3316
    %v3318 = vlaneseq
    %v3319 = vshrl.u32 %v3318, 7
    %v3320 = vsub.s32 3, %v3319
    %v3321 = vrot.slane %v3304, %v3320
    %v3322 = vlaneseq
    %v3323 = vshrl.u32 %v3322, 7
    %v3324 = vsub.s32 4, %v3323
    %v3325 = vrot.slane %v3304, %v3324
    %v3326 = vlaneseq
    %v3327 = vshrl.u32 %v3326, 7
    %v3328 = vsub.s32 5, %v3327
    %v3329 = vrot.slane %v3304, %v3328
    %v3330 = vlaneseq
    %v3331 = vshrl.u32 %v3330, 7
    %v3332 = vsub.s32 6, %v3331
    %v3333 = vrot.slane %v3304, %v3332
    %v3334 = vlaneseq
    %v3335 = vshrl.u32 %v3334, 7
    %v3336 = vsub.s32 7, %v3335
    %v3337 = vrot.slane %v3304, %v3336
    %v3346 = vmul.f32 %v2806, %v3309
    %v3347 = vmul.f32 %v2808, %v3313
    %v3348 = vmul.f32 %v2970, %v3317
    %v3349 = vmul.f32 %v2972, %v3321
    %v3350 = vmul.f32 %v3134, %v3325
    %v3351 = vmul.f32 %v3136, %v3329
    %v3352 = vmul.f32 %v3298, %v3333
    %v3353 = vmul.f32 %v3300, %v3337
    %v3354 = vld [vmem:[%s6] sm:$0xff]
    %v3356 = vlaneseq
    %v3357 = vshrl.u32 %v3356, 7
    %v3358 = vsub.s32 0, %v3357
    %v3359 = vrot.slane %v3354, %v3358
    %v3360 = vlaneseq
    %v3361 = vshrl.u32 %v3360, 7
    %v3362 = vsub.s32 1, %v3361
    %v3363 = vrot.slane %v3354, %v3362
    %v3364 = vlaneseq
    %v3365 = vshrl.u32 %v3364, 7
    %v3366 = vsub.s32 2, %v3365
    %v3367 = vrot.slane %v3354, %v3366
    %v3368 = vlaneseq
    %v3369 = vshrl.u32 %v3368, 7
    %v3370 = vsub.s32 3, %v3369
    %v3371 = vrot.slane %v3354, %v3370
    %v3372 = vlaneseq
    %v3373 = vshrl.u32 %v3372, 7
    %v3374 = vsub.s32 4, %v3373
    %v3375 = vrot.slane %v3354, %v3374
    %v3376 = vlaneseq
    %v3377 = vshrl.u32 %v3376, 7
    %v3378 = vsub.s32 5, %v3377
    %v3379 = vrot.slane %v3354, %v3378
    %v3380 = vlaneseq
    %v3381 = vshrl.u32 %v3380, 7
    %v3382 = vsub.s32 6, %v3381
    %v3383 = vrot.slane %v3354, %v3382
    %v3384 = vlaneseq
    %v3385 = vshrl.u32 %v3384, 7
    %v3386 = vsub.s32 7, %v3385
    %v3387 = vrot.slane %v3354, %v3386
    %v3396 = vadd.f32 %v3346, %v3359
    %v3397 = vadd.f32 %v3347, %v3363
    %v3398 = vadd.f32 %v3348, %v3367
    %v3399 = vadd.f32 %v3349, %v3371
    %v3400 = vadd.f32 %v3350, %v3375
    %v3401 = vadd.f32 %v3351, %v3379
    %v3402 = vadd.f32 %v3352, %v3383
    %v3403 = vadd.f32 %v3353, %v3387
    %vm3404 = vcmp.gt.f32.partialorder %v3396, 0.0
    %vm3405 = vcmp.gt.f32.partialorder %v3397, 0.0
    %vm3406 = vcmp.gt.f32.partialorder %v3398, 0.0
    %vm3407 = vcmp.gt.f32.partialorder %v3399, 0.0
    %vm3408 = vcmp.gt.f32.partialorder %v3400, 0.0
    %vm3409 = vcmp.gt.f32.partialorder %v3401, 0.0
    %vm3410 = vcmp.gt.f32.partialorder %v3402, 0.0
    %vm3411 = vcmp.gt.f32.partialorder %v3403, 0.0
    %v3412 = vmul.f32 %v3396, 0.2
    %v3413 = vmul.f32 %v3397, 0.2
    %v3414 = vmul.f32 %v3398, 0.2
    %v3415 = vmul.f32 %v3399, 0.2
    %v3416 = vmul.f32 %v3400, 0.2
    %v3417 = vmul.f32 %v3401, 0.2
    %v3418 = vmul.f32 %v3402, 0.2
    %v3419 = vmul.f32 %v3403, 0.2
    %v3420 = vsel %vm3404, %v3396, %v3412
    %v3421 = vsel %vm3405, %v3397, %v3413
    %v3422 = vsel %vm3406, %v3398, %v3414
    %v3423 = vsel %vm3407, %v3399, %v3415
    %v3424 = vsel %vm3408, %v3400, %v3416
    %v3425 = vsel %vm3409, %v3401, %v3417
    %v3426 = vsel %vm3410, %v3402, %v3418
    %v3427 = vsel %vm3411, %v3403, %v3419
    %v3428 = vld [vmem:[%s1] sm:$0xff]
    %v3429 = vld [vmem:[%s1 + $0x8] sm:$0xff]
    %v3430 = vld [vmem:[%s1 + $0x10] sm:$0xff]
    %v3431 = vld [vmem:[%s1 + $0x18] sm:$0xff]
    %v3432 = vld [vmem:[%s1 + $0x20] sm:$0xff]
    %v3433 = vld [vmem:[%s1 + $0x28] sm:$0xff]
    %v3434 = vld [vmem:[%s1 + $0x30] sm:$0xff]
    %v3435 = vld [vmem:[%s1 + $0x38] sm:$0xff]
    %vm3436 = vcmp.gt.f32.partialorder %v3428, 0.0
    %vm3437 = vcmp.gt.f32.partialorder %v3429, 0.0
    %vm3438 = vcmp.gt.f32.partialorder %v3430, 0.0
    %vm3439 = vcmp.gt.f32.partialorder %v3431, 0.0
    %vm3440 = vcmp.gt.f32.partialorder %v3432, 0.0
    %vm3441 = vcmp.gt.f32.partialorder %v3433, 0.0
    %vm3442 = vcmp.gt.f32.partialorder %v3434, 0.0
    %vm3443 = vcmp.gt.f32.partialorder %v3435, 0.0
    %v3444 = vmul.f32 %v3428, 0.2
    %v3445 = vmul.f32 %v3429, 0.2
    %v3446 = vmul.f32 %v3430, 0.2
    %v3447 = vmul.f32 %v3431, 0.2
    %v3448 = vmul.f32 %v3432, 0.2
    %v3449 = vmul.f32 %v3433, 0.2
    %v3450 = vmul.f32 %v3434, 0.2
    %v3451 = vmul.f32 %v3435, 0.2
    %v3452 = vsel %vm3436, %v3428, %v3444
    %v3453 = vsel %vm3437, %v3429, %v3445
    %v3454 = vsel %vm3438, %v3430, %v3446
    %v3455 = vsel %vm3439, %v3431, %v3447
    %v3456 = vsel %vm3440, %v3432, %v3448
    %v3457 = vsel %vm3441, %v3433, %v3449
    %v3458 = vsel %vm3442, %v3434, %v3450
    %v3459 = vsel %vm3443, %v3435, %v3451
    %v3460 = vpack.c.bf16 %v3420, %v3420
    %v3461 = vpack.c.bf16 %v3421, %v3421
    %v3462 = vpack.c.bf16 %v3422, %v3422
    %v3463 = vpack.c.bf16 %v3423, %v3423
    %v3464 = vpack.c.bf16 %v3424, %v3424
    %v3465 = vpack.c.bf16 %v3425, %v3425
    %v3466 = vpack.c.bf16 %v3426, %v3426
    %v3467 = vpack.c.bf16 %v3427, %v3427
    %v3468 = vld [vmem:[#allocation4] sm:$0xff]
    %v3469 = vld [vmem:[#allocation4 + $0x8] sm:$0xff]
    %v3470 = vld [vmem:[#allocation4 + $0x10] sm:$0xff]
    %v3471 = vld [vmem:[#allocation4 + $0x18] sm:$0xff]
    %v3472 = vld [vmem:[#allocation4 + $0x20] sm:$0xff]
    %v3473 = vld [vmem:[#allocation4 + $0x28] sm:$0xff]
    %v3474 = vld [vmem:[#allocation4 + $0x30] sm:$0xff]
    %v3475 = vld [vmem:[#allocation4 + $0x38] sm:$0xff]
    %v3476 = vld [vmem:[#allocation4 + $0x40] sm:$0xff]
    %v3477 = vld [vmem:[#allocation4 + $0x48] sm:$0xff]
    %v3478 = vld [vmem:[#allocation4 + $0x50] sm:$0xff]
    %v3479 = vld [vmem:[#allocation4 + $0x58] sm:$0xff]
    %v3480 = vld [vmem:[#allocation4 + $0x60] sm:$0xff]
    %v3481 = vld [vmem:[#allocation4 + $0x68] sm:$0xff]
    %v3482 = vld [vmem:[#allocation4 + $0x70] sm:$0xff]
    %v3483 = vld [vmem:[#allocation4 + $0x78] sm:$0xff]
    %v3484 = vld [vmem:[#allocation4 + $0x80] sm:$0xff]
    %v3485 = vld [vmem:[#allocation4 + $0x88] sm:$0xff]
    %v3486 = vld [vmem:[#allocation4 + $0x90] sm:$0xff]
    %v3487 = vld [vmem:[#allocation4 + $0x98] sm:$0xff]
    %v3488 = vld [vmem:[#allocation4 + $0xa0] sm:$0xff]
    %v3489 = vld [vmem:[#allocation4 + $0xa8] sm:$0xff]
    %v3490 = vld [vmem:[#allocation4 + $0xb0] sm:$0xff]
    %v3491 = vld [vmem:[#allocation4 + $0xb8] sm:$0xff]
    %v3492 = vld [vmem:[#allocation4 + $0xc0] sm:$0xff]
    %v3493 = vld [vmem:[#allocation4 + $0xc8] sm:$0xff]
    %v3494 = vld [vmem:[#allocation4 + $0xd0] sm:$0xff]
    %v3495 = vld [vmem:[#allocation4 + $0xd8] sm:$0xff]
    %v3496 = vld [vmem:[#allocation4 + $0xe0] sm:$0xff]
    %v3497 = vld [vmem:[#allocation4 + $0xe8] sm:$0xff]
    %v3498 = vld [vmem:[#allocation4 + $0xf0] sm:$0xff]
    %v3499 = vld [vmem:[#allocation4 + $0xf8] sm:$0xff]
    %v3500 = vld [vmem:[#allocation4 + $0x100] sm:$0xff]
    %v3501 = vld [vmem:[#allocation4 + $0x108] sm:$0xff]
    %v3502 = vld [vmem:[#allocation4 + $0x110] sm:$0xff]
    %v3503 = vld [vmem:[#allocation4 + $0x118] sm:$0xff]
    %v3504 = vld [vmem:[#allocation4 + $0x120] sm:$0xff]
    %v3505 = vld [vmem:[#allocation4 + $0x128] sm:$0xff]
    %v3506 = vld [vmem:[#allocation4 + $0x130] sm:$0xff]
    %v3507 = vld [vmem:[#allocation4 + $0x138] sm:$0xff]
    %v3508 = vld [vmem:[#allocation4 + $0x140] sm:$0xff]
    %v3509 = vld [vmem:[#allocation4 + $0x148] sm:$0xff]
    %v3510 = vld [vmem:[#allocation4 + $0x150] sm:$0xff]
    %v3511 = vld [vmem:[#allocation4 + $0x158] sm:$0xff]
    %v3512 = vld [vmem:[#allocation4 + $0x160] sm:$0xff]
    %v3513 = vld [vmem:[#allocation4 + $0x168] sm:$0xff]
    %v3514 = vld [vmem:[#allocation4 + $0x170] sm:$0xff]
    %v3515 = vld [vmem:[#allocation4 + $0x178] sm:$0xff]
    %v3516 = vld [vmem:[#allocation4 + $0x180] sm:$0xff]
    %v3517 = vld [vmem:[#allocation4 + $0x188] sm:$0xff]
    %v3518 = vld [vmem:[#allocation4 + $0x190] sm:$0xff]
    %v3519 = vld [vmem:[#allocation4 + $0x198] sm:$0xff]
    %v3520 = vld [vmem:[#allocation4 + $0x1a0] sm:$0xff]
    %v3521 = vld [vmem:[#allocation4 + $0x1a8] sm:$0xff]
    %v3522 = vld [vmem:[#allocation4 + $0x1b0] sm:$0xff]
    %v3523 = vld [vmem:[#allocation4 + $0x1b8] sm:$0xff]
    %v3524 = vld [vmem:[#allocation4 + $0x1c0] sm:$0xff]
    %v3525 = vld [vmem:[#allocation4 + $0x1c8] sm:$0xff]
    %v3526 = vld [vmem:[#allocation4 + $0x1d0] sm:$0xff]
    %v3527 = vld [vmem:[#allocation4 + $0x1d8] sm:$0xff]
    %v3528 = vld [vmem:[#allocation4 + $0x1e0] sm:$0xff]
    %v3529 = vld [vmem:[#allocation4 + $0x1e8] sm:$0xff]
    %v3530 = vld [vmem:[#allocation4 + $0x1f0] sm:$0xff]
    %v3531 = vld [vmem:[#allocation4 + $0x1f8] sm:$0xff]
    %v3532 = vld [vmem:[#allocation4 + $0x200] sm:$0xff]
    %v3533 = vld [vmem:[#allocation4 + $0x208] sm:$0xff]
    %v3534 = vld [vmem:[#allocation4 + $0x210] sm:$0xff]
    %v3535 = vld [vmem:[#allocation4 + $0x218] sm:$0xff]
    %v3536 = vld [vmem:[#allocation4 + $0x220] sm:$0xff]
    %v3537 = vld [vmem:[#allocation4 + $0x228] sm:$0xff]
    %v3538 = vld [vmem:[#allocation4 + $0x230] sm:$0xff]
    %v3539 = vld [vmem:[#allocation4 + $0x238] sm:$0xff]
    %v3540 = vld [vmem:[#allocation4 + $0x240] sm:$0xff]
    %v3541 = vld [vmem:[#allocation4 + $0x248] sm:$0xff]
    %v3542 = vld [vmem:[#allocation4 + $0x250] sm:$0xff]
    %v3543 = vld [vmem:[#allocation4 + $0x258] sm:$0xff]
    %v3544 = vld [vmem:[#allocation4 + $0x260] sm:$0xff]
    %v3545 = vld [vmem:[#allocation4 + $0x268] sm:$0xff]
    %v3546 = vld [vmem:[#allocation4 + $0x270] sm:$0xff]
    %v3547 = vld [vmem:[#allocation4 + $0x278] sm:$0xff]
    %v3548 = vld [vmem:[#allocation4 + $0x280] sm:$0xff]
    %v3549 = vld [vmem:[#allocation4 + $0x288] sm:$0xff]
    %v3550 = vld [vmem:[#allocation4 + $0x290] sm:$0xff]
    %v3551 = vld [vmem:[#allocation4 + $0x298] sm:$0xff]
    %v3552 = vld [vmem:[#allocation4 + $0x2a0] sm:$0xff]
    %v3553 = vld [vmem:[#allocation4 + $0x2a8] sm:$0xff]
    %v3554 = vld [vmem:[#allocation4 + $0x2b0] sm:$0xff]
    %v3555 = vld [vmem:[#allocation4 + $0x2b8] sm:$0xff]
    %v3556 = vld [vmem:[#allocation4 + $0x2c0] sm:$0xff]
    %v3557 = vld [vmem:[#allocation4 + $0x2c8] sm:$0xff]
    %v3558 = vld [vmem:[#allocation4 + $0x2d0] sm:$0xff]
    %v3559 = vld [vmem:[#allocation4 + $0x2d8] sm:$0xff]
    %v3560 = vld [vmem:[#allocation4 + $0x2e0] sm:$0xff]
    %v3561 = vld [vmem:[#allocation4 + $0x2e8] sm:$0xff]
    %v3562 = vld [vmem:[#allocation4 + $0x2f0] sm:$0xff]
    %v3563 = vld [vmem:[#allocation4 + $0x2f8] sm:$0xff]
    %v3564 = vld [vmem:[#allocation4 + $0x300] sm:$0xff]
    %v3565 = vld [vmem:[#allocation4 + $0x308] sm:$0xff]
    %v3566 = vld [vmem:[#allocation4 + $0x310] sm:$0xff]
    %v3567 = vld [vmem:[#allocation4 + $0x318] sm:$0xff]
    %v3568 = vld [vmem:[#allocation4 + $0x320] sm:$0xff]
    %v3569 = vld [vmem:[#allocation4 + $0x328] sm:$0xff]
    %v3570 = vld [vmem:[#allocation4 + $0x330] sm:$0xff]
    %v3571 = vld [vmem:[#allocation4 + $0x338] sm:$0xff]
    %v3572 = vld [vmem:[#allocation4 + $0x340] sm:$0xff]
    %v3573 = vld [vmem:[#allocation4 + $0x348] sm:$0xff]
    %v3574 = vld [vmem:[#allocation4 + $0x350] sm:$0xff]
    %v3575 = vld [vmem:[#allocation4 + $0x358] sm:$0xff]
    %v3576 = vld [vmem:[#allocation4 + $0x360] sm:$0xff]
    %v3577 = vld [vmem:[#allocation4 + $0x368] sm:$0xff]
    %v3578 = vld [vmem:[#allocation4 + $0x370] sm:$0xff]
    %v3579 = vld [vmem:[#allocation4 + $0x378] sm:$0xff]
    %v3580 = vld [vmem:[#allocation4 + $0x380] sm:$0xff]
    %v3581 = vld [vmem:[#allocation4 + $0x388] sm:$0xff]
    %v3582 = vld [vmem:[#allocation4 + $0x390] sm:$0xff]
    %v3583 = vld [vmem:[#allocation4 + $0x398] sm:$0xff]
    %v3584 = vld [vmem:[#allocation4 + $0x3a0] sm:$0xff]
    %v3585 = vld [vmem:[#allocation4 + $0x3a8] sm:$0xff]
    %v3586 = vld [vmem:[#allocation4 + $0x3b0] sm:$0xff]
    %v3587 = vld [vmem:[#allocation4 + $0x3b8] sm:$0xff]
    %v3588 = vld [vmem:[#allocation4 + $0x3c0] sm:$0xff]
    %v3589 = vld [vmem:[#allocation4 + $0x3c8] sm:$0xff]
    %v3590 = vld [vmem:[#allocation4 + $0x3d0] sm:$0xff]
    %v3591 = vld [vmem:[#allocation4 + $0x3d8] sm:$0xff]
    %v3592 = vld [vmem:[#allocation4 + $0x3e0] sm:$0xff]
    %v3593 = vld [vmem:[#allocation4 + $0x3e8] sm:$0xff]
    %v3594 = vld [vmem:[#allocation4 + $0x3f0] sm:$0xff]
    %v3595 = vld [vmem:[#allocation4 + $0x3f8] sm:$0xff]
    %v3596 = vunpack.c.l.s8.bf16 %v3468
    %v3597 = vunpack.c.l.s8.bf16 %v3469
    %v3598 = vunpack.c.l.s8.bf16 %v3470
    %v3599 = vunpack.c.l.s8.bf16 %v3471
    %v3600 = vunpack.c.h.s8.bf16 %v3468
    %v3601 = vunpack.c.h.s8.bf16 %v3469
    %v3602 = vunpack.c.h.s8.bf16 %v3470
    %v3603 = vunpack.c.h.s8.bf16 %v3471
    %v3604 = vunpack.c.l.s8.bf16 %v3472
    %v3605 = vunpack.c.l.s8.bf16 %v3473
    %v3606 = vunpack.c.l.s8.bf16 %v3474
    %v3607 = vunpack.c.l.s8.bf16 %v3475
    %v3608 = vunpack.c.h.s8.bf16 %v3472
    %v3609 = vunpack.c.h.s8.bf16 %v3473
    %v3610 = vunpack.c.h.s8.bf16 %v3474
    %v3611 = vunpack.c.h.s8.bf16 %v3475
    %v3612 = vunpack.c.l.s8.bf16 %v3476
    %v3613 = vunpack.c.l.s8.bf16 %v3477
    %v3614 = vunpack.c.l.s8.bf16 %v3478
    %v3615 = vunpack.c.l.s8.bf16 %v3479
    %v3616 = vunpack.c.h.s8.bf16 %v3476
    %v3617 = vunpack.c.h.s8.bf16 %v3477
    %v3618 = vunpack.c.h.s8.bf16 %v3478
    %v3619 = vunpack.c.h.s8.bf16 %v3479
    %v3620 = vunpack.c.l.s8.bf16 %v3480
    %v3621 = vunpack.c.l.s8.bf16 %v3481
    %v3622 = vunpack.c.l.s8.bf16 %v3482
    %v3623 = vunpack.c.l.s8.bf16 %v3483
    %v3624 = vunpack.c.h.s8.bf16 %v3480
    %v3625 = vunpack.c.h.s8.bf16 %v3481
    %v3626 = vunpack.c.h.s8.bf16 %v3482
    %v3627 = vunpack.c.h.s8.bf16 %v3483
    %v3628 = vunpack.c.l.s8.bf16 %v3484
    %v3629 = vunpack.c.l.s8.bf16 %v3485
    %v3630 = vunpack.c.l.s8.bf16 %v3486
    %v3631 = vunpack.c.l.s8.bf16 %v3487
    %v3632 = vunpack.c.h.s8.bf16 %v3484
    %v3633 = vunpack.c.h.s8.bf16 %v3485
    %v3634 = vunpack.c.h.s8.bf16 %v3486
    %v3635 = vunpack.c.h.s8.bf16 %v3487
    %v3636 = vunpack.c.l.s8.bf16 %v3488
    %v3637 = vunpack.c.l.s8.bf16 %v3489
    %v3638 = vunpack.c.l.s8.bf16 %v3490
    %v3639 = vunpack.c.l.s8.bf16 %v3491
    %v3640 = vunpack.c.h.s8.bf16 %v3488
    %v3641 = vunpack.c.h.s8.bf16 %v3489
    %v3642 = vunpack.c.h.s8.bf16 %v3490
    %v3643 = vunpack.c.h.s8.bf16 %v3491
    %v3644 = vunpack.c.l.s8.bf16 %v3492
    %v3645 = vunpack.c.l.s8.bf16 %v3493
    %v3646 = vunpack.c.l.s8.bf16 %v3494
    %v3647 = vunpack.c.l.s8.bf16 %v3495
    %v3648 = vunpack.c.h.s8.bf16 %v3492
    %v3649 = vunpack.c.h.s8.bf16 %v3493
    %v3650 = vunpack.c.h.s8.bf16 %v3494
    %v3651 = vunpack.c.h.s8.bf16 %v3495
    %v3652 = vunpack.c.l.s8.bf16 %v3496
    %v3653 = vunpack.c.l.s8.bf16 %v3497
    %v3654 = vunpack.c.l.s8.bf16 %v3498
    %v3655 = vunpack.c.l.s8.bf16 %v3499
    %v3656 = vunpack.c.h.s8.bf16 %v3496
    %v3657 = vunpack.c.h.s8.bf16 %v3497
    %v3658 = vunpack.c.h.s8.bf16 %v3498
    %v3659 = vunpack.c.h.s8.bf16 %v3499
    %v3660 = vunpack.c.l.s8.bf16 %v3500
    %v3661 = vunpack.c.l.s8.bf16 %v3501
    %v3662 = vunpack.c.l.s8.bf16 %v3502
    %v3663 = vunpack.c.l.s8.bf16 %v3503
    %v3664 = vunpack.c.h.s8.bf16 %v3500
    %v3665 = vunpack.c.h.s8.bf16 %v3501
    %v3666 = vunpack.c.h.s8.bf16 %v3502
    %v3667 = vunpack.c.h.s8.bf16 %v3503
    %v3668 = vunpack.c.l.s8.bf16 %v3504
    %v3669 = vunpack.c.l.s8.bf16 %v3505
    %v3670 = vunpack.c.l.s8.bf16 %v3506
    %v3671 = vunpack.c.l.s8.bf16 %v3507
    %v3672 = vunpack.c.h.s8.bf16 %v3504
    %v3673 = vunpack.c.h.s8.bf16 %v3505
    %v3674 = vunpack.c.h.s8.bf16 %v3506
    %v3675 = vunpack.c.h.s8.bf16 %v3507
    %v3676 = vunpack.c.l.s8.bf16 %v3508
    %v3677 = vunpack.c.l.s8.bf16 %v3509
    %v3678 = vunpack.c.l.s8.bf16 %v3510
    %v3679 = vunpack.c.l.s8.bf16 %v3511
    %v3680 = vunpack.c.h.s8.bf16 %v3508
    %v3681 = vunpack.c.h.s8.bf16 %v3509
    %v3682 = vunpack.c.h.s8.bf16 %v3510
    %v3683 = vunpack.c.h.s8.bf16 %v3511
    %v3684 = vunpack.c.l.s8.bf16 %v3512
    %v3685 = vunpack.c.l.s8.bf16 %v3513
    %v3686 = vunpack.c.l.s8.bf16 %v3514
    %v3687 = vunpack.c.l.s8.bf16 %v3515
    %v3688 = vunpack.c.h.s8.bf16 %v3512
    %v3689 = vunpack.c.h.s8.bf16 %v3513
    %v3690 = vunpack.c.h.s8.bf16 %v3514
    %v3691 = vunpack.c.h.s8.bf16 %v3515
    %v3692 = vunpack.c.l.s8.bf16 %v3516
    %v3693 = vunpack.c.l.s8.bf16 %v3517
    %v3694 = vunpack.c.l.s8.bf16 %v3518
    %v3695 = vunpack.c.l.s8.bf16 %v3519
    %v3696 = vunpack.c.h.s8.bf16 %v3516
    %v3697 = vunpack.c.h.s8.bf16 %v3517
    %v3698 = vunpack.c.h.s8.bf16 %v3518
    %v3699 = vunpack.c.h.s8.bf16 %v3519
    %v3700 = vunpack.c.l.s8.bf16 %v3520
    %v3701 = vunpack.c.l.s8.bf16 %v3521
    %v3702 = vunpack.c.l.s8.bf16 %v3522
    %v3703 = vunpack.c.l.s8.bf16 %v3523
    %v3704 = vunpack.c.h.s8.bf16 %v3520
    %v3705 = vunpack.c.h.s8.bf16 %v3521
    %v3706 = vunpack.c.h.s8.bf16 %v3522
    %v3707 = vunpack.c.h.s8.bf16 %v3523
    %v3708 = vunpack.c.l.s8.bf16 %v3524
    %v3709 = vunpack.c.l.s8.bf16 %v3525
    %v3710 = vunpack.c.l.s8.bf16 %v3526
    %v3711 = vunpack.c.l.s8.bf16 %v3527
    %v3712 = vunpack.c.h.s8.bf16 %v3524
    %v3713 = vunpack.c.h.s8.bf16 %v3525
    %v3714 = vunpack.c.h.s8.bf16 %v3526
    %v3715 = vunpack.c.h.s8.bf16 %v3527
    %v3716 = vunpack.c.l.s8.bf16 %v3528
    %v3717 = vunpack.c.l.s8.bf16 %v3529
    %v3718 = vunpack.c.l.s8.bf16 %v3530
    %v3719 = vunpack.c.l.s8.bf16 %v3531
    %v3720 = vunpack.c.h.s8.bf16 %v3528
    %v3721 = vunpack.c.h.s8.bf16 %v3529
    %v3722 = vunpack.c.h.s8.bf16 %v3530
    %v3723 = vunpack.c.h.s8.bf16 %v3531
    %v3724 = vunpack.c.l.s8.bf16 %v3532
    %v3725 = vunpack.c.l.s8.bf16 %v3533
    %v3726 = vunpack.c.l.s8.bf16 %v3534
    %v3727 = vunpack.c.l.s8.bf16 %v3535
    %v3728 = vunpack.c.h.s8.bf16 %v3532
    %v3729 = vunpack.c.h.s8.bf16 %v3533
    %v3730 = vunpack.c.h.s8.bf16 %v3534
    %v3731 = vunpack.c.h.s8.bf16 %v3535
    %v3732 = vunpack.c.l.s8.bf16 %v3536
    %v3733 = vunpack.c.l.s8.bf16 %v3537
    %v3734 = vunpack.c.l.s8.bf16 %v3538
    %v3735 = vunpack.c.l.s8.bf16 %v3539
    %v3736 = vunpack.c.h.s8.bf16 %v3536
    %v3737 = vunpack.c.h.s8.bf16 %v3537
    %v3738 = vunpack.c.h.s8.bf16 %v3538
    %v3739 = vunpack.c.h.s8.bf16 %v3539
    %v3740 = vunpack.c.l.s8.bf16 %v3540
    %v3741 = vunpack.c.l.s8.bf16 %v3541
    %v3742 = vunpack.c.l.s8.bf16 %v3542
    %v3743 = vunpack.c.l.s8.bf16 %v3543
    %v3744 = vunpack.c.h.s8.bf16 %v3540
    %v3745 = vunpack.c.h.s8.bf16 %v3541
    %v3746 = vunpack.c.h.s8.bf16 %v3542
    %v3747 = vunpack.c.h.s8.bf16 %v3543
    %v3748 = vunpack.c.l.s8.bf16 %v3544
    %v3749 = vunpack.c.l.s8.bf16 %v3545
    %v3750 = vunpack.c.l.s8.bf16 %v3546
    %v3751 = vunpack.c.l.s8.bf16 %v3547
    %v3752 = vunpack.c.h.s8.bf16 %v3544
    %v3753 = vunpack.c.h.s8.bf16 %v3545
    %v3754 = vunpack.c.h.s8.bf16 %v3546
    %v3755 = vunpack.c.h.s8.bf16 %v3547
    %v3756 = vunpack.c.l.s8.bf16 %v3548
    %v3757 = vunpack.c.l.s8.bf16 %v3549
    %v3758 = vunpack.c.l.s8.bf16 %v3550
    %v3759 = vunpack.c.l.s8.bf16 %v3551
    %v3760 = vunpack.c.h.s8.bf16 %v3548
    %v3761 = vunpack.c.h.s8.bf16 %v3549
    %v3762 = vunpack.c.h.s8.bf16 %v3550
    %v3763 = vunpack.c.h.s8.bf16 %v3551
    %v3764 = vunpack.c.l.s8.bf16 %v3552
    %v3765 = vunpack.c.l.s8.bf16 %v3553
    %v3766 = vunpack.c.l.s8.bf16 %v3554
    %v3767 = vunpack.c.l.s8.bf16 %v3555
    %v3768 = vunpack.c.h.s8.bf16 %v3552
    %v3769 = vunpack.c.h.s8.bf16 %v3553
    %v3770 = vunpack.c.h.s8.bf16 %v3554
    %v3771 = vunpack.c.h.s8.bf16 %v3555
    %v3772 = vunpack.c.l.s8.bf16 %v3556
    %v3773 = vunpack.c.l.s8.bf16 %v3557
    %v3774 = vunpack.c.l.s8.bf16 %v3558
    %v3775 = vunpack.c.l.s8.bf16 %v3559
    %v3776 = vunpack.c.h.s8.bf16 %v3556
    %v3777 = vunpack.c.h.s8.bf16 %v3557
    %v3778 = vunpack.c.h.s8.bf16 %v3558
    %v3779 = vunpack.c.h.s8.bf16 %v3559
    %v3780 = vunpack.c.l.s8.bf16 %v3560
    %v3781 = vunpack.c.l.s8.bf16 %v3561
    %v3782 = vunpack.c.l.s8.bf16 %v3562
    %v3783 = vunpack.c.l.s8.bf16 %v3563
    %v3784 = vunpack.c.h.s8.bf16 %v3560
    %v3785 = vunpack.c.h.s8.bf16 %v3561
    %v3786 = vunpack.c.h.s8.bf16 %v3562
    %v3787 = vunpack.c.h.s8.bf16 %v3563
    %v3788 = vunpack.c.l.s8.bf16 %v3564
    %v3789 = vunpack.c.l.s8.bf16 %v3565
    %v3790 = vunpack.c.l.s8.bf16 %v3566
    %v3791 = vunpack.c.l.s8.bf16 %v3567
    %v3792 = vunpack.c.h.s8.bf16 %v3564
    %v3793 = vunpack.c.h.s8.bf16 %v3565
    %v3794 = vunpack.c.h.s8.bf16 %v3566
    %v3795 = vunpack.c.h.s8.bf16 %v3567
    %v3796 = vunpack.c.l.s8.bf16 %v3568
    %v3797 = vunpack.c.l.s8.bf16 %v3569
    %v3798 = vunpack.c.l.s8.bf16 %v3570
    %v3799 = vunpack.c.l.s8.bf16 %v3571
    %v3800 = vunpack.c.h.s8.bf16 %v3568
    %v3801 = vunpack.c.h.s8.bf16 %v3569
    %v3802 = vunpack.c.h.s8.bf16 %v3570
    %v3803 = vunpack.c.h.s8.bf16 %v3571
    %v3804 = vunpack.c.l.s8.bf16 %v3572
    %v3805 = vunpack.c.l.s8.bf16 %v3573
    %v3806 = vunpack.c.l.s8.bf16 %v3574
    %v3807 = vunpack.c.l.s8.bf16 %v3575
    %v3808 = vunpack.c.h.s8.bf16 %v3572
    %v3809 = vunpack.c.h.s8.bf16 %v3573
    %v3810 = vunpack.c.h.s8.bf16 %v3574
    %v3811 = vunpack.c.h.s8.bf16 %v3575
    %v3812 = vunpack.c.l.s8.bf16 %v3576
    %v3813 = vunpack.c.l.s8.bf16 %v3577
    %v3814 = vunpack.c.l.s8.bf16 %v3578
    %v3815 = vunpack.c.l.s8.bf16 %v3579
    %v3816 = vunpack.c.h.s8.bf16 %v3576
    %v3817 = vunpack.c.h.s8.bf16 %v3577
    %v3818 = vunpack.c.h.s8.bf16 %v3578
    %v3819 = vunpack.c.h.s8.bf16 %v3579
    %v3820 = vunpack.c.l.s8.bf16 %v3580
    %v3821 = vunpack.c.l.s8.bf16 %v3581
    %v3822 = vunpack.c.l.s8.bf16 %v3582
    %v3823 = vunpack.c.l.s8.bf16 %v3583
    %v3824 = vunpack.c.h.s8.bf16 %v3580
    %v3825 = vunpack.c.h.s8.bf16 %v3581
    %v3826 = vunpack.c.h.s8.bf16 %v3582
    %v3827 = vunpack.c.h.s8.bf16 %v3583
    %v3828 = vunpack.c.l.s8.bf16 %v3584
    %v3829 = vunpack.c.l.s8.bf16 %v3585
    %v3830 = vunpack.c.l.s8.bf16 %v3586
    %v3831 = vunpack.c.l.s8.bf16 %v3587
    %v3832 = vunpack.c.h.s8.bf16 %v3584
    %v3833 = vunpack.c.h.s8.bf16 %v3585
    %v3834 = vunpack.c.h.s8.bf16 %v3586
    %v3835 = vunpack.c.h.s8.bf16 %v3587
    %v3836 = vunpack.c.l.s8.bf16 %v3588
    %v3837 = vunpack.c.l.s8.bf16 %v3589
    %v3838 = vunpack.c.l.s8.bf16 %v3590
    %v3839 = vunpack.c.l.s8.bf16 %v3591
    %v3840 = vunpack.c.h.s8.bf16 %v3588
    %v3841 = vunpack.c.h.s8.bf16 %v3589
    %v3842 = vunpack.c.h.s8.bf16 %v3590
    %v3843 = vunpack.c.h.s8.bf16 %v3591
    %v3844 = vunpack.c.l.s8.bf16 %v3592
    %v3845 = vunpack.c.l.s8.bf16 %v3593
    %v3846 = vunpack.c.l.s8.bf16 %v3594
    %v3847 = vunpack.c.l.s8.bf16 %v3595
    %v3848 = vunpack.c.h.s8.bf16 %v3592
    %v3849 = vunpack.c.h.s8.bf16 %v3593
    %v3850 = vunpack.c.h.s8.bf16 %v3594
    %v3851 = vunpack.c.h.s8.bf16 %v3595
    %v3852 = vpack.c.bf16 %v3452, %v3452
    %v3853 = vpack.c.bf16 %v3453, %v3453
    %v3854 = vpack.c.bf16 %v3454, %v3454
    %v3855 = vpack.c.bf16 %v3455, %v3455
    %v3856 = vpack.c.bf16 %v3456, %v3456
    %v3857 = vpack.c.bf16 %v3457, %v3457
    %v3858 = vpack.c.bf16 %v3458, %v3458
    %v3859 = vpack.c.bf16 %v3459, %v3459
    %v3860 = vld [vmem:[#allocation6] sm:$0xff]
    %v3861 = vld [vmem:[#allocation6 + $0x8] sm:$0xff]
    %v3862 = vld [vmem:[#allocation6 + $0x10] sm:$0xff]
    %v3863 = vld [vmem:[#allocation6 + $0x18] sm:$0xff]
    %v3864 = vld [vmem:[#allocation6 + $0x20] sm:$0xff]
    %v3865 = vld [vmem:[#allocation6 + $0x28] sm:$0xff]
    %v3866 = vld [vmem:[#allocation6 + $0x30] sm:$0xff]
    %v3867 = vld [vmem:[#allocation6 + $0x38] sm:$0xff]
    %v3868 = vld [vmem:[#allocation6 + $0x40] sm:$0xff]
    %v3869 = vld [vmem:[#allocation6 + $0x48] sm:$0xff]
    %v3870 = vld [vmem:[#allocation6 + $0x50] sm:$0xff]
    %v3871 = vld [vmem:[#allocation6 + $0x58] sm:$0xff]
    %v3872 = vld [vmem:[#allocation6 + $0x60] sm:$0xff]
    %v3873 = vld [vmem:[#allocation6 + $0x68] sm:$0xff]
    %v3874 = vld [vmem:[#allocation6 + $0x70] sm:$0xff]
    %v3875 = vld [vmem:[#allocation6 + $0x78] sm:$0xff]
    %v3876 = vld [vmem:[#allocation6 + $0x80] sm:$0xff]
    %v3877 = vld [vmem:[#allocation6 + $0x88] sm:$0xff]
    %v3878 = vld [vmem:[#allocation6 + $0x90] sm:$0xff]
    %v3879 = vld [vmem:[#allocation6 + $0x98] sm:$0xff]
    %v3880 = vld [vmem:[#allocation6 + $0xa0] sm:$0xff]
    %v3881 = vld [vmem:[#allocation6 + $0xa8] sm:$0xff]
    %v3882 = vld [vmem:[#allocation6 + $0xb0] sm:$0xff]
    %v3883 = vld [vmem:[#allocation6 + $0xb8] sm:$0xff]
    %v3884 = vld [vmem:[#allocation6 + $0xc0] sm:$0xff]
    %v3885 = vld [vmem:[#allocation6 + $0xc8] sm:$0xff]
    %v3886 = vld [vmem:[#allocation6 + $0xd0] sm:$0xff]
    %v3887 = vld [vmem:[#allocation6 + $0xd8] sm:$0xff]
    %v3888 = vld [vmem:[#allocation6 + $0xe0] sm:$0xff]
    %v3889 = vld [vmem:[#allocation6 + $0xe8] sm:$0xff]
    %v3890 = vld [vmem:[#allocation6 + $0xf0] sm:$0xff]
    %v3891 = vld [vmem:[#allocation6 + $0xf8] sm:$0xff]
    %v3892 = vld [vmem:[#allocation6 + $0x100] sm:$0xff]
    %v3893 = vld [vmem:[#allocation6 + $0x108] sm:$0xff]
    %v3894 = vld [vmem:[#allocation6 + $0x110] sm:$0xff]
    %v3895 = vld [vmem:[#allocation6 + $0x118] sm:$0xff]
    %v3896 = vld [vmem:[#allocation6 + $0x120] sm:$0xff]
    %v3897 = vld [vmem:[#allocation6 + $0x128] sm:$0xff]
    %v3898 = vld [vmem:[#allocation6 + $0x130] sm:$0xff]
    %v3899 = vld [vmem:[#allocation6 + $0x138] sm:$0xff]
    %v3900 = vld [vmem:[#allocation6 + $0x140] sm:$0xff]
    %v3901 = vld [vmem:[#allocation6 + $0x148] sm:$0xff]
    %v3902 = vld [vmem:[#allocation6 + $0x150] sm:$0xff]
    %v3903 = vld [vmem:[#allocation6 + $0x158] sm:$0xff]
    %v3904 = vld [vmem:[#allocation6 + $0x160] sm:$0xff]
    %v3905 = vld [vmem:[#allocation6 + $0x168] sm:$0xff]
    %v3906 = vld [vmem:[#allocation6 + $0x170] sm:$0xff]
    %v3907 = vld [vmem:[#allocation6 + $0x178] sm:$0xff]
    %v3908 = vld [vmem:[#allocation6 + $0x180] sm:$0xff]
    %v3909 = vld [vmem:[#allocation6 + $0x188] sm:$0xff]
    %v3910 = vld [vmem:[#allocation6 + $0x190] sm:$0xff]
    %v3911 = vld [vmem:[#allocation6 + $0x198] sm:$0xff]
    %v3912 = vld [vmem:[#allocation6 + $0x1a0] sm:$0xff]
    %v3913 = vld [vmem:[#allocation6 + $0x1a8] sm:$0xff]
    %v3914 = vld [vmem:[#allocation6 + $0x1b0] sm:$0xff]
    %v3915 = vld [vmem:[#allocation6 + $0x1b8] sm:$0xff]
    %v3916 = vld [vmem:[#allocation6 + $0x1c0] sm:$0xff]
    %v3917 = vld [vmem:[#allocation6 + $0x1c8] sm:$0xff]
    %v3918 = vld [vmem:[#allocation6 + $0x1d0] sm:$0xff]
    %v3919 = vld [vmem:[#allocation6 + $0x1d8] sm:$0xff]
    %v3920 = vld [vmem:[#allocation6 + $0x1e0] sm:$0xff]
    %v3921 = vld [vmem:[#allocation6 + $0x1e8] sm:$0xff]
    %v3922 = vld [vmem:[#allocation6 + $0x1f0] sm:$0xff]
    %v3923 = vld [vmem:[#allocation6 + $0x1f8] sm:$0xff]
    %v3924 = vld [vmem:[#allocation6 + $0x200] sm:$0xff]
    %v3925 = vld [vmem:[#allocation6 + $0x208] sm:$0xff]
    %v3926 = vld [vmem:[#allocation6 + $0x210] sm:$0xff]
    %v3927 = vld [vmem:[#allocation6 + $0x218] sm:$0xff]
    %v3928 = vld [vmem:[#allocation6 + $0x220] sm:$0xff]
    %v3929 = vld [vmem:[#allocation6 + $0x228] sm:$0xff]
    %v3930 = vld [vmem:[#allocation6 + $0x230] sm:$0xff]
    %v3931 = vld [vmem:[#allocation6 + $0x238] sm:$0xff]
    %v3932 = vld [vmem:[#allocation6 + $0x240] sm:$0xff]
    %v3933 = vld [vmem:[#allocation6 + $0x248] sm:$0xff]
    %v3934 = vld [vmem:[#allocation6 + $0x250] sm:$0xff]
    %v3935 = vld [vmem:[#allocation6 + $0x258] sm:$0xff]
    %v3936 = vld [vmem:[#allocation6 + $0x260] sm:$0xff]
    %v3937 = vld [vmem:[#allocation6 + $0x268] sm:$0xff]
    %v3938 = vld [vmem:[#allocation6 + $0x270] sm:$0xff]
    %v3939 = vld [vmem:[#allocation6 + $0x278] sm:$0xff]
    %v3940 = vld [vmem:[#allocation6 + $0x280] sm:$0xff]
    %v3941 = vld [vmem:[#allocation6 + $0x288] sm:$0xff]
    %v3942 = vld [vmem:[#allocation6 + $0x290] sm:$0xff]
    %v3943 = vld [vmem:[#allocation6 + $0x298] sm:$0xff]
    %v3944 = vld [vmem:[#allocation6 + $0x2a0] sm:$0xff]
    %v3945 = vld [vmem:[#allocation6 + $0x2a8] sm:$0xff]
    %v3946 = vld [vmem:[#allocation6 + $0x2b0] sm:$0xff]
    %v3947 = vld [vmem:[#allocation6 + $0x2b8] sm:$0xff]
    %v3948 = vld [vmem:[#allocation6 + $0x2c0] sm:$0xff]
    %v3949 = vld [vmem:[#allocation6 + $0x2c8] sm:$0xff]
    %v3950 = vld [vmem:[#allocation6 + $0x2d0] sm:$0xff]
    %v3951 = vld [vmem:[#allocation6 + $0x2d8] sm:$0xff]
    %v3952 = vld [vmem:[#allocation6 + $0x2e0] sm:$0xff]
    %v3953 = vld [vmem:[#allocation6 + $0x2e8] sm:$0xff]
    %v3954 = vld [vmem:[#allocation6 + $0x2f0] sm:$0xff]
    %v3955 = vld [vmem:[#allocation6 + $0x2f8] sm:$0xff]
    %v3956 = vld [vmem:[#allocation6 + $0x300] sm:$0xff]
    %v3957 = vld [vmem:[#allocation6 + $0x308] sm:$0xff]
    %v3958 = vld [vmem:[#allocation6 + $0x310] sm:$0xff]
    %v3959 = vld [vmem:[#allocation6 + $0x318] sm:$0xff]
    %v3960 = vld [vmem:[#allocation6 + $0x320] sm:$0xff]
    %v3961 = vld [vmem:[#allocation6 + $0x328] sm:$0xff]
    %v3962 = vld [vmem:[#allocation6 + $0x330] sm:$0xff]
    %v3963 = vld [vmem:[#allocation6 + $0x338] sm:$0xff]
    %v3964 = vld [vmem:[#allocation6 + $0x340] sm:$0xff]
    %v3965 = vld [vmem:[#allocation6 + $0x348] sm:$0xff]
    %v3966 = vld [vmem:[#allocation6 + $0x350] sm:$0xff]
    %v3967 = vld [vmem:[#allocation6 + $0x358] sm:$0xff]
    %v3968 = vld [vmem:[#allocation6 + $0x360] sm:$0xff]
    %v3969 = vld [vmem:[#allocation6 + $0x368] sm:$0xff]
    %v3970 = vld [vmem:[#allocation6 + $0x370] sm:$0xff]
    %v3971 = vld [vmem:[#allocation6 + $0x378] sm:$0xff]
    %v3972 = vld [vmem:[#allocation6 + $0x380] sm:$0xff]
    %v3973 = vld [vmem:[#allocation6 + $0x388] sm:$0xff]
    %v3974 = vld [vmem:[#allocation6 + $0x390] sm:$0xff]
    %v3975 = vld [vmem:[#allocation6 + $0x398] sm:$0xff]
    %v3976 = vld [vmem:[#allocation6 + $0x3a0] sm:$0xff]
    %v3977 = vld [vmem:[#allocation6 + $0x3a8] sm:$0xff]
    %v3978 = vld [vmem:[#allocation6 + $0x3b0] sm:$0xff]
    %v3979 = vld [vmem:[#allocation6 + $0x3b8] sm:$0xff]
    %v3980 = vld [vmem:[#allocation6 + $0x3c0] sm:$0xff]
    %v3981 = vld [vmem:[#allocation6 + $0x3c8] sm:$0xff]
    %v3982 = vld [vmem:[#allocation6 + $0x3d0] sm:$0xff]
    %v3983 = vld [vmem:[#allocation6 + $0x3d8] sm:$0xff]
    %v3984 = vld [vmem:[#allocation6 + $0x3e0] sm:$0xff]
    %v3985 = vld [vmem:[#allocation6 + $0x3e8] sm:$0xff]
    %v3986 = vld [vmem:[#allocation6 + $0x3f0] sm:$0xff]
    %v3987 = vld [vmem:[#allocation6 + $0x3f8] sm:$0xff]
    %v3988 = vunpack.c.l.s8.bf16 %v3860
    %v3989 = vunpack.c.l.s8.bf16 %v3861
    %v3990 = vunpack.c.l.s8.bf16 %v3862
    %v3991 = vunpack.c.l.s8.bf16 %v3863
    %v3992 = vunpack.c.h.s8.bf16 %v3860
    %v3993 = vunpack.c.h.s8.bf16 %v3861
    %v3994 = vunpack.c.h.s8.bf16 %v3862
    %v3995 = vunpack.c.h.s8.bf16 %v3863
    %v3996 = vunpack.c.l.s8.bf16 %v3864
    %v3997 = vunpack.c.l.s8.bf16 %v3865
    %v3998 = vunpack.c.l.s8.bf16 %v3866
    %v3999 = vunpack.c.l.s8.bf16 %v3867
    %v4000 = vunpack.c.h.s8.bf16 %v3864
    %v4001 = vunpack.c.h.s8.bf16 %v3865
    %v4002 = vunpack.c.h.s8.bf16 %v3866
    %v4003 = vunpack.c.h.s8.bf16 %v3867
    %v4004 = vunpack.c.l.s8.bf16 %v3868
    %v4005 = vunpack.c.l.s8.bf16 %v3869
    %v4006 = vunpack.c.l.s8.bf16 %v3870
    %v4007 = vunpack.c.l.s8.bf16 %v3871
    %v4008 = vunpack.c.h.s8.bf16 %v3868
    %v4009 = vunpack.c.h.s8.bf16 %v3869
    %v4010 = vunpack.c.h.s8.bf16 %v3870
    %v4011 = vunpack.c.h.s8.bf16 %v3871
    %v4012 = vunpack.c.l.s8.bf16 %v3872
    %v4013 = vunpack.c.l.s8.bf16 %v3873
    %v4014 = vunpack.c.l.s8.bf16 %v3874
    %v4015 = vunpack.c.l.s8.bf16 %v3875
    %v4016 = vunpack.c.h.s8.bf16 %v3872
    %v4017 = vunpack.c.h.s8.bf16 %v3873
    %v4018 = vunpack.c.h.s8.bf16 %v3874
    %v4019 = vunpack.c.h.s8.bf16 %v3875
    %v4020 = vunpack.c.l.s8.bf16 %v3876
    %v4021 = vunpack.c.l.s8.bf16 %v3877
    %v4022 = vunpack.c.l.s8.bf16 %v3878
    %v4023 = vunpack.c.l.s8.bf16 %v3879
    %v4024 = vunpack.c.h.s8.bf16 %v3876
    %v4025 = vunpack.c.h.s8.bf16 %v3877
    %v4026 = vunpack.c.h.s8.bf16 %v3878
    %v4027 = vunpack.c.h.s8.bf16 %v3879
    %v4028 = vunpack.c.l.s8.bf16 %v3880
    %v4029 = vunpack.c.l.s8.bf16 %v3881
    %v4030 = vunpack.c.l.s8.bf16 %v3882
    %v4031 = vunpack.c.l.s8.bf16 %v3883
    %v4032 = vunpack.c.h.s8.bf16 %v3880
    %v4033 = vunpack.c.h.s8.bf16 %v3881
    %v4034 = vunpack.c.h.s8.bf16 %v3882
    %v4035 = vunpack.c.h.s8.bf16 %v3883
    %v4036 = vunpack.c.l.s8.bf16 %v3884
    %v4037 = vunpack.c.l.s8.bf16 %v3885
    %v4038 = vunpack.c.l.s8.bf16 %v3886
    %v4039 = vunpack.c.l.s8.bf16 %v3887
    %v4040 = vunpack.c.h.s8.bf16 %v3884
    %v4041 = vunpack.c.h.s8.bf16 %v3885
    %v4042 = vunpack.c.h.s8.bf16 %v3886
    %v4043 = vunpack.c.h.s8.bf16 %v3887
    %v4044 = vunpack.c.l.s8.bf16 %v3888
    %v4045 = vunpack.c.l.s8.bf16 %v3889
    %v4046 = vunpack.c.l.s8.bf16 %v3890
    %v4047 = vunpack.c.l.s8.bf16 %v3891
    %v4048 = vunpack.c.h.s8.bf16 %v3888
    %v4049 = vunpack.c.h.s8.bf16 %v3889
    %v4050 = vunpack.c.h.s8.bf16 %v3890
    %v4051 = vunpack.c.h.s8.bf16 %v3891
    %v4052 = vunpack.c.l.s8.bf16 %v3892
    %v4053 = vunpack.c.l.s8.bf16 %v3893
    %v4054 = vunpack.c.l.s8.bf16 %v3894
    %v4055 = vunpack.c.l.s8.bf16 %v3895
    %v4056 = vunpack.c.h.s8.bf16 %v3892
    %v4057 = vunpack.c.h.s8.bf16 %v3893
    %v4058 = vunpack.c.h.s8.bf16 %v3894
    %v4059 = vunpack.c.h.s8.bf16 %v3895
    %v4060 = vunpack.c.l.s8.bf16 %v3896
    %v4061 = vunpack.c.l.s8.bf16 %v3897
    %v4062 = vunpack.c.l.s8.bf16 %v3898
    %v4063 = vunpack.c.l.s8.bf16 %v3899
    %v4064 = vunpack.c.h.s8.bf16 %v3896
    %v4065 = vunpack.c.h.s8.bf16 %v3897
    %v4066 = vunpack.c.h.s8.bf16 %v3898
    %v4067 = vunpack.c.h.s8.bf16 %v3899
    %v4068 = vunpack.c.l.s8.bf16 %v3900
    %v4069 = vunpack.c.l.s8.bf16 %v3901
    %v4070 = vunpack.c.l.s8.bf16 %v3902
    %v4071 = vunpack.c.l.s8.bf16 %v3903
    %v4072 = vunpack.c.h.s8.bf16 %v3900
    %v4073 = vunpack.c.h.s8.bf16 %v3901
    %v4074 = vunpack.c.h.s8.bf16 %v3902
    %v4075 = vunpack.c.h.s8.bf16 %v3903
    %v4076 = vunpack.c.l.s8.bf16 %v3904
    %v4077 = vunpack.c.l.s8.bf16 %v3905
    %v4078 = vunpack.c.l.s8.bf16 %v3906
    %v4079 = vunpack.c.l.s8.bf16 %v3907
    %v4080 = vunpack.c.h.s8.bf16 %v3904
    %v4081 = vunpack.c.h.s8.bf16 %v3905
    %v4082 = vunpack.c.h.s8.bf16 %v3906
    %v4083 = vunpack.c.h.s8.bf16 %v3907
    %v4084 = vunpack.c.l.s8.bf16 %v3908
    %v4085 = vunpack.c.l.s8.bf16 %v3909
    %v4086 = vunpack.c.l.s8.bf16 %v3910
    %v4087 = vunpack.c.l.s8.bf16 %v3911
    %v4088 = vunpack.c.h.s8.bf16 %v3908
    %v4089 = vunpack.c.h.s8.bf16 %v3909
    %v4090 = vunpack.c.h.s8.bf16 %v3910
    %v4091 = vunpack.c.h.s8.bf16 %v3911
    %v4092 = vunpack.c.l.s8.bf16 %v3912
    %v4093 = vunpack.c.l.s8.bf16 %v3913
    %v4094 = vunpack.c.l.s8.bf16 %v3914
    %v4095 = vunpack.c.l.s8.bf16 %v3915
    %v4096 = vunpack.c.h.s8.bf16 %v3912
    %v4097 = vunpack.c.h.s8.bf16 %v3913
    %v4098 = vunpack.c.h.s8.bf16 %v3914
    %v4099 = vunpack.c.h.s8.bf16 %v3915
    %v4100 = vunpack.c.l.s8.bf16 %v3916
    %v4101 = vunpack.c.l.s8.bf16 %v3917
    %v4102 = vunpack.c.l.s8.bf16 %v3918
    %v4103 = vunpack.c.l.s8.bf16 %v3919
    %v4104 = vunpack.c.h.s8.bf16 %v3916
    %v4105 = vunpack.c.h.s8.bf16 %v3917
    %v4106 = vunpack.c.h.s8.bf16 %v3918
    %v4107 = vunpack.c.h.s8.bf16 %v3919
    %v4108 = vunpack.c.l.s8.bf16 %v3920
    %v4109 = vunpack.c.l.s8.bf16 %v3921
    %v4110 = vunpack.c.l.s8.bf16 %v3922
    %v4111 = vunpack.c.l.s8.bf16 %v3923
    %v4112 = vunpack.c.h.s8.bf16 %v3920
    %v4113 = vunpack.c.h.s8.bf16 %v3921
    %v4114 = vunpack.c.h.s8.bf16 %v3922
    %v4115 = vunpack.c.h.s8.bf16 %v3923
    %v4116 = vunpack.c.l.s8.bf16 %v3924
    %v4117 = vunpack.c.l.s8.bf16 %v3925
    %v4118 = vunpack.c.l.s8.bf16 %v3926
    %v4119 = vunpack.c.l.s8.bf16 %v3927
    %v4120 = vunpack.c.h.s8.bf16 %v3924
    %v4121 = vunpack.c.h.s8.bf16 %v3925
    %v4122 = vunpack.c.h.s8.bf16 %v3926
    %v4123 = vunpack.c.h.s8.bf16 %v3927
    %v4124 = vunpack.c.l.s8.bf16 %v3928
    %v4125 = vunpack.c.l.s8.bf16 %v3929
    %v4126 = vunpack.c.l.s8.bf16 %v3930
    %v4127 = vunpack.c.l.s8.bf16 %v3931
    %v4128 = vunpack.c.h.s8.bf16 %v3928
    %v4129 = vunpack.c.h.s8.bf16 %v3929
    %v4130 = vunpack.c.h.s8.bf16 %v3930
    %v4131 = vunpack.c.h.s8.bf16 %v3931
    %v4132 = vunpack.c.l.s8.bf16 %v3932
    %v4133 = vunpack.c.l.s8.bf16 %v3933
    %v4134 = vunpack.c.l.s8.bf16 %v3934
    %v4135 = vunpack.c.l.s8.bf16 %v3935
    %v4136 = vunpack.c.h.s8.bf16 %v3932
    %v4137 = vunpack.c.h.s8.bf16 %v3933
    %v4138 = vunpack.c.h.s8.bf16 %v3934
    %v4139 = vunpack.c.h.s8.bf16 %v3935
    %v4140 = vunpack.c.l.s8.bf16 %v3936
    %v4141 = vunpack.c.l.s8.bf16 %v3937
    %v4142 = vunpack.c.l.s8.bf16 %v3938
    %v4143 = vunpack.c.l.s8.bf16 %v3939
    %v4144 = vunpack.c.h.s8.bf16 %v3936
    %v4145 = vunpack.c.h.s8.bf16 %v3937
    %v4146 = vunpack.c.h.s8.bf16 %v3938
    %v4147 = vunpack.c.h.s8.bf16 %v3939
    %v4148 = vunpack.c.l.s8.bf16 %v3940
    %v4149 = vunpack.c.l.s8.bf16 %v3941
    %v4150 = vunpack.c.l.s8.bf16 %v3942
    %v4151 = vunpack.c.l.s8.bf16 %v3943
    %v4152 = vunpack.c.h.s8.bf16 %v3940
    %v4153 = vunpack.c.h.s8.bf16 %v3941
    %v4154 = vunpack.c.h.s8.bf16 %v3942
    %v4155 = vunpack.c.h.s8.bf16 %v3943
    %v4156 = vunpack.c.l.s8.bf16 %v3944
    %v4157 = vunpack.c.l.s8.bf16 %v3945
    %v4158 = vunpack.c.l.s8.bf16 %v3946
    %v4159 = vunpack.c.l.s8.bf16 %v3947
    %v4160 = vunpack.c.h.s8.bf16 %v3944
    %v4161 = vunpack.c.h.s8.bf16 %v3945
    %v4162 = vunpack.c.h.s8.bf16 %v3946
    %v4163 = vunpack.c.h.s8.bf16 %v3947
    %v4164 = vunpack.c.l.s8.bf16 %v3948
    %v4165 = vunpack.c.l.s8.bf16 %v3949
    %v4166 = vunpack.c.l.s8.bf16 %v3950
    %v4167 = vunpack.c.l.s8.bf16 %v3951
    %v4168 = vunpack.c.h.s8.bf16 %v3948
    %v4169 = vunpack.c.h.s8.bf16 %v3949
    %v4170 = vunpack.c.h.s8.bf16 %v3950
    %v4171 = vunpack.c.h.s8.bf16 %v3951
    %v4172 = vunpack.c.l.s8.bf16 %v3952
    %v4173 = vunpack.c.l.s8.bf16 %v3953
    %v4174 = vunpack.c.l.s8.bf16 %v3954
    %v4175 = vunpack.c.l.s8.bf16 %v3955
    %v4176 = vunpack.c.h.s8.bf16 %v3952
    %v4177 = vunpack.c.h.s8.bf16 %v3953
    %v4178 = vunpack.c.h.s8.bf16 %v3954
    %v4179 = vunpack.c.h.s8.bf16 %v3955
    %v4180 = vunpack.c.l.s8.bf16 %v3956
    %v4181 = vunpack.c.l.s8.bf16 %v3957
    %v4182 = vunpack.c.l.s8.bf16 %v3958
    %v4183 = vunpack.c.l.s8.bf16 %v3959
    %v4184 = vunpack.c.h.s8.bf16 %v3956
    %v4185 = vunpack.c.h.s8.bf16 %v3957
    %v4186 = vunpack.c.h.s8.bf16 %v3958
    %v4187 = vunpack.c.h.s8.bf16 %v3959
    %v4188 = vunpack.c.l.s8.bf16 %v3960
    %v4189 = vunpack.c.l.s8.bf16 %v3961
    %v4190 = vunpack.c.l.s8.bf16 %v3962
    %v4191 = vunpack.c.l.s8.bf16 %v3963
    %v4192 = vunpack.c.h.s8.bf16 %v3960
    %v4193 = vunpack.c.h.s8.bf16 %v3961
    %v4194 = vunpack.c.h.s8.bf16 %v3962
    %v4195 = vunpack.c.h.s8.bf16 %v3963
    %v4196 = vunpack.c.l.s8.bf16 %v3964
    %v4197 = vunpack.c.l.s8.bf16 %v3965
    %v4198 = vunpack.c.l.s8.bf16 %v3966
    %v4199 = vunpack.c.l.s8.bf16 %v3967
    %v4200 = vunpack.c.h.s8.bf16 %v3964
    %v4201 = vunpack.c.h.s8.bf16 %v3965
    %v4202 = vunpack.c.h.s8.bf16 %v3966
    %v4203 = vunpack.c.h.s8.bf16 %v3967
    %v4204 = vunpack.c.l.s8.bf16 %v3968
    %v4205 = vunpack.c.l.s8.bf16 %v3969
    %v4206 = vunpack.c.l.s8.bf16 %v3970
    %v4207 = vunpack.c.l.s8.bf16 %v3971
    %v4208 = vunpack.c.h.s8.bf16 %v3968
    %v4209 = vunpack.c.h.s8.bf16 %v3969
    %v4210 = vunpack.c.h.s8.bf16 %v3970
    %v4211 = vunpack.c.h.s8.bf16 %v3971
    %v4212 = vunpack.c.l.s8.bf16 %v3972
    %v4213 = vunpack.c.l.s8.bf16 %v3973
    %v4214 = vunpack.c.l.s8.bf16 %v3974
    %v4215 = vunpack.c.l.s8.bf16 %v3975
    %v4216 = vunpack.c.h.s8.bf16 %v3972
    %v4217 = vunpack.c.h.s8.bf16 %v3973
    %v4218 = vunpack.c.h.s8.bf16 %v3974
    %v4219 = vunpack.c.h.s8.bf16 %v3975
    %v4220 = vunpack.c.l.s8.bf16 %v3976
    %v4221 = vunpack.c.l.s8.bf16 %v3977
    %v4222 = vunpack.c.l.s8.bf16 %v3978
    %v4223 = vunpack.c.l.s8.bf16 %v3979
    %v4224 = vunpack.c.h.s8.bf16 %v3976
    %v4225 = vunpack.c.h.s8.bf16 %v3977
    %v4226 = vunpack.c.h.s8.bf16 %v3978
    %v4227 = vunpack.c.h.s8.bf16 %v3979
    %v4228 = vunpack.c.l.s8.bf16 %v3980
    %v4229 = vunpack.c.l.s8.bf16 %v3981
    %v4230 = vunpack.c.l.s8.bf16 %v3982
    %v4231 = vunpack.c.l.s8.bf16 %v3983
    %v4232 = vunpack.c.h.s8.bf16 %v3980
    %v4233 = vunpack.c.h.s8.bf16 %v3981
    %v4234 = vunpack.c.h.s8.bf16 %v3982
    %v4235 = vunpack.c.h.s8.bf16 %v3983
    %v4236 = vunpack.c.l.s8.bf16 %v3984
    %v4237 = vunpack.c.l.s8.bf16 %v3985
    %v4238 = vunpack.c.l.s8.bf16 %v3986
    %v4239 = vunpack.c.l.s8.bf16 %v3987
    %v4240 = vunpack.c.h.s8.bf16 %v3984
    %v4241 = vunpack.c.h.s8.bf16 %v3985
    %v4242 = vunpack.c.h.s8.bf16 %v3986
    %v4243 = vunpack.c.h.s8.bf16 %v3987
    %4244 = vmatprep.subr.bf16.mxu0 %v3989
    %4245 = vmatpush1.bf16.msra.mxu0 %v3988
    %4246 = vmatprep.subr.bf16.mxu0 %v3993
    %4247 = vmatpush1.bf16.msra.mxu0 %v3992
    %4248 = vmatprep.subr.bf16.mxu0 %v3997
    %4249 = vmatpush1.bf16.msra.mxu0 %v3996
    %4250 = vmatprep.subr.bf16.mxu0 %v4001
    %4251 = vmatpush1.bf16.msra.mxu0 %v4000
    %4252 = vmatprep.subr.bf16.mxu0 %v4005
    %4253 = vmatpush1.bf16.msra.mxu0 %v4004
    %4254 = vmatprep.subr.bf16.mxu0 %v4009
    %4255 = vmatpush1.bf16.msra.mxu0 %v4008
    %4256 = vmatprep.subr.bf16.mxu0 %v4013
    %4257 = vmatpush1.bf16.msra.mxu0 %v4012
    %4258 = vmatprep.subr.bf16.mxu0 %v4017
    %4259 = vmatpush1.bf16.msra.mxu0 %v4016
    %4260 = vmatprep.subr.bf16.mxu0 %v4021
    %4261 = vmatpush1.bf16.msra.mxu0 %v4020
    %4262 = vmatprep.subr.bf16.mxu0 %v4025
    %4263 = vmatpush1.bf16.msra.mxu0 %v4024
    %4264 = vmatprep.subr.bf16.mxu0 %v4029
    %4265 = vmatpush1.bf16.msra.mxu0 %v4028
    %4266 = vmatprep.subr.bf16.mxu0 %v4033
    %4267 = vmatpush1.bf16.msra.mxu0 %v4032
    %4268 = vmatprep.subr.bf16.mxu0 %v4037
    %4269 = vmatpush1.bf16.msra.mxu0 %v4036
    %4270 = vmatprep.subr.bf16.mxu0 %v4041
    %4271 = vmatpush1.bf16.msra.mxu0 %v4040
    %4272 = vmatprep.subr.bf16.mxu0 %v4045
    %4273 = vmatpush1.bf16.msra.mxu0 %v4044
    %4274 = vmatprep.subr.bf16.mxu0 %v4049
    %4275 = vmatpush1.bf16.msra.mxu0 %v4048
    %4276 = vmatprep.mubr.bf16.mxu0 %v3853
    %4277 = vmatmul.mubr.bf16.gmra.mrb[0].mxu0 %v3852
    %v4278 = vpop.f32.mrb[0].mxu0
    %v4279 = vadd.f32 0.0, %v4278
    %v4280 = vpop.f32.mrb[0].mxu0
    %v4281 = vadd.f32 0.0, %v4280
    %v4282 = vpop.f32.mrb[0].mxu0
    %v4283 = vpop.f32.mrb[0].mxu0
    %4284 = vdwg.mxu0
    %4285 = vmatprep.subr.bf16.mxu0 %v4053
    %4286 = vmatpush1.bf16.msra.mxu0 %v4052
    %4287 = vmatprep.subr.bf16.mxu0 %v4057
    %4288 = vmatpush1.bf16.msra.mxu0 %v4056
    %4289 = vmatprep.subr.bf16.mxu0 %v4061
    %4290 = vmatpush1.bf16.msra.mxu0 %v4060
    %4291 = vmatprep.subr.bf16.mxu0 %v4065
    %4292 = vmatpush1.bf16.msra.mxu0 %v4064
    %4293 = vmatprep.subr.bf16.mxu0 %v4069
    %4294 = vmatpush1.bf16.msra.mxu0 %v4068
    %4295 = vmatprep.subr.bf16.mxu0 %v4073
    %4296 = vmatpush1.bf16.msra.mxu0 %v4072
    %4297 = vmatprep.subr.bf16.mxu0 %v4077
    %4298 = vmatpush1.bf16.msra.mxu0 %v4076
    %4299 = vmatprep.subr.bf16.mxu0 %v4081
    %4300 = vmatpush1.bf16.msra.mxu0 %v4080
    %4301 = vmatprep.subr.bf16.mxu0 %v4085
    %4302 = vmatpush1.bf16.msra.mxu0 %v4084
    %4303 = vmatprep.subr.bf16.mxu0 %v4089
    %4304 = vmatpush1.bf16.msra.mxu0 %v4088
    %4305 = vmatprep.subr.bf16.mxu0 %v4093
    %4306 = vmatpush1.bf16.msra.mxu0 %v4092
    %4307 = vmatprep.subr.bf16.mxu0 %v4097
    %4308 = vmatpush1.bf16.msra.mxu0 %v4096
    %4309 = vmatprep.subr.bf16.mxu0 %v4101
    %4310 = vmatpush1.bf16.msra.mxu0 %v4100
    %4311 = vmatprep.subr.bf16.mxu0 %v4105
    %4312 = vmatpush1.bf16.msra.mxu0 %v4104
    %4313 = vmatprep.subr.bf16.mxu0 %v4109
    %4314 = vmatpush1.bf16.msra.mxu0 %v4108
    %4315 = vmatprep.subr.bf16.mxu0 %v4113
    %4316 = vmatpush1.bf16.msra.mxu0 %v4112
    %4317 = vmatprep.mubr.bf16.mxu0 %v3855
    %4318 = vmatmul.mubr.bf16.gmra.mrb[0].mxu0 %v3854
    %v4319 = vpop.f32.mrb[0].mxu0
    %v4320 = vadd.f32 %v4279, %v4319
    %v4321 = vpop.f32.mrb[0].mxu0
    %v4322 = vadd.f32 %v4281, %v4321
    %v4323 = vpop.f32.mrb[0].mxu0
    %v4324 = vpop.f32.mrb[0].mxu0
    %4325 = vdwg.mxu0
    %4326 = vmatprep.subr.bf16.mxu0 %v4117
    %4327 = vmatpush1.bf16.msra.mxu0 %v4116
    %4328 = vmatprep.subr.bf16.mxu0 %v4121
    %4329 = vmatpush1.bf16.msra.mxu0 %v4120
    %4330 = vmatprep.subr.bf16.mxu0 %v4125
    %4331 = vmatpush1.bf16.msra.mxu0 %v4124
    %4332 = vmatprep.subr.bf16.mxu0 %v4129
    %4333 = vmatpush1.bf16.msra.mxu0 %v4128
    %4334 = vmatprep.subr.bf16.mxu0 %v4133
    %4335 = vmatpush1.bf16.msra.mxu0 %v4132
    %4336 = vmatprep.subr.bf16.mxu0 %v4137
    %4337 = vmatpush1.bf16.msra.mxu0 %v4136
    %4338 = vmatprep.subr.bf16.mxu0 %v4141
    %4339 = vmatpush1.bf16.msra.mxu0 %v4140
    %4340 = vmatprep.subr.bf16.mxu0 %v4145
    %4341 = vmatpush1.bf16.msra.mxu0 %v4144
    %4342 = vmatprep.subr.bf16.mxu0 %v4149
    %4343 = vmatpush1.bf16.msra.mxu0 %v4148
    %4344 = vmatprep.subr.bf16.mxu0 %v4153
    %4345 = vmatpush1.bf16.msra.mxu0 %v4152
    %4346 = vmatprep.subr.bf16.mxu0 %v4157
    %4347 = vmatpush1.bf16.msra.mxu0 %v4156
    %4348 = vmatprep.subr.bf16.mxu0 %v4161
    %4349 = vmatpush1.bf16.msra.mxu0 %v4160
    %4350 = vmatprep.subr.bf16.mxu0 %v4165
    %4351 = vmatpush1.bf16.msra.mxu0 %v4164
    %4352 = vmatprep.subr.bf16.mxu0 %v4169
    %4353 = vmatpush1.bf16.msra.mxu0 %v4168
    %4354 = vmatprep.subr.bf16.mxu0 %v4173
    %4355 = vmatpush1.bf16.msra.mxu0 %v4172
    %4356 = vmatprep.subr.bf16.mxu0 %v4177
    %4357 = vmatpush1.bf16.msra.mxu0 %v4176
    %4358 = vmatprep.mubr.bf16.mxu0 %v3857
    %4359 = vmatmul.mubr.bf16.gmra.mrb[0].mxu0 %v3856
    %v4360 = vpop.f32.mrb[0].mxu0
    %v4361 = vadd.f32 %v4320, %v4360
    %v4362 = vpop.f32.mrb[0].mxu0
    %v4363 = vadd.f32 %v4322, %v4362
    %v4364 = vpop.f32.mrb[0].mxu0
    %v4365 = vpop.f32.mrb[0].mxu0
    %4366 = vdwg.mxu0
    %4367 = vmatprep.subr.bf16.mxu0 %v4181
    %4368 = vmatpush1.bf16.msra.mxu0 %v4180
    %4369 = vmatprep.subr.bf16.mxu0 %v4185
    %4370 = vmatpush1.bf16.msra.mxu0 %v4184
    %4371 = vmatprep.subr.bf16.mxu0 %v4189
    %4372 = vmatpush1.bf16.msra.mxu0 %v4188
    %4373 = vmatprep.subr.bf16.mxu0 %v4193
    %4374 = vmatpush1.bf16.msra.mxu0 %v4192
    %4375 = vmatprep.subr.bf16.mxu0 %v4197
    %4376 = vmatpush1.bf16.msra.mxu0 %v4196
    %4377 = vmatprep.subr.bf16.mxu0 %v4201
    %4378 = vmatpush1.bf16.msra.mxu0 %v4200
    %4379 = vmatprep.subr.bf16.mxu0 %v4205
    %4380 = vmatpush1.bf16.msra.mxu0 %v4204
    %4381 = vmatprep.subr.bf16.mxu0 %v4209
    %4382 = vmatpush1.bf16.msra.mxu0 %v4208
    %4383 = vmatprep.subr.bf16.mxu0 %v4213
    %4384 = vmatpush1.bf16.msra.mxu0 %v4212
    %4385 = vmatprep.subr.bf16.mxu0 %v4217
    %4386 = vmatpush1.bf16.msra.mxu0 %v4216
    %4387 = vmatprep.subr.bf16.mxu0 %v4221
    %4388 = vmatpush1.bf16.msra.mxu0 %v4220
    %4389 = vmatprep.subr.bf16.mxu0 %v4225
    %4390 = vmatpush1.bf16.msra.mxu0 %v4224
    %4391 = vmatprep.subr.bf16.mxu0 %v4229
    %4392 = vmatpush1.bf16.msra.mxu0 %v4228
    %4393 = vmatprep.subr.bf16.mxu0 %v4233
    %4394 = vmatpush1.bf16.msra.mxu0 %v4232
    %4395 = vmatprep.subr.bf16.mxu0 %v4237
    %4396 = vmatpush1.bf16.msra.mxu0 %v4236
    %4397 = vmatprep.subr.bf16.mxu0 %v4241
    %4398 = vmatpush1.bf16.msra.mxu0 %v4240
    %4399 = vmatprep.mubr.bf16.mxu0 %v3859
    %4400 = vmatmul.mubr.bf16.gmra.mrb[0].mxu0 %v3858
    %v4401 = vpop.f32.mrb[0].mxu0
    %v4402 = vadd.f32 %v4361, %v4401
    %v4403 = vpop.f32.mrb[0].mxu0
    %v4404 = vadd.f32 %v4363, %v4403
    %v4405 = vpop.f32.mrb[0].mxu0
    %v4406 = vpop.f32.mrb[0].mxu0
    %4407 = vdwg.mxu0
    %4408 = vmatprep.subr.bf16.mxu0 %v3991
    %4409 = vmatpush1.bf16.msra.mxu0 %v3990
    %4410 = vmatprep.subr.bf16.mxu0 %v3995
    %4411 = vmatpush1.bf16.msra.mxu0 %v3994
    %4412 = vmatprep.subr.bf16.mxu0 %v3999
    %4413 = vmatpush1.bf16.msra.mxu0 %v3998
    %4414 = vmatprep.subr.bf16.mxu0 %v4003
    %4415 = vmatpush1.bf16.msra.mxu0 %v4002
    %4416 = vmatprep.subr.bf16.mxu0 %v4007
    %4417 = vmatpush1.bf16.msra.mxu0 %v4006
    %4418 = vmatprep.subr.bf16.mxu0 %v4011
    %4419 = vmatpush1.bf16.msra.mxu0 %v4010
    %4420 = vmatprep.subr.bf16.mxu0 %v4015
    %4421 = vmatpush1.bf16.msra.mxu0 %v4014
    %4422 = vmatprep.subr.bf16.mxu0 %v4019
    %4423 = vmatpush1.bf16.msra.mxu0 %v4018
    %4424 = vmatprep.subr.bf16.mxu0 %v4023
    %4425 = vmatpush1.bf16.msra.mxu0 %v4022
    %4426 = vmatprep.subr.bf16.mxu0 %v4027
    %4427 = vmatpush1.bf16.msra.mxu0 %v4026
    %4428 = vmatprep.subr.bf16.mxu0 %v4031
    %4429 = vmatpush1.bf16.msra.mxu0 %v4030
    %4430 = vmatprep.subr.bf16.mxu0 %v4035
    %4431 = vmatpush1.bf16.msra.mxu0 %v4034
    %4432 = vmatprep.subr.bf16.mxu0 %v4039
    %4433 = vmatpush1.bf16.msra.mxu0 %v4038
    %4434 = vmatprep.subr.bf16.mxu0 %v4043
    %4435 = vmatpush1.bf16.msra.mxu0 %v4042
    %4436 = vmatprep.subr.bf16.mxu0 %v4047
    %4437 = vmatpush1.bf16.msra.mxu0 %v4046
    %4438 = vmatprep.subr.bf16.mxu0 %v4051
    %4439 = vmatpush1.bf16.msra.mxu0 %v4050
    %4440 = vmatprep.mubr.bf16.mxu0 %v3853
    %4441 = vmatmul.mubr.bf16.gmra.mrb[0].mxu0 %v3852
    %v4442 = vpop.f32.mrb[0].mxu0
    %v4443 = vadd.f32 0.0, %v4442
    %v4444 = vpop.f32.mrb[0].mxu0
    %v4445 = vadd.f32 0.0, %v4444
    %v4446 = vpop.f32.mrb[0].mxu0
    %v4447 = vpop.f32.mrb[0].mxu0
    %4448 = vdwg.mxu0
    %4449 = vmatprep.subr.bf16.mxu0 %v4055
    %4450 = vmatpush1.bf16.msra.mxu0 %v4054
    %4451 = vmatprep.subr.bf16.mxu0 %v4059
    %4452 = vmatpush1.bf16.msra.mxu0 %v4058
    %4453 = vmatprep.subr.bf16.mxu0 %v4063
    %4454 = vmatpush1.bf16.msra.mxu0 %v4062
    %4455 = vmatprep.subr.bf16.mxu0 %v4067
    %4456 = vmatpush1.bf16.msra.mxu0 %v4066
    %4457 = vmatprep.subr.bf16.mxu0 %v4071
    %4458 = vmatpush1.bf16.msra.mxu0 %v4070
    %4459 = vmatprep.subr.bf16.mxu0 %v4075
    %4460 = vmatpush1.bf16.msra.mxu0 %v4074
    %4461 = vmatprep.subr.bf16.mxu0 %v4079
    %4462 = vmatpush1.bf16.msra.mxu0 %v4078
    %4463 = vmatprep.subr.bf16.mxu0 %v4083
    %4464 = vmatpush1.bf16.msra.mxu0 %v4082
    %4465 = vmatprep.subr.bf16.mxu0 %v4087
    %4466 = vmatpush1.bf16.msra.mxu0 %v4086
    %4467 = vmatprep.subr.bf16.mxu0 %v4091
    %4468 = vmatpush1.bf16.msra.mxu0 %v4090
    %4469 = vmatprep.subr.bf16.mxu0 %v4095
    %4470 = vmatpush1.bf16.msra.mxu0 %v4094
    %4471 = vmatprep.subr.bf16.mxu0 %v4099
    %4472 = vmatpush1.bf16.msra.mxu0 %v4098
    %4473 = vmatprep.subr.bf16.mxu0 %v4103
    %4474 = vmatpush1.bf16.msra.mxu0 %v4102
    %4475 = vmatprep.subr.bf16.mxu0 %v4107
    %4476 = vmatpush1.bf16.msra.mxu0 %v4106
    %4477 = vmatprep.subr.bf16.mxu0 %v4111
    %4478 = vmatpush1.bf16.msra.mxu0 %v4110
    %4479 = vmatprep.subr.bf16.mxu0 %v4115
    %4480 = vmatpush1.bf16.msra.mxu0 %v4114
    %4481 = vmatprep.mubr.bf16.mxu0 %v3855
    %4482 = vmatmul.mubr.bf16.gmra.mrb[0].mxu0 %v3854
    %v4483 = vpop.f32.mrb[0].mxu0
    %v4484 = vadd.f32 %v4443, %v4483
    %v4485 = vpop.f32.mrb[0].mxu0
    %v4486 = vadd.f32 %v4445, %v4485
    %v4487 = vpop.f32.mrb[0].mxu0
    %v4488 = vpop.f32.mrb[0].mxu0
    %4489 = vdwg.mxu0
    %4490 = vmatprep.subr.bf16.mxu0 %v4119
    %4491 = vmatpush1.bf16.msra.mxu0 %v4118
    %4492 = vmatprep.subr.bf16.mxu0 %v4123
    %4493 = vmatpush1.bf16.msra.mxu0 %v4122
    %4494 = vmatprep.subr.bf16.mxu0 %v4127
    %4495 = vmatpush1.bf16.msra.mxu0 %v4126
    %4496 = vmatprep.subr.bf16.mxu0 %v4131
    %4497 = vmatpush1.bf16.msra.mxu0 %v4130
    %4498 = vmatprep.subr.bf16.mxu0 %v4135
    %4499 = vmatpush1.bf16.msra.mxu0 %v4134
    %4500 = vmatprep.subr.bf16.mxu0 %v4139
    %4501 = vmatpush1.bf16.msra.mxu0 %v4138
    %4502 = vmatprep.subr.bf16.mxu0 %v4143
    %4503 = vmatpush1.bf16.msra.mxu0 %v4142
    %4504 = vmatprep.subr.bf16.mxu0 %v4147
    %4505 = vmatpush1.bf16.msra.mxu0 %v4146
    %4506 = vmatprep.subr.bf16.mxu0 %v4151
    %4507 = vmatpush1.bf16.msra.mxu0 %v4150
    %4508 = vmatprep.subr.bf16.mxu0 %v4155
    %4509 = vmatpush1.bf16.msra.mxu0 %v4154
    %4510 = vmatprep.subr.bf16.mxu0 %v4159
    %4511 = vmatpush1.bf16.msra.mxu0 %v4158
    %4512 = vmatprep.subr.bf16.mxu0 %v4163
    %4513 = vmatpush1.bf16.msra.mxu0 %v4162
    %4514 = vmatprep.subr.bf16.mxu0 %v4167
    %4515 = vmatpush1.bf16.msra.mxu0 %v4166
    %4516 = vmatprep.subr.bf16.mxu0 %v4171
    %4517 = vmatpush1.bf16.msra.mxu0 %v4170
    %4518 = vmatprep.subr.bf16.mxu0 %v4175
    %4519 = vmatpush1.bf16.msra.mxu0 %v4174
    %4520 = vmatprep.subr.bf16.mxu0 %v4179
    %4521 = vmatpush1.bf16.msra.mxu0 %v4178
    %4522 = vmatprep.mubr.bf16.mxu0 %v3857
    %4523 = vmatmul.mubr.bf16.gmra.mrb[0].mxu0 %v3856
    %v4524 = vpop.f32.mrb[0].mxu0
    %v4525 = vadd.f32 %v4484, %v4524
    %v4526 = vpop.f32.mrb[0].mxu0
    %v4527 = vadd.f32 %v4486, %v4526
    %v4528 = vpop.f32.mrb[0].mxu0
    %v4529 = vpop.f32.mrb[0].mxu0
    %4530 = vdwg.mxu0
    %4531 = vmatprep.subr.bf16.mxu0 %v4183
    %4532 = vmatpush1.bf16.msra.mxu0 %v4182
    %4533 = vmatprep.subr.bf16.mxu0 %v4187
    %4534 = vmatpush1.bf16.msra.mxu0 %v4186
    %4535 = vmatprep.subr.bf16.mxu0 %v4191
    %4536 = vmatpush1.bf16.msra.mxu0 %v4190
    %4537 = vmatprep.subr.bf16.mxu0 %v4195
    %4538 = vmatpush1.bf16.msra.mxu0 %v4194
    %4539 = vmatprep.subr.bf16.mxu0 %v4199
    %4540 = vmatpush1.bf16.msra.mxu0 %v4198
    %4541 = vmatprep.subr.bf16.mxu0 %v4203
    %4542 = vmatpush1.bf16.msra.mxu0 %v4202
    %4543 = vmatprep.subr.bf16.mxu0 %v4207
    %4544 = vmatpush1.bf16.msra.mxu0 %v4206
    %4545 = vmatprep.subr.bf16.mxu0 %v4211
    %4546 = vmatpush1.bf16.msra.mxu0 %v4210
    %4547 = vmatprep.subr.bf16.mxu0 %v4215
    %4548 = vmatpush1.bf16.msra.mxu0 %v4214
    %4549 = vmatprep.subr.bf16.mxu0 %v4219
    %4550 = vmatpush1.bf16.msra.mxu0 %v4218
    %4551 = vmatprep.subr.bf16.mxu0 %v4223
    %4552 = vmatpush1.bf16.msra.mxu0 %v4222
    %4553 = vmatprep.subr.bf16.mxu0 %v4227
    %4554 = vmatpush1.bf16.msra.mxu0 %v4226
    %4555 = vmatprep.subr.bf16.mxu0 %v4231
    %4556 = vmatpush1.bf16.msra.mxu0 %v4230
    %4557 = vmatprep.subr.bf16.mxu0 %v4235
    %4558 = vmatpush1.bf16.msra.mxu0 %v4234
    %4559 = vmatprep.subr.bf16.mxu0 %v4239
    %4560 = vmatpush1.bf16.msra.mxu0 %v4238
    %4561 = vmatprep.subr.bf16.mxu0 %v4243
    %4562 = vmatpush1.bf16.msra.mxu0 %v4242
    %4563 = vmatprep.mubr.bf16.mxu0 %v3859
    %4564 = vmatmul.mubr.bf16.gmra.mrb[0].mxu0 %v3858
    %v4565 = vpop.f32.mrb[0].mxu0
    %v4566 = vadd.f32 %v4525, %v4565
    %v4567 = vpop.f32.mrb[0].mxu0
    %v4568 = vadd.f32 %v4527, %v4567
    %v4569 = vpop.f32.mrb[0].mxu0
    %v4570 = vpop.f32.mrb[0].mxu0
    %4571 = vdwg.mxu0
    %4572 = vmatprep.subr.bf16.mxu0 %v3597
    %4573 = vmatpush1.bf16.msra.mxu0 %v3596
    %4574 = vmatprep.subr.bf16.mxu0 %v3601
    %4575 = vmatpush1.bf16.msra.mxu0 %v3600
    %4576 = vmatprep.subr.bf16.mxu0 %v3605
    %4577 = vmatpush1.bf16.msra.mxu0 %v3604
    %4578 = vmatprep.subr.bf16.mxu0 %v3609
    %4579 = vmatpush1.bf16.msra.mxu0 %v3608
    %4580 = vmatprep.subr.bf16.mxu0 %v3613
    %4581 = vmatpush1.bf16.msra.mxu0 %v3612
    %4582 = vmatprep.subr.bf16.mxu0 %v3617
    %4583 = vmatpush1.bf16.msra.mxu0 %v3616
    %4584 = vmatprep.subr.bf16.mxu0 %v3621
    %4585 = vmatpush1.bf16.msra.mxu0 %v3620
    %4586 = vmatprep.subr.bf16.mxu0 %v3625
    %4587 = vmatpush1.bf16.msra.mxu0 %v3624
    %4588 = vmatprep.subr.bf16.mxu0 %v3629
    %4589 = vmatpush1.bf16.msra.mxu0 %v3628
    %4590 = vmatprep.subr.bf16.mxu0 %v3633
    %4591 = vmatpush1.bf16.msra.mxu0 %v3632
    %4592 = vmatprep.subr.bf16.mxu0 %v3637
    %4593 = vmatpush1.bf16.msra.mxu0 %v3636
    %4594 = vmatprep.subr.bf16.mxu0 %v3641
    %4595 = vmatpush1.bf16.msra.mxu0 %v3640
    %4596 = vmatprep.subr.bf16.mxu0 %v3645
    %4597 = vmatpush1.bf16.msra.mxu0 %v3644
    %4598 = vmatprep.subr.bf16.mxu0 %v3649
    %4599 = vmatpush1.bf16.msra.mxu0 %v3648
    %4600 = vmatprep.subr.bf16.mxu0 %v3653
    %4601 = vmatpush1.bf16.msra.mxu0 %v3652
    %4602 = vmatprep.subr.bf16.mxu0 %v3657
    %4603 = vmatpush1.bf16.msra.mxu0 %v3656
    %4604 = vmatprep.mubr.bf16.mxu0 %v3461
    %4605 = vmatmul.mubr.bf16.gmra.mrb[0].mxu0 %v3460
    %v4606 = vpop.f32.mrb[0].mxu0
    %v4607 = vadd.f32 %v4402, %v4606
    %v4608 = vpop.f32.mrb[0].mxu0
    %v4609 = vadd.f32 %v4404, %v4608
    %v4610 = vpop.f32.mrb[0].mxu0
    %v4611 = vpop.f32.mrb[0].mxu0
    %4612 = vdwg.mxu0
    %4613 = vmatprep.subr.bf16.mxu0 %v3661
    %4614 = vmatpush1.bf16.msra.mxu0 %v3660
    %4615 = vmatprep.subr.bf16.mxu0 %v3665
    %4616 = vmatpush1.bf16.msra.mxu0 %v3664
    %4617 = vmatprep.subr.bf16.mxu0 %v3669
    %4618 = vmatpush1.bf16.msra.mxu0 %v3668
    %4619 = vmatprep.subr.bf16.mxu0 %v3673
    %4620 = vmatpush1.bf16.msra.mxu0 %v3672
    %4621 = vmatprep.subr.bf16.mxu0 %v3677
    %4622 = vmatpush1.bf16.msra.mxu0 %v3676
    %4623 = vmatprep.subr.bf16.mxu0 %v3681
    %4624 = vmatpush1.bf16.msra.mxu0 %v3680
    %4625 = vmatprep.subr.bf16.mxu0 %v3685
    %4626 = vmatpush1.bf16.msra.mxu0 %v3684
    %4627 = vmatprep.subr.bf16.mxu0 %v3689
    %4628 = vmatpush1.bf16.msra.mxu0 %v3688
    %4629 = vmatprep.subr.bf16.mxu0 %v3693
    %4630 = vmatpush1.bf16.msra.mxu0 %v3692
    %4631 = vmatprep.subr.bf16.mxu0 %v3697
    %4632 = vmatpush1.bf16.msra.mxu0 %v3696
    %4633 = vmatprep.subr.bf16.mxu0 %v3701
    %4634 = vmatpush1.bf16.msra.mxu0 %v3700
    %4635 = vmatprep.subr.bf16.mxu0 %v3705
    %4636 = vmatpush1.bf16.msra.mxu0 %v3704
    %4637 = vmatprep.subr.bf16.mxu0 %v3709
    %4638 = vmatpush1.bf16.msra.mxu0 %v3708
    %4639 = vmatprep.subr.bf16.mxu0 %v3713
    %4640 = vmatpush1.bf16.msra.mxu0 %v3712
    %4641 = vmatprep.subr.bf16.mxu0 %v3717
    %4642 = vmatpush1.bf16.msra.mxu0 %v3716
    %4643 = vmatprep.subr.bf16.mxu0 %v3721
    %4644 = vmatpush1.bf16.msra.mxu0 %v3720
    %4645 = vmatprep.mubr.bf16.mxu0 %v3463
    %4646 = vmatmul.mubr.bf16.gmra.mrb[0].mxu0 %v3462
    %v4647 = vpop.f32.mrb[0].mxu0
    %v4648 = vadd.f32 %v4607, %v4647
    %v4649 = vpop.f32.mrb[0].mxu0
    %v4650 = vadd.f32 %v4609, %v4649
    %v4651 = vpop.f32.mrb[0].mxu0
    %v4652 = vpop.f32.mrb[0].mxu0
    %4653 = vdwg.mxu0
    %4654 = vmatprep.subr.bf16.mxu0 %v3725
    %4655 = vmatpush1.bf16.msra.mxu0 %v3724
    %4656 = vmatprep.subr.bf16.mxu0 %v3729
    %4657 = vmatpush1.bf16.msra.mxu0 %v3728
    %4658 = vmatprep.subr.bf16.mxu0 %v3733
    %4659 = vmatpush1.bf16.msra.mxu0 %v3732
    %4660 = vmatprep.subr.bf16.mxu0 %v3737
    %4661 = vmatpush1.bf16.msra.mxu0 %v3736
    %4662 = vmatprep.subr.bf16.mxu0 %v3741
    %4663 = vmatpush1.bf16.msra.mxu0 %v3740
    %4664 = vmatprep.subr.bf16.mxu0 %v3745
    %4665 = vmatpush1.bf16.msra.mxu0 %v3744
    %4666 = vmatprep.subr.bf16.mxu0 %v3749
    %4667 = vmatpush1.bf16.msra.mxu0 %v3748
    %4668 = vmatprep.subr.bf16.mxu0 %v3753
    %4669 = vmatpush1.bf16.msra.mxu0 %v3752
    %4670 = vmatprep.subr.bf16.mxu0 %v3757
    %4671 = vmatpush1.bf16.msra.mxu0 %v3756
    %4672 = vmatprep.subr.bf16.mxu0 %v3761
    %4673 = vmatpush1.bf16.msra.mxu0 %v3760
    %4674 = vmatprep.subr.bf16.mxu0 %v3765
    %4675 = vmatpush1.bf16.msra.mxu0 %v3764
    %4676 = vmatprep.subr.bf16.mxu0 %v3769
    %4677 = vmatpush1.bf16.msra.mxu0 %v3768
    %4678 = vmatprep.subr.bf16.mxu0 %v3773
    %4679 = vmatpush1.bf16.msra.mxu0 %v3772
    %4680 = vmatprep.subr.bf16.mxu0 %v3777
    %4681 = vmatpush1.bf16.msra.mxu0 %v3776
    %4682 = vmatprep.subr.bf16.mxu0 %v3781
    %4683 = vmatpush1.bf16.msra.mxu0 %v3780
    %4684 = vmatprep.subr.bf16.mxu0 %v3785
    %4685 = vmatpush1.bf16.msra.mxu0 %v3784
    %4686 = vmatprep.mubr.bf16.mxu0 %v3465
    %4687 = vmatmul.mubr.bf16.gmra.mrb[0].mxu0 %v3464
    %v4688 = vpop.f32.mrb[0].mxu0
    %v4689 = vadd.f32 %v4648, %v4688
    %v4690 = vpop.f32.mrb[0].mxu0
    %v4691 = vadd.f32 %v4650, %v4690
    %v4692 = vpop.f32.mrb[0].mxu0
    %v4693 = vpop.f32.mrb[0].mxu0
    %4694 = vdwg.mxu0
    %4695 = vmatprep.subr.bf16.mxu0 %v3789
    %4696 = vmatpush1.bf16.msra.mxu0 %v3788
    %4697 = vmatprep.subr.bf16.mxu0 %v3793
    %4698 = vmatpush1.bf16.msra.mxu0 %v3792
    %4699 = vmatprep.subr.bf16.mxu0 %v3797
    %4700 = vmatpush1.bf16.msra.mxu0 %v3796
    %4701 = vmatprep.subr.bf16.mxu0 %v3801
    %4702 = vmatpush1.bf16.msra.mxu0 %v3800
    %4703 = vmatprep.subr.bf16.mxu0 %v3805
    %4704 = vmatpush1.bf16.msra.mxu0 %v3804
    %4705 = vmatprep.subr.bf16.mxu0 %v3809
    %4706 = vmatpush1.bf16.msra.mxu0 %v3808
    %4707 = vmatprep.subr.bf16.mxu0 %v3813
    %4708 = vmatpush1.bf16.msra.mxu0 %v3812
    %4709 = vmatprep.subr.bf16.mxu0 %v3817
    %4710 = vmatpush1.bf16.msra.mxu0 %v3816
    %4711 = vmatprep.subr.bf16.mxu0 %v3821
    %4712 = vmatpush1.bf16.msra.mxu0 %v3820
    %4713 = vmatprep.subr.bf16.mxu0 %v3825
    %4714 = vmatpush1.bf16.msra.mxu0 %v3824
    %4715 = vmatprep.subr.bf16.mxu0 %v3829
    %4716 = vmatpush1.bf16.msra.mxu0 %v3828
    %4717 = vmatprep.subr.bf16.mxu0 %v3833
    %4718 = vmatpush1.bf16.msra.mxu0 %v3832
    %4719 = vmatprep.subr.bf16.mxu0 %v3837
    %4720 = vmatpush1.bf16.msra.mxu0 %v3836
    %4721 = vmatprep.subr.bf16.mxu0 %v3841
    %4722 = vmatpush1.bf16.msra.mxu0 %v3840
    %4723 = vmatprep.subr.bf16.mxu0 %v3845
    %4724 = vmatpush1.bf16.msra.mxu0 %v3844
    %4725 = vmatprep.subr.bf16.mxu0 %v3849
    %4726 = vmatpush1.bf16.msra.mxu0 %v3848
    %4727 = vmatprep.mubr.bf16.mxu0 %v3467
    %4728 = vmatmul.mubr.bf16.gmra.mrb[0].mxu0 %v3466
    %v4729 = vpop.f32.mrb[0].mxu0
    %v4730 = vadd.f32 %v4689, %v4729
    %v4731 = vpop.f32.mrb[0].mxu0
    %v4732 = vadd.f32 %v4691, %v4731
    %v4733 = vpop.f32.mrb[0].mxu0
    %v4734 = vpop.f32.mrb[0].mxu0
    %4735 = vdwg.mxu0
    %4736 = vmatprep.subr.bf16.mxu0 %v3599
    %4737 = vmatpush1.bf16.msra.mxu0 %v3598
    %4738 = vmatprep.subr.bf16.mxu0 %v3603
    %4739 = vmatpush1.bf16.msra.mxu0 %v3602
    %4740 = vmatprep.subr.bf16.mxu0 %v3607
    %4741 = vmatpush1.bf16.msra.mxu0 %v3606
    %4742 = vmatprep.subr.bf16.mxu0 %v3611
    %4743 = vmatpush1.bf16.msra.mxu0 %v3610
    %4744 = vmatprep.subr.bf16.mxu0 %v3615
    %4745 = vmatpush1.bf16.msra.mxu0 %v3614
    %4746 = vmatprep.subr.bf16.mxu0 %v3619
    %4747 = vmatpush1.bf16.msra.mxu0 %v3618
    %4748 = vmatprep.subr.bf16.mxu0 %v3623
    %4749 = vmatpush1.bf16.msra.mxu0 %v3622
    %4750 = vmatprep.subr.bf16.mxu0 %v3627
    %4751 = vmatpush1.bf16.msra.mxu0 %v3626
    %4752 = vmatprep.subr.bf16.mxu0 %v3631
    %4753 = vmatpush1.bf16.msra.mxu0 %v3630
    %4754 = vmatprep.subr.bf16.mxu0 %v3635
    %4755 = vmatpush1.bf16.msra.mxu0 %v3634
    %4756 = vmatprep.subr.bf16.mxu0 %v3639
    %4757 = vmatpush1.bf16.msra.mxu0 %v3638
    %4758 = vmatprep.subr.bf16.mxu0 %v3643
    %4759 = vmatpush1.bf16.msra.mxu0 %v3642
    %4760 = vmatprep.subr.bf16.mxu0 %v3647
    %4761 = vmatpush1.bf16.msra.mxu0 %v3646
    %4762 = vmatprep.subr.bf16.mxu0 %v3651
    %4763 = vmatpush1.bf16.msra.mxu0 %v3650
    %4764 = vmatprep.subr.bf16.mxu0 %v3655
    %4765 = vmatpush1.bf16.msra.mxu0 %v3654
    %4766 = vmatprep.subr.bf16.mxu0 %v3659
    %4767 = vmatpush1.bf16.msra.mxu0 %v3658
    %4768 = vmatprep.mubr.bf16.mxu0 %v3461
    %4769 = vmatmul.mubr.bf16.gmra.mrb[0].mxu0 %v3460
    %v4770 = vpop.f32.mrb[0].mxu0
    %v4771 = vadd.f32 %v4566, %v4770
    %v4772 = vpop.f32.mrb[0].mxu0
    %v4773 = vadd.f32 %v4568, %v4772
    %v4774 = vpop.f32.mrb[0].mxu0
    %v4775 = vpop.f32.mrb[0].mxu0
    %4776 = vdwg.mxu0
    %4777 = vmatprep.subr.bf16.mxu0 %v3663
    %4778 = vmatpush1.bf16.msra.mxu0 %v3662
    %4779 = vmatprep.subr.bf16.mxu0 %v3667
    %4780 = vmatpush1.bf16.msra.mxu0 %v3666
    %4781 = vmatprep.subr.bf16.mxu0 %v3671
    %4782 = vmatpush1.bf16.msra.mxu0 %v3670
    %4783 = vmatprep.subr.bf16.mxu0 %v3675
    %4784 = vmatpush1.bf16.msra.mxu0 %v3674
    %4785 = vmatprep.subr.bf16.mxu0 %v3679
    %4786 = vmatpush1.bf16.msra.mxu0 %v3678
    %4787 = vmatprep.subr.bf16.mxu0 %v3683
    %4788 = vmatpush1.bf16.msra.mxu0 %v3682
    %4789 = vmatprep.subr.bf16.mxu0 %v3687
    %4790 = vmatpush1.bf16.msra.mxu0 %v3686
    %4791 = vmatprep.subr.bf16.mxu0 %v3691
    %4792 = vmatpush1.bf16.msra.mxu0 %v3690
    %4793 = vmatprep.subr.bf16.mxu0 %v3695
    %4794 = vmatpush1.bf16.msra.mxu0 %v3694
    %4795 = vmatprep.subr.bf16.mxu0 %v3699
    %4796 = vmatpush1.bf16.msra.mxu0 %v3698
    %4797 = vmatprep.subr.bf16.mxu0 %v3703
    %4798 = vmatpush1.bf16.msra.mxu0 %v3702
    %4799 = vmatprep.subr.bf16.mxu0 %v3707
    %4800 = vmatpush1.bf16.msra.mxu0 %v3706
    %4801 = vmatprep.subr.bf16.mxu0 %v3711
    %4802 = vmatpush1.bf16.msra.mxu0 %v3710
    %4803 = vmatprep.subr.bf16.mxu0 %v3715
    %4804 = vmatpush1.bf16.msra.mxu0 %v3714
    %4805 = vmatprep.subr.bf16.mxu0 %v3719
    %4806 = vmatpush1.bf16.msra.mxu0 %v3718
    %4807 = vmatprep.subr.bf16.mxu0 %v3723
    %4808 = vmatpush1.bf16.msra.mxu0 %v3722
    %4809 = vmatprep.mubr.bf16.mxu0 %v3463
    %4810 = vmatmul.mubr.bf16.gmra.mrb[0].mxu0 %v3462
    %v4811 = vpop.f32.mrb[0].mxu0
    %v4812 = vadd.f32 %v4771, %v4811
    %v4813 = vpop.f32.mrb[0].mxu0
    %v4814 = vadd.f32 %v4773, %v4813
    %v4815 = vpop.f32.mrb[0].mxu0
    %v4816 = vpop.f32.mrb[0].mxu0
    %4817 = vdwg.mxu0
    %4818 = vmatprep.subr.bf16.mxu0 %v3727
    %4819 = vmatpush1.bf16.msra.mxu0 %v3726
    %4820 = vmatprep.subr.bf16.mxu0 %v3731
    %4821 = vmatpush1.bf16.msra.mxu0 %v3730
    %4822 = vmatprep.subr.bf16.mxu0 %v3735
    %4823 = vmatpush1.bf16.msra.mxu0 %v3734
    %4824 = vmatprep.subr.bf16.mxu0 %v3739
    %4825 = vmatpush1.bf16.msra.mxu0 %v3738
    %4826 = vmatprep.subr.bf16.mxu0 %v3743
    %4827 = vmatpush1.bf16.msra.mxu0 %v3742
    %4828 = vmatprep.subr.bf16.mxu0 %v3747
    %4829 = vmatpush1.bf16.msra.mxu0 %v3746
    %4830 = vmatprep.subr.bf16.mxu0 %v3751
    %4831 = vmatpush1.bf16.msra.mxu0 %v3750
    %4832 = vmatprep.subr.bf16.mxu0 %v3755
    %4833 = vmatpush1.bf16.msra.mxu0 %v3754
    %4834 = vmatprep.subr.bf16.mxu0 %v3759
    %4835 = vmatpush1.bf16.msra.mxu0 %v3758
    %4836 = vmatprep.subr.bf16.mxu0 %v3763
    %4837 = vmatpush1.bf16.msra.mxu0 %v3762
    %4838 = vmatprep.subr.bf16.mxu0 %v3767
    %4839 = vmatpush1.bf16.msra.mxu0 %v3766
    %4840 = vmatprep.subr.bf16.mxu0 %v3771
    %4841 = vmatpush1.bf16.msra.mxu0 %v3770
    %4842 = vmatprep.subr.bf16.mxu0 %v3775
    %4843 = vmatpush1.bf16.msra.mxu0 %v3774
    %4844 = vmatprep.subr.bf16.mxu0 %v3779
    %4845 = vmatpush1.bf16.msra.mxu0 %v3778
    %4846 = vmatprep.subr.bf16.mxu0 %v3783
    %4847 = vmatpush1.bf16.msra.mxu0 %v3782
    %4848 = vmatprep.subr.bf16.mxu0 %v3787
    %4849 = vmatpush1.bf16.msra.mxu0 %v3786
    %4850 = vmatprep.mubr.bf16.mxu0 %v3465
    %4851 = vmatmul.mubr.bf16.gmra.mrb[0].mxu0 %v3464
    %v4852 = vpop.f32.mrb[0].mxu0
    %v4853 = vadd.f32 %v4812, %v4852
    %v4854 = vpop.f32.mrb[0].mxu0
    %v4855 = vadd.f32 %v4814, %v4854
    %v4856 = vpop.f32.mrb[0].mxu0
    %v4857 = vpop.f32.mrb[0].mxu0
    %4858 = vdwg.mxu0
    %4859 = vmatprep.subr.bf16.mxu0 %v3791
    %4860 = vmatpush1.bf16.msra.mxu0 %v3790
    %4861 = vmatprep.subr.bf16.mxu0 %v3795
    %4862 = vmatpush1.bf16.msra.mxu0 %v3794
    %4863 = vmatprep.subr.bf16.mxu0 %v3799
    %4864 = vmatpush1.bf16.msra.mxu0 %v3798
    %4865 = vmatprep.subr.bf16.mxu0 %v3803
    %4866 = vmatpush1.bf16.msra.mxu0 %v3802
    %4867 = vmatprep.subr.bf16.mxu0 %v3807
    %4868 = vmatpush1.bf16.msra.mxu0 %v3806
    %4869 = vmatprep.subr.bf16.mxu0 %v3811
    %4870 = vmatpush1.bf16.msra.mxu0 %v3810
    %4871 = vmatprep.subr.bf16.mxu0 %v3815
    %4872 = vmatpush1.bf16.msra.mxu0 %v3814
    %4873 = vmatprep.subr.bf16.mxu0 %v3819
    %4874 = vmatpush1.bf16.msra.mxu0 %v3818
    %4875 = vmatprep.subr.bf16.mxu0 %v3823
    %4876 = vmatpush1.bf16.msra.mxu0 %v3822
    %4877 = vmatprep.subr.bf16.mxu0 %v3827
    %4878 = vmatpush1.bf16.msra.mxu0 %v3826
    %4879 = vmatprep.subr.bf16.mxu0 %v3831
    %4880 = vmatpush1.bf16.msra.mxu0 %v3830
    %4881 = vmatprep.subr.bf16.mxu0 %v3835
    %4882 = vmatpush1.bf16.msra.mxu0 %v3834
    %4883 = vmatprep.subr.bf16.mxu0 %v3839
    %4884 = vmatpush1.bf16.msra.mxu0 %v3838
    %4885 = vmatprep.subr.bf16.mxu0 %v3843
    %4886 = vmatpush1.bf16.msra.mxu0 %v3842
    %4887 = vmatprep.subr.bf16.mxu0 %v3847
    %4888 = vmatpush1.bf16.msra.mxu0 %v3846
    %4889 = vmatprep.subr.bf16.mxu0 %v3851
    %4890 = vmatpush1.bf16.msra.mxu0 %v3850
    %4891 = vmatprep.mubr.bf16.mxu0 %v3467
    %4892 = vmatmul.mubr.bf16.gmra.mrb[0].mxu0 %v3466
    %v4893 = vpop.f32.mrb[0].mxu0
    %v4894 = vadd.f32 %v4853, %v4893
    %v4895 = vpop.f32.mrb[0].mxu0
    %v4896 = vadd.f32 %v4855, %v4895
    %v4897 = vpop.f32.mrb[0].mxu0
    %v4898 = vpop.f32.mrb[0].mxu0
    %4899 = vdwg.mxu0
    %v4900 = vld [vmem:[%s6 + $0x18] sm:$0xf]
    %v4902 = vlaneseq
    %v4903 = vshrl.u32 %v4902, 7
    %v4904 = vsub.s32 0, %v4903
    %v4905 = vrot.slane %v4900, %v4904
    %v4906 = vlaneseq
    %v4907 = vshrl.u32 %v4906, 7
    %v4908 = vsub.s32 1, %v4907
    %v4909 = vrot.slane %v4900, %v4908
    %v4910 = vlaneseq
    %v4911 = vshrl.u32 %v4910, 7
    %v4912 = vsub.s32 2, %v4911
    %v4913 = vrot.slane %v4900, %v4912
    %v4914 = vlaneseq
    %v4915 = vshrl.u32 %v4914, 7
    %v4916 = vsub.s32 3, %v4915
    %v4917 = vrot.slane %v4900, %v4916
    %v4922 = vmul.f32 %v4730, %v4905
    %v4923 = vmul.f32 %v4732, %v4909
    %v4924 = vmul.f32 %v4894, %v4913
    %v4925 = vmul.f32 %v4896, %v4917
    %v4926 = vld [vmem:[%s6 + $0x10] sm:$0xf]
    %v4927 = vld [vmem:[%s6 + $0x14] sm:$0xf]
    %v4928 = vrot.slane %v4922, 4
    %v4929 = vadd.f32 %v4922, %v4928
    %v4930 = vrot.slane %v4929, 2
    %v4931 = vadd.f32 %v4929, %v4930
    %v4932 = vrot.slane %v4931, 1
    %v4933 = vadd.f32 %v4931, %v4932
    %v4934 = vrot.slane %v4923, 4
    %v4935 = vadd.f32 %v4923, %v4934
    %v4936 = vrot.slane %v4935, 2
    %v4937 = vadd.f32 %v4935, %v4936
    %v4938 = vrot.slane %v4937, 1
    %v4939 = vadd.f32 %v4937, %v4938
    %v4940 = vrot.slane %v4924, 4
    %v4941 = vadd.f32 %v4924, %v4940
    %v4942 = vrot.slane %v4941, 2
    %v4943 = vadd.f32 %v4941, %v4942
    %v4944 = vrot.slane %v4943, 1
    %v4945 = vadd.f32 %v4943, %v4944
    %v4946 = vrot.slane %v4925, 4
    %v4947 = vadd.f32 %v4925, %v4946
    %v4948 = vrot.slane %v4947, 2
    %v4949 = vadd.f32 %v4947, %v4948
    %v4950 = vrot.slane %v4949, 1
    %v4951 = vadd.f32 %v4949, %v4950
    %v4952 = vrcp.pop 8.0
    %v4953 = vmul.f32 %v4933, %v4952
    %v4954 = vmul.f32 %v4939, %v4952
    %v4955 = vmul.f32 %v4945, %v4952
    %v4956 = vmul.f32 %v4951, %v4952
    %v4957 = vsub.f32 %v4922, %v4953
    %v4958 = vsub.f32 %v4923, %v4954
    %v4959 = vsub.f32 %v4924, %v4955
    %v4960 = vsub.f32 %v4925, %v4956
    %v4961 = vmul.f32 %v4957, %v4957
    %v4962 = vmul.f32 %v4958, %v4958
    %v4963 = vmul.f32 %v4959, %v4959
    %v4964 = vmul.f32 %v4960, %v4960
    %v4965 = vrot.slane %v4961, 4
    %v4966 = vadd.f32 %v4961, %v4965
    %v4967 = vrot.slane %v4966, 2
    %v4968 = vadd.f32 %v4966, %v4967
    %v4969 = vrot.slane %v4968, 1
    %v4970 = vadd.f32 %v4968, %v4969
    %v4971 = vrot.slane %v4962, 4
    %v4972 = vadd.f32 %v4962, %v4971
    %v4973 = vrot.slane %v4972, 2
    %v4974 = vadd.f32 %v4972, %v4973
    %v4975 = vrot.slane %v4974, 1
    %v4976 = vadd.f32 %v4974, %v4975
    %v4977 = vrot.slane %v4963, 4
    %v4978 = vadd.f32 %v4963, %v4977
    %v4979 = vrot.slane %v4978, 2
    %v4980 = vadd.f32 %v4978, %v4979
    %v4981 = vrot.slane %v4980, 1
    %v4982 = vadd.f32 %v4980, %v4981
    %v4983 = vrot.slane %v4964, 4
    %v4984 = vadd.f32 %v4964, %v4983
    %v4985 = vrot.slane %v4984, 2
    %v4986 = vadd.f32 %v4984, %v4985
    %v4987 = vrot.slane %v4986, 1
    %v4988 = vadd.f32 %v4986, %v4987
    %v4989 = vmul.f32 %v4970, %v4952
    %v4990 = vmul.f32 %v4976, %v4952
    %v4991 = vmul.f32 %v4982, %v4952
    %v4992 = vmul.f32 %v4988, %v4952
    %v4993 = vadd.f32 %v4989, 1e-05
    %v4994 = vadd.f32 %v4990, 1e-05
    %v4995 = vadd.f32 %v4991, 1e-05
    %v4996 = vadd.f32 %v4992, 1e-05
    %v4997 = vrsqrt.pop %v4993
    %v4998 = vrsqrt.pop %v4994
    %v4999 = vrsqrt.pop %v4995
    %v5000 = vrsqrt.pop %v4996
    %v5001 = vmul.f32 %v4957, %v4997
    %v5002 = vmul.f32 %v4958, %v4998
    %v5003 = vmul.f32 %v4959, %v4999
    %v5004 = vmul.f32 %v4960, %v5000
    %v5006 = vlaneseq
    %v5007 = vshrl.u32 %v5006, 7
    %v5008 = vsub.s32 0, %v5007
    %v5009 = vrot.slane %v4926, %v5008
    %v5010 = vlaneseq
    %v5011 = vshrl.u32 %v5010, 7
    %v5012 = vsub.s32 1, %v5011
    %v5013 = vrot.slane %v4926, %v5012
    %v5014 = vlaneseq
    %v5015 = vshrl.u32 %v5014, 7
    %v5016 = vsub.s32 2, %v5015
    %v5017 = vrot.slane %v4926, %v5016
    %v5018 = vlaneseq
    %v5019 = vshrl.u32 %v5018, 7
    %v5020 = vsub.s32 3, %v5019
    %v5021 = vrot.slane %v4926, %v5020
    %v5026 = vmul.f32 %v5001, %v5009
    %v5027 = vmul.f32 %v5002, %v5013
    %v5028 = vmul.f32 %v5003, %v5017
    %v5029 = vmul.f32 %v5004, %v5021
    %v5031 = vlaneseq
    %v5032 = vshrl.u32 %v5031, 7
    %v5033 = vsub.s32 0, %v5032
    %v5034 = vrot.slane %v4927, %v5033
    %v5035 = vlaneseq
    %v5036 = vshrl.u32 %v5035, 7
    %v5037 = vsub.s32 1, %v5036
    %v5038 = vrot.slane %v4927, %v5037
    %v5039 = vlaneseq
    %v5040 = vshrl.u32 %v5039, 7
    %v5041 = vsub.s32 2, %v5040
    %v5042 = vrot.slane %v4927, %v5041
    %v5043 = vlaneseq
    %v5044 = vshrl.u32 %v5043, 7
    %v5045 = vsub.s32 3, %v5044
    %v5046 = vrot.slane %v4927, %v5045
    %v5051 = vadd.f32 %v5026, %v5034
    %v5052 = vadd.f32 %v5027, %v5038
    %v5053 = vadd.f32 %v5028, %v5042
    %v5054 = vadd.f32 %v5029, %v5046
    %vm5055 = vcmp.gt.f32.partialorder %v5051, 0.0
    %vm5056 = vcmp.gt.f32.partialorder %v5052, 0.0
    %vm5057 = vcmp.gt.f32.partialorder %v5053, 0.0
    %vm5058 = vcmp.gt.f32.partialorder %v5054, 0.0
    %v5059 = vmul.f32 %v5051, 0.2
    %v5060 = vmul.f32 %v5052, 0.2
    %v5061 = vmul.f32 %v5053, 0.2
    %v5062 = vmul.f32 %v5054, 0.2
    %v5063 = vsel %vm5055, %v5051, %v5059
    %v5064 = vsel %vm5056, %v5052, %v5060
    %v5065 = vsel %vm5057, %v5053, %v5061
    %v5066 = vsel %vm5058, %v5054, %v5062
    %v5067 = vpack.c.bf16 %v5063, %v5063
    %v5068 = vpack.c.bf16 %v5064, %v5064
    %v5069 = vpack.c.bf16 %v5065, %v5065
    %v5070 = vpack.c.bf16 %v5066, %v5066
    %v5071 = vld [vmem:[%s5] sm:$0xff]
    %v5072 = vld [vmem:[%s5 + $0x8] sm:$0xff]
    %v5073 = vld [vmem:[%s5 + $0x10] sm:$0xff]
    %v5074 = vld [vmem:[%s5 + $0x18] sm:$0xff]
    %v5075 = vld [vmem:[%s5 + $0x20] sm:$0xff]
    %v5076 = vld [vmem:[%s5 + $0x28] sm:$0xff]
    %v5077 = vld [vmem:[%s5 + $0x30] sm:$0xff]
    %v5078 = vld [vmem:[%s5 + $0x38] sm:$0xff]
    %v5079 = vld [vmem:[%s5 + $0x40] sm:$0xff]
    %v5080 = vld [vmem:[%s5 + $0x48] sm:$0xff]
    %v5081 = vld [vmem:[%s5 + $0x50] sm:$0xff]
    %v5082 = vld [vmem:[%s5 + $0x58] sm:$0xff]
    %v5083 = vld [vmem:[%s5 + $0x60] sm:$0xff]
    %v5084 = vld [vmem:[%s5 + $0x68] sm:$0xff]
    %v5085 = vld [vmem:[%s5 + $0x70] sm:$0xff]
    %v5086 = vld [vmem:[%s5 + $0x78] sm:$0xff]
    %v5087 = vld [vmem:[%s5 + $0x80] sm:$0xff]
    %v5088 = vld [vmem:[%s5 + $0x88] sm:$0xff]
    %v5089 = vld [vmem:[%s5 + $0x90] sm:$0xff]
    %v5090 = vld [vmem:[%s5 + $0x98] sm:$0xff]
    %v5091 = vld [vmem:[%s5 + $0xa0] sm:$0xff]
    %v5092 = vld [vmem:[%s5 + $0xa8] sm:$0xff]
    %v5093 = vld [vmem:[%s5 + $0xb0] sm:$0xff]
    %v5094 = vld [vmem:[%s5 + $0xb8] sm:$0xff]
    %v5095 = vld [vmem:[%s5 + $0xc0] sm:$0xff]
    %v5096 = vld [vmem:[%s5 + $0xc8] sm:$0xff]
    %v5097 = vld [vmem:[%s5 + $0xd0] sm:$0xff]
    %v5098 = vld [vmem:[%s5 + $0xd8] sm:$0xff]
    %v5099 = vld [vmem:[%s5 + $0xe0] sm:$0xff]
    %v5100 = vld [vmem:[%s5 + $0xe8] sm:$0xff]
    %v5101 = vld [vmem:[%s5 + $0xf0] sm:$0xff]
    %v5102 = vld [vmem:[%s5 + $0xf8] sm:$0xff]
    %v5103 = vunpack.c.l.s8.bf16 %v5071
    %v5104 = vunpack.c.l.s8.bf16 %v5072
    %v5105 = vunpack.c.h.s8.bf16 %v5071
    %v5106 = vunpack.c.h.s8.bf16 %v5072
    %v5107 = vunpack.c.l.s8.bf16 %v5073
    %v5108 = vunpack.c.l.s8.bf16 %v5074
    %v5109 = vunpack.c.h.s8.bf16 %v5073
    %v5110 = vunpack.c.h.s8.bf16 %v5074
    %v5111 = vunpack.c.l.s8.bf16 %v5075
    %v5112 = vunpack.c.l.s8.bf16 %v5076
    %v5113 = vunpack.c.h.s8.bf16 %v5075
    %v5114 = vunpack.c.h.s8.bf16 %v5076
    %v5115 = vunpack.c.l.s8.bf16 %v5077
    %v5116 = vunpack.c.l.s8.bf16 %v5078
    %v5117 = vunpack.c.h.s8.bf16 %v5077
    %v5118 = vunpack.c.h.s8.bf16 %v5078
    %v5119 = vunpack.c.l.s8.bf16 %v5079
    %v5120 = vunpack.c.l.s8.bf16 %v5080
    %v5121 = vunpack.c.h.s8.bf16 %v5079
    %v5122 = vunpack.c.h.s8.bf16 %v5080
    %v5123 = vunpack.c.l.s8.bf16 %v5081
    %v5124 = vunpack.c.l.s8.bf16 %v5082
    %v5125 = vunpack.c.h.s8.bf16 %v5081
    %v5126 = vunpack.c.h.s8.bf16 %v5082
    %v5127 = vunpack.c.l.s8.bf16 %v5083
    %v5128 = vunpack.c.l.s8.bf16 %v5084
    %v5129 = vunpack.c.h.s8.bf16 %v5083
    %v5130 = vunpack.c.h.s8.bf16 %v5084
    %v5131 = vunpack.c.l.s8.bf16 %v5085
    %v5132 = vunpack.c.l.s8.bf16 %v5086
    %v5133 = vunpack.c.h.s8.bf16 %v5085
    %v5134 = vunpack.c.h.s8.bf16 %v5086
    %v5135 = vunpack.c.l.s8.bf16 %v5087
    %v5136 = vunpack.c.l.s8.bf16 %v5088
    %v5137 = vunpack.c.h.s8.bf16 %v5087
    %v5138 = vunpack.c.h.s8.bf16 %v5088
    %v5139 = vunpack.c.l.s8.bf16 %v5089
    %v5140 = vunpack.c.l.s8.bf16 %v5090
    %v5141 = vunpack.c.h.s8.bf16 %v5089
    %v5142 = vunpack.c.h.s8.bf16 %v5090
    %v5143 = vunpack.c.l.s8.bf16 %v5091
    %v5144 = vunpack.c.l.s8.bf16 %v5092
    %v5145 = vunpack.c.h.s8.bf16 %v5091
    %v5146 = vunpack.c.h.s8.bf16 %v5092
    %v5147 = vunpack.c.l.s8.bf16 %v5093
    %v5148 = vunpack.c.l.s8.bf16 %v5094
    %v5149 = vunpack.c.h.s8.bf16 %v5093
    %v5150 = vunpack.c.h.s8.bf16 %v5094
    %v5151 = vunpack.c.l.s8.bf16 %v5095
    %v5152 = vunpack.c.l.s8.bf16 %v5096
    %v5153 = vunpack.c.h.s8.bf16 %v5095
    %v5154 = vunpack.c.h.s8.bf16 %v5096
    %v5155 = vunpack.c.l.s8.bf16 %v5097
    %v5156 = vunpack.c.l.s8.bf16 %v5098
    %v5157 = vunpack.c.h.s8.bf16 %v5097
    %v5158 = vunpack.c.h.s8.bf16 %v5098
    %v5159 = vunpack.c.l.s8.bf16 %v5099
    %v5160 = vunpack.c.l.s8.bf16 %v5100
    %v5161 = vunpack.c.h.s8.bf16 %v5099
    %v5162 = vunpack.c.h.s8.bf16 %v5100
    %v5163 = vunpack.c.l.s8.bf16 %v5101
    %v5164 = vunpack.c.l.s8.bf16 %v5102
    %v5165 = vunpack.c.h.s8.bf16 %v5101
    %v5166 = vunpack.c.h.s8.bf16 %v5102
    %5167 = vmatprep.subr.bf16.mxu0 %v5104
    %5168 = vmatpush1.bf16.msra.mxu0 %v5103
    %5169 = vmatprep.subr.bf16.mxu0 %v5106
    %5170 = vmatpush1.bf16.msra.mxu0 %v5105
    %5171 = vmatprep.subr.bf16.mxu0 %v5108
    %5172 = vmatpush1.bf16.msra.mxu0 %v5107
    %5173 = vmatprep.subr.bf16.mxu0 %v5110
    %5174 = vmatpush1.bf16.msra.mxu0 %v5109
    %5175 = vmatprep.subr.bf16.mxu0 %v5112
    %5176 = vmatpush1.bf16.msra.mxu0 %v5111
    %5177 = vmatprep.subr.bf16.mxu0 %v5114
    %5178 = vmatpush1.bf16.msra.mxu0 %v5113
    %5179 = vmatprep.subr.bf16.mxu0 %v5116
    %5180 = vmatpush1.bf16.msra.mxu0 %v5115
    %5181 = vmatprep.subr.bf16.mxu0 %v5118
    %5182 = vmatpush1.bf16.msra.mxu0 %v5117
    %5183 = vmatprep.subr.bf16.mxu0 %v5120
    %5184 = vmatpush1.bf16.msra.mxu0 %v5119
    %5185 = vmatprep.subr.bf16.mxu0 %v5122
    %5186 = vmatpush1.bf16.msra.mxu0 %v5121
    %5187 = vmatprep.subr.bf16.mxu0 %v5124
    %5188 = vmatpush1.bf16.msra.mxu0 %v5123
    %5189 = vmatprep.subr.bf16.mxu0 %v5126
    %5190 = vmatpush1.bf16.msra.mxu0 %v5125
    %5191 = vmatprep.subr.bf16.mxu0 %v5128
    %5192 = vmatpush1.bf16.msra.mxu0 %v5127
    %5193 = vmatprep.subr.bf16.mxu0 %v5130
    %5194 = vmatpush1.bf16.msra.mxu0 %v5129
    %5195 = vmatprep.subr.bf16.mxu0 %v5132
    %5196 = vmatpush1.bf16.msra.mxu0 %v5131
    %5197 = vmatprep.subr.bf16.mxu0 %v5134
    %5198 = vmatpush1.bf16.msra.mxu0 %v5133
    %5199 = vmatprep.mubr.bf16.mxu0 %v5068
    %5200 = vmatmul.mubr.bf16.gmra.mrb[0].mxu0 %v5067
    %v5201 = vpop.f32.mrb[0].mxu0
    %v5202 = vadd.f32 0.0, %v5201
    %v5203 = vpop.f32.mrb[0].mxu0
    %v5204 = vadd.f32 0.0, %v5203
    %v5205 = vpop.f32.mrb[0].mxu0
    %v5206 = vpop.f32.mrb[0].mxu0
    %5207 = vdwg.mxu0
    %5208 = vmatprep.subr.bf16.mxu0 %v5136
    %5209 = vmatpush1.bf16.msra.mxu0 %v5135
    %5210 = vmatprep.subr.bf16.mxu0 %v5138
    %5211 = vmatpush1.bf16.msra.mxu0 %v5137
    %5212 = vmatprep.subr.bf16.mxu0 %v5140
    %5213 = vmatpush1.bf16.msra.mxu0 %v5139
    %5214 = vmatprep.subr.bf16.mxu0 %v5142
    %5215 = vmatpush1.bf16.msra.mxu0 %v5141
    %5216 = vmatprep.subr.bf16.mxu0 %v5144
    %5217 = vmatpush1.bf16.msra.mxu0 %v5143
    %5218 = vmatprep.subr.bf16.mxu0 %v5146
    %5219 = vmatpush1.bf16.msra.mxu0 %v5145
    %5220 = vmatprep.subr.bf16.mxu0 %v5148
    %5221 = vmatpush1.bf16.msra.mxu0 %v5147
    %5222 = vmatprep.subr.bf16.mxu0 %v5150
    %5223 = vmatpush1.bf16.msra.mxu0 %v5149
    %5224 = vmatprep.subr.bf16.mxu0 %v5152
    %5225 = vmatpush1.bf16.msra.mxu0 %v5151
    %5226 = vmatprep.subr.bf16.mxu0 %v5154
    %5227 = vmatpush1.bf16.msra.mxu0 %v5153
    %5228 = vmatprep.subr.bf16.mxu0 %v5156
    %5229 = vmatpush1.bf16.msra.mxu0 %v5155
    %5230 = vmatprep.subr.bf16.mxu0 %v5158
    %5231 = vmatpush1.bf16.msra.mxu0 %v5157
    %5232 = vmatprep.subr.bf16.mxu0 %v5160
    %5233 = vmatpush1.bf16.msra.mxu0 %v5159
    %5234 = vmatprep.subr.bf16.mxu0 %v5162
    %5235 = vmatpush1.bf16.msra.mxu0 %v5161
    %5236 = vmatprep.subr.bf16.mxu0 %v5164
    %5237 = vmatpush1.bf16.msra.mxu0 %v5163
    %5238 = vmatprep.subr.bf16.mxu0 %v5166
    %5239 = vmatpush1.bf16.msra.mxu0 %v5165
    %5240 = vmatprep.mubr.bf16.mxu0 %v5070
    %5241 = vmatmul.mubr.bf16.gmra.mrb[0].mxu0 %v5069
    %v5242 = vpop.f32.mrb[0].mxu0
    %v5243 = vadd.f32 %v5202, %v5242
    %v5244 = vpop.f32.mrb[0].mxu0
    %v5245 = vadd.f32 %v5204, %v5244
    %v5246 = vpop.f32.mrb[0].mxu0
    %v5247 = vpop.f32.mrb[0].mxu0
    %5248 = vdwg.mxu0
    %v5249 = vld [vmem:[%s6 + $0x20] sm:$0x3]
    %v5251 = vlaneseq
    %v5252 = vshrl.u32 %v5251, 7
    %v5253 = vsub.s32 0, %v5252
    %v5254 = vrot.slane %v5249, %v5253
    %v5255 = vlaneseq
    %v5256 = vshrl.u32 %v5255, 7
    %v5257 = vsub.s32 1, %v5256
    %v5258 = vrot.slane %v5249, %v5257
    %v5261 = vmul.f32 %v5243, %v5254
    %v5262 = vmul.f32 %v5245, %v5258
    %v5263 = vld [vmem:[%s6 + $0x1c] sm:$0x3]
    %v5264 = vld [vmem:[%s6 + $0x1e] sm:$0x3]
    %v5265 = vrot.slane %v5261, 4
    %v5266 = vadd.f32 %v5261, %v5265
    %v5267 = vrot.slane %v5266, 2
    %v5268 = vadd.f32 %v5266, %v5267
    %v5269 = vrot.slane %v5268, 1
    %v5270 = vadd.f32 %v5268, %v5269
    %v5271 = vrot.slane %v5262, 4
    %v5272 = vadd.f32 %v5262, %v5271
    %v5273 = vrot.slane %v5272, 2
    %v5274 = vadd.f32 %v5272, %v5273
    %v5275 = vrot.slane %v5274, 1
    %v5276 = vadd.f32 %v5274, %v5275
    %v5277 = vmul.f32 %v5270, %v4952
    %v5278 = vmul.f32 %v5276, %v4952
    %v5279 = vsub.f32 %v5261, %v5277
    %v5280 = vsub.f32 %v5262, %v5278
    %v5281 = vmul.f32 %v5279, %v5279
    %v5282 = vmul.f32 %v5280, %v5280
    %v5283 = vrot.slane %v5281, 4
    %v5284 = vadd.f32 %v5281, %v5283
    %v5285 = vrot.slane %v5284, 2
    %v5286 = vadd.f32 %v5284, %v5285
    %v5287 = vrot.slane %v5286, 1
    %v5288 = vadd.f32 %v5286, %v5287
    %v5289 = vrot.slane %v5282, 4
    %v5290 = vadd.f32 %v5282, %v5289
    %v5291 = vrot.slane %v5290, 2
    %v5292 = vadd.f32 %v5290, %v5291
    %v5293 = vrot.slane %v5292, 1
    %v5294 = vadd.f32 %v5292, %v5293
    %v5295 = vmul.f32 %v5288, %v4952
    %v5296 = vmul.f32 %v5294, %v4952
    %v5297 = vadd.f32 %v5295, 1e-05
    %v5298 = vadd.f32 %v5296, 1e-05
    %v5299 = vrsqrt.pop %v5297
    %v5300 = vrsqrt.pop %v5298
    %v5301 = vmul.f32 %v5279, %v5299
    %v5302 = vmul.f32 %v5280, %v5300
    %v5304 = vlaneseq
    %v5305 = vshrl.u32 %v5304, 7
    %v5306 = vsub.s32 0, %v5305
    %v5307 = vrot.slane %v5263, %v5306
    %v5308 = vlaneseq
    %v5309 = vshrl.u32 %v5308, 7
    %v5310 = vsub.s32 1, %v5309
    %v5311 = vrot.slane %v5263, %v5310
    %v5314 = vmul.f32 %v5301, %v5307
    %v5315 = vmul.f32 %v5302, %v5311
    %v5317 = vlaneseq
    %v5318 = vshrl.u32 %v5317, 7
    %v5319 = vsub.s32 0, %v5318
    %v5320 = vrot.slane %v5264, %v5319
    %v5321 = vlaneseq
    %v5322 = vshrl.u32 %v5321, 7
    %v5323 = vsub.s32 1, %v5322
    %v5324 = vrot.slane %v5264, %v5323
    %v5327 = vadd.f32 %v5314, %v5320
    %v5328 = vadd.f32 %v5315, %v5324
    %vm5329 = vcmp.gt.f32.partialorder %v5327, 0.0
    %vm5330 = vcmp.gt.f32.partialorder %v5328, 0.0
    %v5331 = vmul.f32 %v5327, 0.2
    %v5332 = vmul.f32 %v5328, 0.2
    %v5333 = vsel %vm5329, %v5327, %v5331
    %v5334 = vsel %vm5330, %v5328, %v5332
    %v5335 = vld [vmem:[%s6 + $0x22] sm:$0x3]
    %v5336 = vld [vmem:[%s6 + $0x24] sm:$0x1]
    %v5338 = vlaneseq
    %v5339 = vshrl.u32 %v5338, 7
    %v5340 = vsub.s32 0, %v5339
    %v5341 = vrot.slane %v5335, %v5340
    %v5342 = vlaneseq
    %v5343 = vshrl.u32 %v5342, 7
    %v5344 = vsub.s32 1, %v5343
    %v5345 = vrot.slane %v5335, %v5344
    %v5348 = vmul.f32 %v5333, %v5341
    %v5349 = vmul.f32 %v5334, %v5345
    %v5350 = vadd.f32 %v5348, %v5349
    %5351 = vadd.xlane.f32.xlu0 %v5350
    %v5352 = vpop.xlane.xlu0 %5351
    %v5354 = vlaneseq
    %v5355 = vshrl.u32 %v5354, 7
    %v5356 = vsub.s32 0, %v5355
    %v5357 = vrot.slane %v5336, %v5356
    %v5359 = vadd.f32 %v5352, %v5357
    %v5360 = vxor.u32 %v5359, 2147483648
    %v5361 = vmul.f32 %v5360, 1.442695
    %v5362 = vpow.pop %v5361
    %v5363 = vadd.f32 %v5362, 1.0
    %v5364 = vrcp.pop %v5363
    %v5365 = vmul.f32 1.0, %v5364
    %vm5366 = vcmask 7168
    %5367 = vst.msk [vmem:[%s7] sm:$0xff] %vm5366, %v5365
    // Predicated region
    $region42: #{discriminator_forward.1} parent=1 // pred_check
      _
    $region43: #{discriminator_forward.1} parent=1 // pred_check_branch
      %5369 = sbr.rel (0) target = $region45
    $region44: #{discriminator_forward.1} parent=1 // pred_region
      _
    $region45: #{discriminator_forward.1} parent=1 // pred_fallthru
      _
    // Predicated region
    $region46: #{discriminator_forward.1} parent=1 // pred_check
      _
    $region47: #{discriminator_forward.1} parent=1 // pred_check_branch
      %5371 = sbr.rel (0) target = $region49
    $region48: #{discriminator_forward.1} parent=1 // pred_region
      _
    $region49: #{discriminator_forward.1} parent=1 // pred_fallthru
      _
    %5372 = vsyncpa [#allocation3], 1
    %5373 = vsyncpa [#allocation5], 1

</llo_original>
